<compile_context>
chip_gen: v7x
topology: tpu7x:2x2x1
jax: 0.10.0
libtpu: 0.0.40
codegen_flags: <defaults>
</compile_context>

<pallas_src>
import jax
import jax.numpy as jnp
from jax import lax
from jax.experimental import pallas as pl
from jax.experimental.pallas import tpu as pltpu

EPS = 1e-5


def _round_up(x, m):
    return (x + m - 1) // m * m


# ----------------------------- Pallas kernels -----------------------------

def _make_conv_kernel(H, W, cin, cin_p, apply_input_act, has_projection):
    """Fused kernel:  [optional per-channel affine + ReLU on the input]
    -> 3x3 'SAME' conv as a single (P, 9*Cin_p) x (9*Cin_p, Cout_p) MXU matmul
    -> raw conv output + per-channel sum / sum-of-squares (BN batch stats)
    -> [optional 1x1 projection shortcut + its BN stats, reusing the slab]."""
    P = H * W

    def kernel(*refs):
        idx = 0
        if apply_input_act:
            scale_ref, shift_ref = refs[0], refs[1]
            idx = 2
        x_ref, ml_ref, mr_ref, w_ref = (refs[idx], refs[idx + 1],
                                        refs[idx + 2], refs[idx + 3])
        idx += 4
        if has_projection:
            wsc_ref = refs[idx]; idx += 1
        out_ref = refs[idx]; idx += 1
        if has_projection:
            sc_ref = refs[idx]; idx += 1
        st_ref = refs[idx]; idx += 1
        if has_projection:
            stsc_ref = refs[idx]; idx += 1
        slab_ref = refs[idx]

        n = pl.program_id(0)

        @pl.when(n == 0)
        def _init():
            # Zero once: lanes / rows of the slab that are never overwritten
            # stay zero and provide both the channel padding and (together
            # with the per-step edge stores below) the spatial zero padding.
            slab_ref[...] = jnp.zeros_like(slab_ref)
            st_ref[...] = jnp.zeros_like(st_ref)
            if has_projection:
                stsc_ref[...] = jnp.zeros_like(stsc_ref)

        xv = x_ref[...].astype(jnp.float32)
        if apply_input_act:
            # Fused BatchNorm (batch-statistics affine) + ReLU of the previous
            # stage, applied on the fly to this stage's input tile (f32).
            xv = jnp.maximum(xv * scale_ref[...] + shift_ref[...], 0.0)

        # Column-edge masked copies (period-W structure of the flattened
        # pixel-major layout); used by the horizontally shifted taps.
        x_l = xv * ml_ref[...]   # column 0   zeroed  (taps with dw = +1)
        x_r = xv * mr_ref[...]   # column W-1 zeroed  (taps with dw = -1)

        # Build the (P, 9*Cin_p) im2col slab.  Tap k = (kh, kw) is the input
        # shifted by s = (kh-1)*W + (kw-1) flattened pixels; rows/columns that
        # fall outside the image are forced to zero (halo).
        for k in range(9):
            dh, dw = k // 3 - 1, k % 3 - 1
            s = dh * W + dw
            a = max(0, -s)          # first destination row written
            L = P - abs(s)          # rows written
            b = max(0, s)           # first source row read
            c0 = k * cin_p
            src = xv if dw == 0 else (x_r if dw < 0 else x_l)
            if a > 0:               # rows with h+dh < 0  -> zero
                slab_ref[0:a, c0:c0 + cin] = jnp.zeros((a, cin), jnp.bfloat16)
            if a + L < P:           # rows with h+dh >= H -> zero
                slab_ref[a + L:P, c0:c0 + cin] = jnp.zeros((P - a - L, cin),
                                                           jnp.bfloat16)
            if s == 0:
                slab_ref[:, c0:c0 + cin] = src.astype(jnp.bfloat16)
            else:
                slab_ref[a:a + L, c0:c0 + cin] = (
                    src[b:b + L, :].astype(jnp.bfloat16))

        # One MXU matmul for the whole 3x3 conv of this tile (bf16 x bf16,
        # f32 accumulation).
        conv = jnp.dot(slab_ref[...], w_ref[...],
                       preferred_element_type=jnp.float32)
        out_ref[...] = conv.astype(out_ref.dtype)

        # Single-pass BN statistics (sum / sum of squares), accumulated across
        # the sequential ("arbitrary") batch grid axis.
        st_ref[0:1, :] += jnp.sum(conv, axis=0, keepdims=True)
        st_ref[1:2, :] += jnp.sum(conv * conv, axis=0, keepdims=True)

        if has_projection:
            # 1x1 projection shortcut reuses the centre tap of the slab
            # (the un-shifted, channel-padded, bf16 input).
            xc = slab_ref[:, 4 * cin_p:5 * cin_p]
            scv = jnp.dot(xc, wsc_ref[...], preferred_element_type=jnp.float32)
            sc_ref[...] = scv.astype(sc_ref.dtype)
            stsc_ref[0:1, :] += jnp.sum(scv, axis=0, keepdims=True)
            stsc_ref[1:2, :] += jnp.sum(scv * scv, axis=0, keepdims=True)

    return kernel


def _finalize_kernel(sc2_ref, sh2_ref, scs_ref, shs_ref, c2_ref, sc_ref,
                     out_ref, pre_ref):
    """bn2 affine + shortcut-bn affine + residual add + ReLU (+ preact)."""
    main = c2_ref[...].astype(jnp.float32) * sc2_ref[...] + sh2_ref[...]
    short = sc_ref[...].astype(jnp.float32) * scs_ref[...] + shs_ref[...]
    pre = main + short
    pre_ref[...] = pre
    out_ref[...] = jnp.maximum(pre, 0.0)


# --------------------------- pallas_call wrappers ---------------------------

def _conv_bn_stats(x2d, mask_l, mask_r, w_packed, *, H, W, cin, cin_p, cout_p,
                   scale=None, shift=None, wsc=None, out_dtype=jnp.float32):
    """Run the fused conv(+shortcut)+stats kernel over a batch grid."""
    P = H * W
    N = x2d.shape[0] // P
    apply_act = scale is not None
    has_proj = wsc is not None
    kernel = _make_conv_kernel(H, W, cin, cin_p, apply_act, has_proj)

    in_specs, args = [], []
    if apply_act:
        in_specs += [pl.BlockSpec((1, cin_p), lambda n: (0, 0)),
                     pl.BlockSpec((1, cin_p), lambda n: (0, 0))]
        args += [scale, shift]
    in_specs += [pl.BlockSpec((P, cin), lambda n: (n, 0)),
                 pl.BlockSpec((P, 1), lambda n: (0, 0)),
                 pl.BlockSpec((P, 1), lambda n: (0, 0)),
                 pl.BlockSpec((9 * cin_p, cout_p), lambda n: (0, 0))]
    args += [x2d, mask_l, mask_r, w_packed]
    if has_proj:
        in_specs.append(pl.BlockSpec((cin_p, cout_p), lambda n: (0, 0)))
        args.append(wsc)

    out_shape = [jax.ShapeDtypeStruct((N * P, cout_p), out_dtype)]
    out_specs = [pl.BlockSpec((P, cout_p), lambda n: (n, 0))]
    if has_proj:
        out_shape.append(jax.ShapeDtypeStruct((N * P, cout_p), out_dtype))
        out_specs.append(pl.BlockSpec((P, cout_p), lambda n: (n, 0)))
    out_shape.append(jax.ShapeDtypeStruct((2, cout_p), jnp.float32))
    out_specs.append(pl.BlockSpec((2, cout_p), lambda n: (0, 0)))
    if has_proj:
        out_shape.append(jax.ShapeDtypeStruct((2, cout_p), jnp.float32))
        out_specs.append(pl.BlockSpec((2, cout_p), lambda n: (0, 0)))

    flops = 2 * N * P * (9 * cin_p) * cout_p
    if has_proj:
        flops += 2 * N * P * cin_p * cout_p
    itemsize = jnp.dtype(out_dtype).itemsize
    bytes_accessed = (int(x2d.size) * x2d.dtype.itemsize
                      + int(w_packed.size) * 2
                      + N * P * cout_p * itemsize * (2 if has_proj else 1)
                      + 2 * cout_p * 4 * (2 if has_proj else 1))

    return pl.pallas_call(
        kernel,
        grid=(N,),
        out_shape=tuple(out_shape),
        in_specs=in_specs,
        out_specs=tuple(out_specs),
        scratch_shapes=[pltpu.VMEM((P, 9 * cin_p), jnp.bfloat16)],
        compiler_params=pltpu.CompilerParams(
            # Batch axis must stay "arbitrary": BN sum/sumsq accumulate across
            # it in the same VMEM-resident output block.
            dimension_semantics=("arbitrary",)),
        cost_estimate=pl.CostEstimate(flops=int(flops), transcendentals=0,
                                      bytes_accessed=int(bytes_accessed)),
    )(*args)


def _finalize(scale2, shift2, scale_sc, shift_sc, c2, sc_in, N, P, cp):
    return pl.pallas_call(
        _finalize_kernel,
        grid=(N,),
        out_shape=(jax.ShapeDtypeStruct((N * P, cp), jnp.float32),
                   jax.ShapeDtypeStruct((N * P, cp), jnp.float32)),
        in_specs=[pl.BlockSpec((1, cp), lambda n: (0, 0)),
                  pl.BlockSpec((1, cp), lambda n: (0, 0)),
                  pl.BlockSpec((1, cp), lambda n: (0, 0)),
                  pl.BlockSpec((1, cp), lambda n: (0, 0)),
                  pl.BlockSpec((P, cp), lambda n: (n, 0)),
                  pl.BlockSpec((P, cp), lambda n: (n, 0))],
        out_specs=(pl.BlockSpec((P, cp), lambda n: (n, 0)),
                   pl.BlockSpec((P, cp), lambda n: (n, 0))),
        compiler_params=pltpu.CompilerParams(
            dimension_semantics=("parallel",)),
    )(scale2, shift2, scale_sc, shift_sc, c2, sc_in)


def _affine_from_stats(stats, gamma_p, beta_p, count):
    """Fold training-mode BatchNorm (batch statistics, biased variance) into a
    per-channel scale/shift:  y*scale + shift == (y-mean)*rsqrt(var+eps)*g + b."""
    mean = stats[0] / count
    var = jnp.maximum(stats[1] / count - mean * mean, 0.0)
    scale = gamma_p * lax.rsqrt(var + EPS)
    shift = beta_p - mean * scale
    return scale.reshape(1, -1), shift.reshape(1, -1)


# ------------------------------- BasicBlock --------------------------------

class BasicBlockPallas:
    expansion = 1

    def __init__(self, key, in_planes, planes, stride=1, is_last=False):
        # TODO(synk): stride > 1 needs strided tap extraction in the slab build.
        assert stride == 1, "stride > 1 not implemented in this Pallas port"
        self.is_last = is_last
        self.in_planes = in_planes
        self.planes = planes
        self.has_projection = (stride != 1) or (in_planes != self.expansion * planes)

        k1, k2, k3 = jax.random.split(key, 3)
        s1 = (2.0 / (in_planes * 9)) ** 0.5
        s2 = (2.0 / (planes * 9)) ** 0.5
        # Conv weights in HWIO layout (f32 masters, used by the reference).
        self.w1 = jax.random.normal(k1, (3, 3, in_planes, planes), jnp.float32) * s1
        self.w2 = jax.random.normal(k2, (3, 3, planes, planes), jnp.float32) * s2
        self.g1 = jnp.ones((planes,), jnp.float32)
        self.b1 = jnp.zeros((planes,), jnp.float32)
        self.g2 = jnp.ones((planes,), jnp.float32)
        self.b2 = jnp.zeros((planes,), jnp.float32)
        if self.has_projection:
            ssc = (2.0 / in_planes) ** 0.5
            self.wsc = jax.random.normal(k3, (in_planes, planes), jnp.float32) * ssc
        else:
            self.wsc = None
        self.gsc = jnp.ones((planes,), jnp.float32)
        self.bsc = jnp.zeros((planes,), jnp.float32)

        # Lane-dense (x128 padded), bf16 kernel-side parameters.
        self.cin_p = _round_up(in_planes, 128)
        self.cp = _round_up(planes, 128)

        w1p = jnp.zeros((3, 3, self.cin_p, self.cp), jnp.float32)
        w1p = w1p.at[:, :, :in_planes, :planes].set(self.w1)
        self.w1p = w1p.reshape(9 * self.cin_p, self.cp).astype(jnp.bfloat16)

        w2p = jnp.zeros((3, 3, self.cp, self.cp), jnp.float32)
        w2p = w2p.at[:, :, :planes, :planes].set(self.w2)
        self.w2p = w2p.reshape(9 * self.cp, self.cp).astype(jnp.bfloat16)

        if self.has_projection:
            wscp = jnp.zeros((self.cin_p, self.cp), jnp.float32)
            wscp = wscp.at[:in_planes, :planes].set(self.wsc)
            self.wscp = wscp.astype(jnp.bfloat16)
        else:
            self.wscp = None

        def padc(v):
            return jnp.zeros((self.cp,), jnp.float32).at[:planes].set(v)

        self.g1p, self.b1p = padc(self.g1), padc(self.b1)
        self.g2p, self.b2p = padc(self.g2), padc(self.b2)
        self.gscp, self.bscp = padc(self.gsc), padc(self.bsc)

    def __call__(self, x_nchw):
        N, Cin, H, W = x_nchw.shape
        assert Cin == self.in_planes
        planes, cin_p, cp = self.planes, self.cin_p, self.cp
        P = H * W
        count = jnp.float32(N * P)

        # NCHW -> NHWC -> flattened pixel-major (P-per-image, C) 2-D view.
        x2d = jnp.transpose(x_nchw, (0, 2, 3, 1)).astype(jnp.float32)
        x2d = x2d.reshape(N * P, Cin)

        # Column-edge masks for the horizontally shifted taps (shared by both
        # convs; tiny (P,1) arrays).
        col = jnp.arange(P, dtype=jnp.int32) % W
        mask_l = (col != 0).astype(jnp.float32).reshape(P, 1)
        mask_r = (col != W - 1).astype(jnp.float32).reshape(P, 1)

        # conv1 (+ fused 1x1 projection shortcut) + BN batch statistics.
        # c1 kept f32 (it feeds the second conv); shortcut raw kept f32 too.
        res = _conv_bn_stats(x2d, mask_l, mask_r, self.w1p,
                             H=H, W=W, cin=Cin, cin_p=cin_p, cout_p=cp,
                             wsc=self.wscp if self.has_projection else None,
                             out_dtype=jnp.float32)
        if self.has_projection:
            c1, sc_raw, st1, st_sc = res
        else:
            c1, st1 = res
            sc_raw = None

        scale1, shift1 = _affine_from_stats(st1, self.g1p, self.b1p, count)

        # conv2 with bn1+relu fused into its input path; raw output stored bf16.
        c2, st2 = _conv_bn_stats(c1, mask_l, mask_r, self.w2p,
                                 H=H, W=W, cin=cp, cin_p=cp, cout_p=cp,
                                 scale=scale1, shift=shift1,
                                 out_dtype=jnp.bfloat16)

        scale2, shift2 = _affine_from_stats(st2, self.g2p, self.b2p, count)
        if self.has_projection:
            scale_sc, shift_sc = _affine_from_stats(st_sc, self.gscp,
                                                    self.bscp, count)
            sc_in = sc_raw
        else:
            scale_sc = jnp.ones((1, cp), jnp.float32)
            shift_sc = jnp.zeros((1, cp), jnp.float32)
            sc_in = jnp.pad(x2d, ((0, 0), (0, cp - Cin)))

        out2d, pre2d = _finalize(scale2, shift2, scale_sc, shift_sc,
                                 c2, sc_in, N, P, cp)

        out = jnp.transpose(out2d.reshape(N, H, W, cp)[..., :planes],
                            (0, 3, 1, 2))
        pre = jnp.transpose(pre2d.reshape(N, H, W, cp)[..., :planes],
                            (0, 3, 1, 2))
        if self.is_last:
            return out, pre
        return out


# ------------------------------ pure-JAX ref --------------------------------

def _ref_bn(y, gamma, beta):
    mean = jnp.mean(y, axis=(0, 1, 2), keepdims=True)
    var = jnp.mean((y - mean) ** 2, axis=(0, 1, 2), keepdims=True)
    return (y - mean) * lax.rsqrt(var + EPS) * gamma + beta


def _ref_forward(block, x_nchw):
    """f32 reference with bf16 matmul operands (matching the kernel's MXU use)."""
    x = jnp.transpose(x_nchw, (0, 2, 3, 1)).astype(jnp.float32)
    dn = ("NHWC", "HWIO", "NHWC")

    def conv3(inp, w):
        return lax.conv_general_dilated(
            inp.astype(jnp.bfloat16), w.astype(jnp.bfloat16), (1, 1), "SAME",
            dimension_numbers=dn, preferred_element_type=jnp.float32)

    c1 = conv3(x, block.w1)
    o1 = jnp.maximum(_ref_bn(c1, block.g1, block.b1), 0.0)
    c2 = conv3(o1, block.w2)
    o2 = _ref_bn(c2, block.g2, block.b2)
    if block.has_projection:
        sc = jnp.einsum("nhwc,cd->nhwd", x.astype(jnp.bfloat16),
                        block.wsc.astype(jnp.bfloat16),
                        preferred_element_type=jnp.float32)
        sc = _ref_bn(sc, block.gsc, block.bsc)
    else:
        sc = x
    pre = o2 + sc
    out = jnp.maximum(pre, 0.0)
    return (jnp.transpose(out, (0, 3, 1, 2)),
            jnp.transpose(pre, (0, 3, 1, 2)))


# ---------------------------------- main -----------------------------------

if __name__ == "__main__":
    key = jax.random.PRNGKey(0)
    kx, kp = jax.random.split(key)

    # Small shapes: batch=2, in_planes=4, planes=8, spatial=16 (NCHW input).
    N, Cin, H, W = 2, 4, 16, 16
    planes = 8
    x = jax.random.normal(kx, (N, Cin, H, W), jnp.float32)

    block = BasicBlockPallas(kp, in_planes=Cin, planes=planes,
                             stride=1, is_last=True)

    out, preact = block(x)
    out = jax.block_until_ready(out)
    preact = jax.block_until_ready(preact)

    # Sanity check against the pure-JAX reference.  Tolerance accounts for the
    # bf16 storage of the conv2 / shortcut raw outputs (values are BN-normalized
    # to ~unit scale, so the extra error is well below these bounds).
    ref_out, ref_pre = _ref_forward(block, x)
    assert out.shape == (N, planes, H, W) and preact.shape == (N, planes, H, W)
    assert jnp.allclose(out, ref_out, atol=5e-2, rtol=2e-2), "out mismatch"
    assert jnp.allclose(preact, ref_pre, atol=5e-2, rtol=2e-2), "preact mismatch"

    print("KERNEL_OK")
</pallas_src>

<mosaic_0001>
module attributes {stable_mosaic.version = 11 : i64} {
  func.func @kernel(%arg0: i32, %arg1: memref<256x4xf32, #tpu.memory_space<vmem>>, %arg2: memref<256x1xf32, #tpu.memory_space<vmem>>, %arg3: memref<256x1xf32, #tpu.memory_space<vmem>>, %arg4: memref<1152x128xbf16, #tpu.memory_space<vmem>>, %arg5: memref<128x128xbf16, #tpu.memory_space<vmem>>, %arg6: memref<256x128xf32, #tpu.memory_space<vmem>>, %arg7: memref<256x128xf32, #tpu.memory_space<vmem>>, %arg8: memref<2x128xf32, #tpu.memory_space<vmem>>, %arg9: memref<2x128xf32, #tpu.memory_space<vmem>>, %arg10: memref<256x1152xbf16, #tpu.memory_space<vmem>>) attributes {dimension_semantics = [#tpu.dimension_semantics<arbitrary>], iteration_bounds = array<i64: 2>, scalar_prefetch = 0 : i64, scratch_operands = 1 : i64, tpu.core_type = #tpu.core_type<tc>, window_params = [{transform_indices = @transform_0, window_bounds = array<i64: 256, 4>}, {pipeline_mode = #tpu.pipeline_mode<synchronous>, transform_indices = @transform_1, window_bounds = array<i64: 256, 1>}, {pipeline_mode = #tpu.pipeline_mode<synchronous>, transform_indices = @transform_2, window_bounds = array<i64: 256, 1>}, {pipeline_mode = #tpu.pipeline_mode<synchronous>, transform_indices = @transform_3, window_bounds = array<i64: 1152, 128>}, {pipeline_mode = #tpu.pipeline_mode<synchronous>, transform_indices = @transform_4, window_bounds = array<i64: 128, 128>}, {transform_indices = @transform_5, window_bounds = array<i64: 256, 128>}, {transform_indices = @transform_6, window_bounds = array<i64: 256, 128>}, {pipeline_mode = #tpu.pipeline_mode<synchronous>, transform_indices = @transform_7, window_bounds = array<i64: 2, 128>}, {pipeline_mode = #tpu.pipeline_mode<synchronous>, transform_indices = @transform_8, window_bounds = array<i64: 2, 128>}]} {
    %c0_i32 = arith.constant 0 : i32
    %0 = arith.cmpi eq, %arg0, %c0_i32 : i32
    %1 = arith.extui %0 : i1 to i32
    %c0_i32_0 = arith.constant 0 : i32
    %2 = arith.cmpi ne, %1, %c0_i32_0 : i32
    scf.if %2 {
      %cst_65 = arith.constant 0.000000e+00 : bf16
      %82 = vector.broadcast %cst_65 : bf16 to vector<256x1152xbf16>
      %c0_66 = arith.constant 0 : index
      %c0_67 = arith.constant 0 : index
      %83 = vector.load %arg10[%c0_66, %c0_67] : memref<256x1152xbf16, #tpu.memory_space<vmem>>, vector<256x1152xbf16>
      tpu.vector_store %arg10[%c0_66, %c0_67], %82 {strides = array<i32>} : memref<256x1152xbf16, #tpu.memory_space<vmem>>, vector<256x1152xbf16>,
      %cst_68 = arith.constant 0.000000e+00 : f32
      %84 = vector.broadcast %cst_68 : f32 to vector<2x128xf32>
      %c0_69 = arith.constant 0 : index
      %c0_70 = arith.constant 0 : index
      %85 = vector.load %arg8[%c0_69, %c0_70] : memref<2x128xf32, #tpu.memory_space<vmem>>, vector<2x128xf32>
      tpu.vector_store %arg8[%c0_69, %c0_70], %84 {strides = array<i32>} : memref<2x128xf32, #tpu.memory_space<vmem>>, vector<2x128xf32>,
      %cst_71 = arith.constant 0.000000e+00 : f32
      %86 = vector.broadcast %cst_71 : f32 to vector<2x128xf32>
      %c0_72 = arith.constant 0 : index
      %c0_73 = arith.constant 0 : index
      %87 = vector.load %arg9[%c0_72, %c0_73] : memref<2x128xf32, #tpu.memory_space<vmem>>, vector<2x128xf32>
      tpu.vector_store %arg9[%c0_72, %c0_73], %86 {strides = array<i32>} : memref<2x128xf32, #tpu.memory_space<vmem>>, vector<2x128xf32>,
    } else {
    }
    %c0 = arith.constant 0 : index
    %c0_1 = arith.constant 0 : index
    %3 = vector.load %arg1[%c0, %c0_1] : memref<256x4xf32, #tpu.memory_space<vmem>>, vector<256x4xf32>
    %c0_2 = arith.constant 0 : index
    %c0_3 = arith.constant 0 : index
    %4 = vector.load %arg2[%c0_2, %c0_3] : memref<256x1xf32, #tpu.memory_space<vmem>>, vector<256x1xf32>
    %5 = vector.broadcast %4 : vector<256x1xf32> to vector<256x4xf32>
    %6 = arith.mulf %3, %5 : vector<256x4xf32>
    %c0_4 = arith.constant 0 : index
    %c0_5 = arith.constant 0 : index
    %7 = vector.load %arg3[%c0_4, %c0_5] : memref<256x1xf32, #tpu.memory_space<vmem>>, vector<256x1xf32>
    %8 = vector.broadcast %7 : vector<256x1xf32> to vector<256x4xf32>
    %9 = arith.mulf %3, %8 : vector<256x4xf32>
    %cst = arith.constant 0.000000e+00 : bf16
    %10 = vector.broadcast %cst : bf16 to vector<17x4xbf16>
    %c0_6 = arith.constant 0 : index
    %c0_7 = arith.constant 0 : index
    %11 = vector.load %arg10[%c0_6, %c0_7] : memref<256x1152xbf16, #tpu.memory_space<vmem>>, vector<17x4xbf16>
    tpu.vector_store %arg10[%c0_6, %c0_7], %10 {strides = array<i32>} : memref<256x1152xbf16, #tpu.memory_space<vmem>>, vector<17x4xbf16>,
    %12 = vector.extract_strided_slice %9 {offsets = [0, 0], sizes = [239, 4], strides = [1, 1]} : vector<256x4xf32> to vector<239x4xf32>
    %13 = arith.truncf %12 : vector<239x4xf32> to vector<239x4xbf16>
    %c17 = arith.constant 17 : index
    %c0_8 = arith.constant 0 : index
    %14 = vector.load %arg10[%c17, %c0_8] : memref<256x1152xbf16, #tpu.memory_space<vmem>>, vector<239x4xbf16>
    tpu.vector_store %arg10[%c17, %c0_8], %13 {strides = array<i32>} : memref<256x1152xbf16, #tpu.memory_space<vmem>>, vector<239x4xbf16>,
    %cst_9 = arith.constant 0.000000e+00 : bf16
    %15 = vector.broadcast %cst_9 : bf16 to vector<16x4xbf16>
    %c0_10 = arith.constant 0 : index
    %c128 = arith.constant 128 : index
    %16 = vector.load %arg10[%c0_10, %c128] : memref<256x1152xbf16, #tpu.memory_space<vmem>>, vector<16x4xbf16>
    tpu.vector_store %arg10[%c0_10, %c128], %15 {strides = array<i32>} : memref<256x1152xbf16, #tpu.memory_space<vmem>>, vector<16x4xbf16>,
    %17 = vector.extract_strided_slice %3 {offsets = [0, 0], sizes = [240, 4], strides = [1, 1]} : vector<256x4xf32> to vector<240x4xf32>
    %18 = arith.truncf %17 : vector<240x4xf32> to vector<240x4xbf16>
    %c16 = arith.constant 16 : index
    %c128_11 = arith.constant 128 : index
    %19 = vector.load %arg10[%c16, %c128_11] : memref<256x1152xbf16, #tpu.memory_space<vmem>>, vector<240x4xbf16>
    tpu.vector_store %arg10[%c16, %c128_11], %18 {strides = array<i32>} : memref<256x1152xbf16, #tpu.memory_space<vmem>>, vector<240x4xbf16>,
    %cst_12 = arith.constant 0.000000e+00 : bf16
    %20 = vector.broadcast %cst_12 : bf16 to vector<15x4xbf16>
    %c0_13 = arith.constant 0 : index
    %c256 = arith.constant 256 : index
    %21 = vector.load %arg10[%c0_13, %c256] : memref<256x1152xbf16, #tpu.memory_space<vmem>>, vector<15x4xbf16>
    tpu.vector_store %arg10[%c0_13, %c256], %20 {strides = array<i32>} : memref<256x1152xbf16, #tpu.memory_space<vmem>>, vector<15x4xbf16>,
    %22 = vector.extract_strided_slice %6 {offsets = [0, 0], sizes = [241, 4], strides = [1, 1]} : vector<256x4xf32> to vector<241x4xf32>
    %23 = arith.truncf %22 : vector<241x4xf32> to vector<241x4xbf16>
    %c15 = arith.constant 15 : index
    %c256_14 = arith.constant 256 : index
    %24 = vector.load %arg10[%c15, %c256_14] : memref<256x1152xbf16, #tpu.memory_space<vmem>>, vector<241x4xbf16>
    tpu.vector_store %arg10[%c15, %c256_14], %23 {strides = array<i32>} : memref<256x1152xbf16, #tpu.memory_space<vmem>>, vector<241x4xbf16>,
    %cst_15 = arith.constant 0.000000e+00 : bf16
    %25 = vector.broadcast %cst_15 : bf16 to vector<1x4xbf16>
    %c0_16 = arith.constant 0 : index
    %c384 = arith.constant 384 : index
    %26 = vector.load %arg10[%c0_16, %c384] : memref<256x1152xbf16, #tpu.memory_space<vmem>>, vector<1x4xbf16>
    tpu.vector_store %arg10[%c0_16, %c384], %25 {strides = array<i32>} : memref<256x1152xbf16, #tpu.memory_space<vmem>>, vector<1x4xbf16>,
    %27 = vector.extract_strided_slice %9 {offsets = [0, 0], sizes = [255, 4], strides = [1, 1]} : vector<256x4xf32> to vector<255x4xf32>
    %28 = arith.truncf %27 : vector<255x4xf32> to vector<255x4xbf16>
    %c1 = arith.constant 1 : index
    %c384_17 = arith.constant 384 : index
    %29 = vector.load %arg10[%c1, %c384_17] : memref<256x1152xbf16, #tpu.memory_space<vmem>>, vector<255x4xbf16>
    tpu.vector_store %arg10[%c1, %c384_17], %28 {strides = array<i32>} : memref<256x1152xbf16, #tpu.memory_space<vmem>>, vector<255x4xbf16>,
    %30 = arith.truncf %3 : vector<256x4xf32> to vector<256x4xbf16>
    %c0_18 = arith.constant 0 : index
    %c512 = arith.constant 512 : index
    %31 = vector.load %arg10[%c0_18, %c512] : memref<256x1152xbf16, #tpu.memory_space<vmem>>, vector<256x4xbf16>
    tpu.vector_store %arg10[%c0_18, %c512], %30 {strides = array<i32>} : memref<256x1152xbf16, #tpu.memory_space<vmem>>, vector<256x4xbf16>,
    %cst_19 = arith.constant 0.000000e+00 : bf16
    %32 = vector.broadcast %cst_19 : bf16 to vector<1x4xbf16>
    %c255 = arith.constant 255 : index
    %c640 = arith.constant 640 : index
    %33 = vector.load %arg10[%c255, %c640] : memref<256x1152xbf16, #tpu.memory_space<vmem>>, vector<1x4xbf16>
    tpu.vector_store %arg10[%c255, %c640], %32 {strides = array<i32>} : memref<256x1152xbf16, #tpu.memory_space<vmem>>, vector<1x4xbf16>,
    %34 = vector.extract_strided_slice %6 {offsets = [1, 0], sizes = [255, 4], strides = [1, 1]} : vector<256x4xf32> to vector<255x4xf32>
    %35 = arith.truncf %34 : vector<255x4xf32> to vector<255x4xbf16>
    %c0_20 = arith.constant 0 : index
    %c640_21 = arith.constant 640 : index
    %36 = vector.load %arg10[%c0_20, %c640_21] : memref<256x1152xbf16, #tpu.memory_space<vmem>>, vector<255x4xbf16>
    tpu.vector_store %arg10[%c0_20, %c640_21], %35 {strides = array<i32>} : memref<256x1152xbf16, #tpu.memory_space<vmem>>, vector<255x4xbf16>,
    %cst_22 = arith.constant 0.000000e+00 : bf16
    %37 = vector.broadcast %cst_22 : bf16 to vector<15x4xbf16>
    %c241 = arith.constant 241 : index
    %c768 = arith.constant 768 : index
    %38 = vector.load %arg10[%c241, %c768] : memref<256x1152xbf16, #tpu.memory_space<vmem>>, vector<15x4xbf16>
    tpu.vector_store %arg10[%c241, %c768], %37 {strides = array<i32>} : memref<256x1152xbf16, #tpu.memory_space<vmem>>, vector<15x4xbf16>,
    %39 = vector.extract_strided_slice %9 {offsets = [15, 0], sizes = [241, 4], strides = [1, 1]} : vector<256x4xf32> to vector<241x4xf32>
    %40 = arith.truncf %39 : vector<241x4xf32> to vector<241x4xbf16>
    %c0_23 = arith.constant 0 : index
    %c768_24 = arith.constant 768 : index
    %41 = vector.load %arg10[%c0_23, %c768_24] : memref<256x1152xbf16, #tpu.memory_space<vmem>>, vector<241x4xbf16>
    tpu.vector_store %arg10[%c0_23, %c768_24], %40 {strides = array<i32>} : memref<256x1152xbf16, #tpu.memory_space<vmem>>, vector<241x4xbf16>,
    %cst_25 = arith.constant 0.000000e+00 : bf16
    %42 = vector.broadcast %cst_25 : bf16 to vector<16x4xbf16>
    %c240 = arith.constant 240 : index
    %c896 = arith.constant 896 : index
    %43 = vector.load %arg10[%c240, %c896] : memref<256x1152xbf16, #tpu.memory_space<vmem>>, vector<16x4xbf16>
    tpu.vector_store %arg10[%c240, %c896], %42 {strides = array<i32>} : memref<256x1152xbf16, #tpu.memory_space<vmem>>, vector<16x4xbf16>,
    %44 = vector.extract_strided_slice %3 {offsets = [16, 0], sizes = [240, 4], strides = [1, 1]} : vector<256x4xf32> to vector<240x4xf32>
    %45 = arith.truncf %44 : vector<240x4xf32> to vector<240x4xbf16>
    %c0_26 = arith.constant 0 : index
    %c896_27 = arith.constant 896 : index
    %46 = vector.load %arg10[%c0_26, %c896_27] : memref<256x1152xbf16, #tpu.memory_space<vmem>>, vector<240x4xbf16>
    tpu.vector_store %arg10[%c0_26, %c896_27], %45 {strides = array<i32>} : memref<256x1152xbf16, #tpu.memory_space<vmem>>, vector<240x4xbf16>,
    %cst_28 = arith.constant 0.000000e+00 : bf16
    %47 = vector.broadcast %cst_28 : bf16 to vector<17x4xbf16>
    %c239 = arith.constant 239 : index
    %c1024 = arith.constant 1024 : index
    %48 = vector.load %arg10[%c239, %c1024] : memref<256x1152xbf16, #tpu.memory_space<vmem>>, vector<17x4xbf16>
    tpu.vector_store %arg10[%c239, %c1024], %47 {strides = array<i32>} : memref<256x1152xbf16, #tpu.memory_space<vmem>>, vector<17x4xbf16>,
    %49 = vector.extract_strided_slice %6 {offsets = [17, 0], sizes = [239, 4], strides = [1, 1]} : vector<256x4xf32> to vector<239x4xf32>
    %50 = arith.truncf %49 : vector<239x4xf32> to vector<239x4xbf16>
    %c0_29 = arith.constant 0 : index
    %c1024_30 = arith.constant 1024 : index
    %51 = vector.load %arg10[%c0_29, %c1024_30] : memref<256x1152xbf16, #tpu.memory_space<vmem>>, vector<239x4xbf16>
    tpu.vector_store %arg10[%c0_29, %c1024_30], %50 {strides = array<i32>} : memref<256x1152xbf16, #tpu.memory_space<vmem>>, vector<239x4xbf16>,
    %c0_31 = arith.constant 0 : index
    %c0_32 = arith.constant 0 : index
    %52 = vector.load %arg10[%c0_31, %c0_32] : memref<256x1152xbf16, #tpu.memory_space<vmem>>, vector<256x1152xbf16>
    %c0_33 = arith.constant 0 : index
    %c0_34 = arith.constant 0 : index
    %53 = vector.load %arg4[%c0_33, %c0_34] : memref<1152x128xbf16, #tpu.memory_space<vmem>>, vector<1152x128xbf16>
    %cst_35 = arith.constant dense<0.000000e+00> : vector<256x128xf32>
    %54 = tpu.matmul %52, %53, %cst_35 {dimension_numbers = #tpu.dot_dimension_numbers<[1], [0], [0], [1], [0, 0, 1, 1], [], []>} : vector<256x1152xbf16>, vector<1152x128xbf16>, vector<256x128xf32> -> vector<256x128xf32>
    %c0_36 = arith.constant 0 : index
    %c0_37 = arith.constant 0 : index
    %55 = vector.load %arg6[%c0_36, %c0_37] : memref<256x128xf32, #tpu.memory_space<vmem>>, vector<256x128xf32>
    tpu.vector_store %arg6[%c0_36, %c0_37], %54 {strides = array<i32>} : memref<256x128xf32, #tpu.memory_space<vmem>>, vector<256x128xf32>,
    %c0_38 = arith.constant 0 : index
    %c0_39 = arith.constant 0 : index
    %56 = vector.load %arg8[%c0_38, %c0_39] : memref<2x128xf32, #tpu.memory_space<vmem>>, vector<1x128xf32>
    %cst_40 = arith.constant dense<0.000000e+00> : vector<128xf32>
    %57 = vector.multi_reduction <add>, %54, %cst_40 [0] : vector<256x128xf32> to vector<128xf32>
    %58 = vector.shape_cast %57 : vector<128xf32> to vector<1x128xf32>
    %59 = arith.addf %56, %58 : vector<1x128xf32>
    %c0_41 = arith.constant 0 : index
    %c0_42 = arith.constant 0 : index
    %60 = vector.load %arg8[%c0_41, %c0_42] : memref<2x128xf32, #tpu.memory_space<vmem>>, vector<1x128xf32>
    tpu.vector_store %arg8[%c0_41, %c0_42], %59 {strides = array<i32>} : memref<2x128xf32, #tpu.memory_space<vmem>>, vector<1x128xf32>,
    %c1_43 = arith.constant 1 : index
    %c0_44 = arith.constant 0 : index
    %61 = vector.load %arg8[%c1_43, %c0_44] : memref<2x128xf32, #tpu.memory_space<vmem>>, vector<1x128xf32>
    %62 = arith.mulf %54, %54 : vector<256x128xf32>
    %cst_45 = arith.constant dense<0.000000e+00> : vector<128xf32>
    %63 = vector.multi_reduction <add>, %62, %cst_45 [0] : vector<256x128xf32> to vector<128xf32>
    %64 = vector.shape_cast %63 : vector<128xf32> to vector<1x128xf32>
    %65 = arith.addf %61, %64 : vector<1x128xf32>
    %c1_46 = arith.constant 1 : index
    %c0_47 = arith.constant 0 : index
    %66 = vector.load %arg8[%c1_46, %c0_47] : memref<2x128xf32, #tpu.memory_space<vmem>>, vector<1x128xf32>
    tpu.vector_store %arg8[%c1_46, %c0_47], %65 {strides = array<i32>} : memref<2x128xf32, #tpu.memory_space<vmem>>, vector<1x128xf32>,
    %c0_48 = arith.constant 0 : index
    %c512_49 = arith.constant 512 : index
    %67 = vector.load %arg10[%c0_48, %c512_49] : memref<256x1152xbf16, #tpu.memory_space<vmem>>, vector<256x128xbf16>
    %c0_50 = arith.constant 0 : index
    %c0_51 = arith.constant 0 : index
    %68 = vector.load %arg5[%c0_50, %c0_51] : memref<128x128xbf16, #tpu.memory_space<vmem>>, vector<128x128xbf16>
    %cst_52 = arith.constant dense<0.000000e+00> : vector<256x128xf32>
    %69 = tpu.matmul %67, %68, %cst_52 {dimension_numbers = #tpu.dot_dimension_numbers<[1], [0], [0], [1], [0, 0, 1, 1], [], []>} : vector<256x128xbf16>, vector<128x128xbf16>, vector<256x128xf32> -> vector<256x128xf32>
    %c0_53 = arith.constant 0 : index
    %c0_54 = arith.constant 0 : index
    %70 = vector.load %arg7[%c0_53, %c0_54] : memref<256x128xf32, #tpu.memory_space<vmem>>, vector<256x128xf32>
    tpu.vector_store %arg7[%c0_53, %c0_54], %69 {strides = array<i32>} : memref<256x128xf32, #tpu.memory_space<vmem>>, vector<256x128xf32>,
    %c0_55 = arith.constant 0 : index
    %c0_56 = arith.constant 0 : index
    %71 = vector.load %arg9[%c0_55, %c0_56] : memref<2x128xf32, #tpu.memory_space<vmem>>, vector<1x128xf32>
    %cst_57 = arith.constant dense<0.000000e+00> : vector<128xf32>
    %72 = vector.multi_reduction <add>, %69, %cst_57 [0] : vector<256x128xf32> to vector<128xf32>
    %73 = vector.shape_cast %72 : vector<128xf32> to vector<1x128xf32>
    %74 = arith.addf %71, %73 : vector<1x128xf32>
    %c0_58 = arith.constant 0 : index
    %c0_59 = arith.constant 0 : index
    %75 = vector.load %arg9[%c0_58, %c0_59] : memref<2x128xf32, #tpu.memory_space<vmem>>, vector<1x128xf32>
    tpu.vector_store %arg9[%c0_58, %c0_59], %74 {strides = array<i32>} : memref<2x128xf32, #tpu.memory_space<vmem>>, vector<1x128xf32>,
    %c1_60 = arith.constant 1 : index
    %c0_61 = arith.constant 0 : index
    %76 = vector.load %arg9[%c1_60, %c0_61] : memref<2x128xf32, #tpu.memory_space<vmem>>, vector<1x128xf32>
    %77 = arith.mulf %69, %69 : vector<256x128xf32>
    %cst_62 = arith.constant dense<0.000000e+00> : vector<128xf32>
    %78 = vector.multi_reduction <add>, %77, %cst_62 [0] : vector<256x128xf32> to vector<128xf32>
    %79 = vector.shape_cast %78 : vector<128xf32> to vector<1x128xf32>
    %80 = arith.addf %76, %79 : vector<1x128xf32>
    %c1_63 = arith.constant 1 : index
    %c0_64 = arith.constant 0 : index
    %81 = vector.load %arg9[%c1_63, %c0_64] : memref<2x128xf32, #tpu.memory_space<vmem>>, vector<1x128xf32>
    tpu.vector_store %arg9[%c1_63, %c0_64], %80 {strides = array<i32>} : memref<2x128xf32, #tpu.memory_space<vmem>>, vector<1x128xf32>,
    return
  }
  func.func @transform_0(%arg0: i32) -> (i32, i32) {
    %c0_i32 = arith.constant 0 : i32
    %c0_i32_0 = arith.constant 0 : i32
    return %arg0, %c0_i32 : i32, i32
  }
  func.func @transform_1(%arg0: i32) -> (i32, i32) {
    %c0_i32 = arith.constant 0 : i32
    %c0_i32_0 = arith.constant 0 : i32
    %c0_i32_1 = arith.constant 0 : i32
    return %c0_i32, %c0_i32_0 : i32, i32
  }
  func.func @transform_2(%arg0: i32) -> (i32, i32) {
    %c0_i32 = arith.constant 0 : i32
    %c0_i32_0 = arith.constant 0 : i32
    %c0_i32_1 = arith.constant 0 : i32
    return %c0_i32, %c0_i32_0 : i32, i32
  }
  func.func @transform_3(%arg0: i32) -> (i32, i32) {
    %c0_i32 = arith.constant 0 : i32
    %c0_i32_0 = arith.constant 0 : i32
    %c0_i32_1 = arith.constant 0 : i32
    return %c0_i32, %c0_i32_0 : i32, i32
  }
  func.func @transform_4(%arg0: i32) -> (i32, i32) {
    %c0_i32 = arith.constant 0 : i32
    %c0_i32_0 = arith.constant 0 : i32
    %c0_i32_1 = arith.constant 0 : i32
    return %c0_i32, %c0_i32_0 : i32, i32
  }
  func.func @transform_5(%arg0: i32) -> (i32, i32) {
    %c0_i32 = arith.constant 0 : i32
    %c0_i32_0 = arith.constant 0 : i32
    return %arg0, %c0_i32 : i32, i32
  }
  func.func @transform_6(%arg0: i32) -> (i32, i32) {
    %c0_i32 = arith.constant 0 : i32
    %c0_i32_0 = arith.constant 0 : i32
    return %arg0, %c0_i32 : i32, i32
  }
  func.func @transform_7(%arg0: i32) -> (i32, i32) {
    %c0_i32 = arith.constant 0 : i32
    %c0_i32_0 = arith.constant 0 : i32
    %c0_i32_1 = arith.constant 0 : i32
    return %c0_i32, %c0_i32_0 : i32, i32
  }
  func.func @transform_8(%arg0: i32) -> (i32, i32) {
    %c0_i32 = arith.constant 0 : i32
    %c0_i32_0 = arith.constant 0 : i32
    %c0_i32_1 = arith.constant 0 : i32
    return %c0_i32, %c0_i32_0 : i32, i32
  }
}

</mosaic_0001>

<llo_original>
// kernel: tpu_custom_call.1
$region0: #{tpu_custom_call.1}
  #allocation0 [shape = 'u32[]', space=smem, size = 0x4, offset = 0x4, fixed_abs, tag = 'smem constant byte address 0x4 - core index']
  #allocation1 [shape = 'u32[144,128]{1,0:T(1,128)}', space=vmem, size = 0x12000, scoped, tag = 'internal scratch']
  #allocation2 [shape = 'bf16[256,1152]{1,0:T(16,128)(2,1)}', space=vmem, size = 0x90000, scoped, tag = 'scratch operand']
  %s0 = inlined_call_operand.vmem [shape: f32[512,4], index: 0, kind: input, shape index: {}]
  %s1 = inlined_call_operand.vmem [shape: f32[256,1], index: 1, kind: input, shape index: {}]
  %s2 = inlined_call_operand.vmem [shape: f32[256,1], index: 2, kind: input, shape index: {}]
  %s3 = inlined_call_operand.vmem [shape: bf16[1152,128], index: 3, kind: input, shape index: {}]
  %s4 = inlined_call_operand.vmem [shape: bf16[128,128], index: 4, kind: input, shape index: {}]
  %s5 = inlined_call_operand.hbm [shape: f32[512,128], index: 5, kind: output, shape index: {0}]
  %s6 = inlined_call_operand.hbm [shape: f32[512,128], index: 6, kind: output, shape index: {1}]
  %s7 = inlined_call_operand.hbm [shape: f32[2,128], index: 7, kind: output, shape index: {2}]
  %s8 = inlined_call_operand.hbm [shape: f32[2,128], index: 8, kind: output, shape index: {3}]
  %9 = xla_tuple %s5, %s6, %s7, %s8
  %s10 = sld [smem:[#allocation0]]
  $region81: #{tpu_custom_call.1} parent=0
    _
  %s12 = ssub.s32 1, %s10
  %s13 = scalar_select 0, %s12, %s10
  $region1: #{tpu_custom_call.1} parent=0
    #allocation3 [shape = 'u8[262144]{0}', space=vmem, size = 0x40000, scoped, tag = 'output window, operand 0']
    #allocation4 [shape = 's32[2]{0}', space=sflag, size = 0x8, scoped, tag = 'scoped memory for tpu_custom_call.1']
    #allocation5 [shape = 'u8[262144]{0}', space=vmem, size = 0x40000, scoped, tag = 'output window, operand 1']
    #allocation6 [shape = 's32[2]{0}', space=sflag, size = 0x8, scoped, tag = 'scoped memory for tpu_custom_call.1']
    #allocation7 [shape = 'u8[1024]{0}', space=vmem, size = 0x400, scoped, tag = 'output window, operand 2, single buffered']
    #allocation8 [shape = 'u8[1024]{0}', space=vmem, size = 0x400, scoped, tag = 'output window, operand 3, single buffered']
    #allocation9 [shape = 's32[1]{0}', space=sflag, size = 0x4, scoped, tag = 'scoped memory for tpu_custom_call.1']
    %14 = vsyncpa [#allocation4], 0
    %s15 = scalar_lea.sflag [#allocation4], 1
    %16 = vsyncpa %s15, 0
    %17 = vsyncpa [#allocation6], 0
    %s18 = scalar_lea.sflag [#allocation6], 1
    %19 = vsyncpa %s18, 0
    %20 = vsyncpa [#allocation9], 0
    loop: start=0, step=1, limit=4
    $region2: #{tpu_custom_call.1} parent=1 // loop_pre_header
      _
    $region3: #{tpu_custom_call.1} parent=1 // loop_header
      %s22 = sphi 0, %s26
      %p23 = scmp.ge.s32.totalorder %s22, 4
      %s32 = sphi 0, %s34
      %s35 = sphi 0, %s32
      %s36 = sphi 0, %s35
      %s52 = sphi 0, %s36
      %s56 = sphi 0, %s56
      %s58 = sphi 0, %s56
      %s59 = sphi 0, %s58
      %s73 = sphi 0, %s59
      %s77 = sphi 0, %s77
      %s79 = sphi 0, %s77
      %s80 = sphi 0, %s79
      %s94 = sphi 0, %s80
      %s98 = sphi 0, %s98
      %s100 = sphi 0, %s98
      %s101 = sphi 0, %s100
      %s115 = sphi 0, %s101
      %s119 = sphi 0, %s119
      %s121 = sphi 0, %s119
      %s122 = sphi 0, %s121
      %s136 = sphi 0, %s122
      %s142 = sphi 0, %s144
      %s145 = sphi 0, %s142
      %s146 = sphi 0, %s145
      %s162 = sphi 0, %s146
      %s168 = sphi 0, %s170
      %s171 = sphi 0, %s168
      %s172 = sphi 0, %s171
      %s188 = sphi 0, %s172
      %s192 = sphi 0, %s192
      %s194 = sphi 0, %s192
      %s195 = sphi 0, %s194
      %s209 = sphi 0, %s195
      %s213 = sphi 0, %s213
      %s215 = sphi 0, %s213
      %s216 = sphi 0, %s215
      %s230 = sphi 0, %s216
    $region4: #{tpu_custom_call.1} parent=1 // loop_header_branch
      %25 = sbr.rel (%p23) target = $region8
    $region5: #{tpu_custom_call.1} parent=1 // loop_body
      %s27 = ssub.s32 %s22, 1
      %s28 = ssub.s32 %s22, 2
      %s29 = sadd.s32 %s22, 1
      %s30 = ssub.s32 %s22, %s29
      %p31 = scmp.eq.s32.totalorder %s30, 0
      %s33 = sadd.s32 %s32, 1
      %s34 = scalar_select %p31, %s32, %s33
      %p37 = pneg %p31
      %p38 = scmp.eq.s32.totalorder %s22, 1
      %p39 = por %p37, %p38
      %p40 = scmp.ne.s32.totalorder %s32, %s35
      %p41 = scmp.eq.s32.totalorder %s22, 0
      %p42 = por %p40, %p41
      %p43 = scmp.ne.s32.totalorder %s32, %s35
      %p44 = scmp.eq.s32.totalorder %s27, 1
      %p45 = por %p43, %p44
      %p46 = scmp.ne.s32.totalorder %s35, %s36
      %p47 = scmp.eq.s32.totalorder %s27, 0
      %p48 = por %p46, %p47
      %p49 = scmp.ne.s32.totalorder %s35, %s36
      %p50 = scmp.eq.s32.totalorder %s28, 1
      %p51 = por %p49, %p50
      %p53 = scmp.ne.s32.totalorder %s36, %s52
      %p54 = scmp.eq.s32.totalorder %s28, 0
      %p55 = por %p53, %p54
      %s57 = sadd.s32 %s56, 1
      %p60 = scmp.eq.s32.totalorder %s22, 1
      %p61 = scmp.ne.s32.totalorder %s56, %s58
      %p62 = scmp.eq.s32.totalorder %s22, 0
      %p63 = por %p61, %p62
      %p64 = scmp.ne.s32.totalorder %s56, %s58
      %p65 = scmp.eq.s32.totalorder %s27, 1
      %p66 = por %p64, %p65
      %p67 = scmp.ne.s32.totalorder %s58, %s59
      %p68 = scmp.eq.s32.totalorder %s27, 0
      %p69 = por %p67, %p68
      %p70 = scmp.ne.s32.totalorder %s58, %s59
      %p71 = scmp.eq.s32.totalorder %s28, 1
      %p72 = por %p70, %p71
      %p74 = scmp.ne.s32.totalorder %s59, %s73
      %p75 = scmp.eq.s32.totalorder %s28, 0
      %p76 = por %p74, %p75
      %s78 = sadd.s32 %s77, 1
      %p81 = scmp.eq.s32.totalorder %s22, 1
      %p82 = scmp.ne.s32.totalorder %s77, %s79
      %p83 = scmp.eq.s32.totalorder %s22, 0
      %p84 = por %p82, %p83
      %p85 = scmp.ne.s32.totalorder %s77, %s79
      %p86 = scmp.eq.s32.totalorder %s27, 1
      %p87 = por %p85, %p86
      %p88 = scmp.ne.s32.totalorder %s79, %s80
      %p89 = scmp.eq.s32.totalorder %s27, 0
      %p90 = por %p88, %p89
      %p91 = scmp.ne.s32.totalorder %s79, %s80
      %p92 = scmp.eq.s32.totalorder %s28, 1
      %p93 = por %p91, %p92
      %p95 = scmp.ne.s32.totalorder %s80, %s94
      %p96 = scmp.eq.s32.totalorder %s28, 0
      %p97 = por %p95, %p96
      %s99 = sadd.s32 %s98, 1
      %p102 = scmp.eq.s32.totalorder %s22, 1
      %p103 = scmp.ne.s32.totalorder %s98, %s100
      %p104 = scmp.eq.s32.totalorder %s22, 0
      %p105 = por %p103, %p104
      %p106 = scmp.ne.s32.totalorder %s98, %s100
      %p107 = scmp.eq.s32.totalorder %s27, 1
      %p108 = por %p106, %p107
      %p109 = scmp.ne.s32.totalorder %s100, %s101
      %p110 = scmp.eq.s32.totalorder %s27, 0
      %p111 = por %p109, %p110
      %p112 = scmp.ne.s32.totalorder %s100, %s101
      %p113 = scmp.eq.s32.totalorder %s28, 1
      %p114 = por %p112, %p113
      %p116 = scmp.ne.s32.totalorder %s101, %s115
      %p117 = scmp.eq.s32.totalorder %s28, 0
      %p118 = por %p116, %p117
      %s120 = sadd.s32 %s119, 1
      %p123 = scmp.eq.s32.totalorder %s22, 1
      %p124 = scmp.ne.s32.totalorder %s119, %s121
      %p125 = scmp.eq.s32.totalorder %s22, 0
      %p126 = por %p124, %p125
      %p127 = scmp.ne.s32.totalorder %s119, %s121
      %p128 = scmp.eq.s32.totalorder %s27, 1
      %p129 = por %p127, %p128
      %p130 = scmp.ne.s32.totalorder %s121, %s122
      %p131 = scmp.eq.s32.totalorder %s27, 0
      %p132 = por %p130, %p131
      %p133 = scmp.ne.s32.totalorder %s121, %s122
      %p134 = scmp.eq.s32.totalorder %s28, 1
      %p135 = por %p133, %p134
      %p137 = scmp.ne.s32.totalorder %s122, %s136
      %p138 = scmp.eq.s32.totalorder %s28, 0
      %p139 = por %p137, %p138
      %s140 = ssub.s32 %s22, %s29
      %p141 = scmp.eq.s32.totalorder %s140, 0
      %s143 = sadd.s32 %s142, 1
      %s144 = scalar_select %p141, %s142, %s143
      %p147 = pneg %p141
      %p148 = scmp.eq.s32.totalorder %s22, 1
      %p149 = por %p147, %p148
      %p150 = scmp.ne.s32.totalorder %s142, %s145
      %p151 = scmp.eq.s32.totalorder %s22, 0
      %p152 = por %p150, %p151
      %p153 = scmp.ne.s32.totalorder %s142, %s145
      %p154 = scmp.eq.s32.totalorder %s27, 1
      %p155 = por %p153, %p154
      %p156 = scmp.ne.s32.totalorder %s145, %s146
      %p157 = scmp.eq.s32.totalorder %s27, 0
      %p158 = por %p156, %p157
      %p159 = scmp.ne.s32.totalorder %s145, %s146
      %p160 = scmp.eq.s32.totalorder %s28, 1
      %p161 = por %p159, %p160
      %p163 = scmp.ne.s32.totalorder %s146, %s162
      %p164 = scmp.eq.s32.totalorder %s28, 0
      %p165 = por %p163, %p164
      %s166 = ssub.s32 %s22, %s29
      %p167 = scmp.eq.s32.totalorder %s166, 0
      %s169 = sadd.s32 %s168, 1
      %s170 = scalar_select %p167, %s168, %s169
      %p173 = pneg %p167
      %p174 = scmp.eq.s32.totalorder %s22, 1
      %p175 = por %p173, %p174
      %p176 = scmp.ne.s32.totalorder %s168, %s171
      %p177 = scmp.eq.s32.totalorder %s22, 0
      %p178 = por %p176, %p177
      %p179 = scmp.ne.s32.totalorder %s168, %s171
      %p180 = scmp.eq.s32.totalorder %s27, 1
      %p181 = por %p179, %p180
      %p182 = scmp.ne.s32.totalorder %s171, %s172
      %p183 = scmp.eq.s32.totalorder %s27, 0
      %p184 = por %p182, %p183
      %p185 = scmp.ne.s32.totalorder %s171, %s172
      %p186 = scmp.eq.s32.totalorder %s28, 1
      %p187 = por %p185, %p186
      %p189 = scmp.ne.s32.totalorder %s172, %s188
      %p190 = scmp.eq.s32.totalorder %s28, 0
      %p191 = por %p189, %p190
      %s193 = sadd.s32 %s192, 1
      %p196 = scmp.eq.s32.totalorder %s22, 1
      %p197 = scmp.ne.s32.totalorder %s192, %s194
      %p198 = scmp.eq.s32.totalorder %s22, 0
      %p199 = por %p197, %p198
      %p200 = scmp.ne.s32.totalorder %s192, %s194
      %p201 = scmp.eq.s32.totalorder %s27, 1
      %p202 = por %p200, %p201
      %p203 = scmp.ne.s32.totalorder %s194, %s195
      %p204 = scmp.eq.s32.totalorder %s27, 0
      %p205 = por %p203, %p204
      %p206 = scmp.ne.s32.totalorder %s194, %s195
      %p207 = scmp.eq.s32.totalorder %s28, 1
      %p208 = por %p206, %p207
      %p210 = scmp.ne.s32.totalorder %s195, %s209
      %p211 = scmp.eq.s32.totalorder %s28, 0
      %p212 = por %p210, %p211
      %s214 = sadd.s32 %s213, 1
      %p217 = scmp.eq.s32.totalorder %s22, 1
      %p218 = scmp.ne.s32.totalorder %s213, %s215
      %p219 = scmp.eq.s32.totalorder %s22, 0
      %p220 = por %p218, %p219
      %p221 = scmp.ne.s32.totalorder %s213, %s215
      %p222 = scmp.eq.s32.totalorder %s27, 1
      %p223 = por %p221, %p222
      %p224 = scmp.ne.s32.totalorder %s215, %s216
      %p225 = scmp.eq.s32.totalorder %s27, 0
      %p226 = por %p224, %p225
      %p227 = scmp.ne.s32.totalorder %s215, %s216
      %p228 = scmp.eq.s32.totalorder %s28, 1
      %p229 = por %p227, %p228
      %p231 = scmp.ne.s32.totalorder %s216, %s230
      %p232 = scmp.eq.s32.totalorder %s28, 0
      %p233 = por %p231, %p232
      %p234 = scmp.le.s32.totalorder 1, %s22
      %p235 = scmp.lt.s32.totalorder %s22, 3
      %p236 = pnand %p234, %p235
      %p237 = pneg %p236
      // Predicated region
      $region9: #{tpu_custom_call.1} parent=5 // pred_check
        _
      $region10: #{tpu_custom_call.1} parent=5 // pred_check_branch
        %239 = sbr.rel (%p236) target = $region12
      $region11: #{tpu_custom_call.1} parent=5 // pred_region
        %s240 = ssub.s32 %s22, 1
        // Predicated region
        $region13: #{tpu_custom_call.1} parent=11 // pred_check
          %p241 = pneg %p69
        $region14: #{tpu_custom_call.1} parent=11 // pred_check_branch
          %243 = sbr.rel (%p241) target = $region16
        $region15: #{tpu_custom_call.1} parent=11 // pred_region
          _
        $region16: #{tpu_custom_call.1} parent=11 // pred_fallthru
          _
        // Predicated region
        $region17: #{tpu_custom_call.1} parent=11 // pred_check
          %p244 = pneg %p90
        $region18: #{tpu_custom_call.1} parent=11 // pred_check_branch
          %246 = sbr.rel (%p244) target = $region20
        $region19: #{tpu_custom_call.1} parent=11 // pred_region
          _
        $region20: #{tpu_custom_call.1} parent=11 // pred_fallthru
          _
        // Predicated region
        $region21: #{tpu_custom_call.1} parent=11 // pred_check
          %p247 = pneg %p111
        $region22: #{tpu_custom_call.1} parent=11 // pred_check_branch
          %249 = sbr.rel (%p247) target = $region24
        $region23: #{tpu_custom_call.1} parent=11 // pred_region
          _
        $region24: #{tpu_custom_call.1} parent=11 // pred_fallthru
          _
        // Predicated region
        $region25: #{tpu_custom_call.1} parent=11 // pred_check
          %p250 = pneg %p132
        $region26: #{tpu_custom_call.1} parent=11 // pred_check_branch
          %252 = sbr.rel (%p250) target = $region28
        $region27: #{tpu_custom_call.1} parent=11 // pred_region
          _
        $region28: #{tpu_custom_call.1} parent=11 // pred_fallthru
          _
      $region12: #{tpu_custom_call.1} parent=5 // pred_fallthru
        _
      %p253 = scmp.lt.s32.totalorder %s22, 2
      // Predicated region
      $region29: #{tpu_custom_call.1} parent=5 // pred_check
        %p254 = pneg %p253
      $region30: #{tpu_custom_call.1} parent=5 // pred_check_branch
        %256 = sbr.rel (%p254) target = $region32
      $region31: #{tpu_custom_call.1} parent=5 // pred_region
        // Predicated region
        $region33: #{tpu_custom_call.1} parent=31 // pred_check
          %p257 = pneg %p42
        $region34: #{tpu_custom_call.1} parent=31 // pred_check_branch
          %259 = sbr.rel (%p257) target = $region36
        $region35: #{tpu_custom_call.1} parent=31 // pred_region
          %s260 = smul.u32 32, %s22
          %p261 = scmp.lt.s32.totalorder %s260, 63
          %s262 = scalar_select %p261, %s260, 63
          %s263 = smul.addr %s262, 8
          %s264 = scalar_lea.vmem %s0, %s263
          %s265 = smul.u32 32, %s22
        $region36: #{tpu_custom_call.1} parent=31 // pred_fallthru
          _
      $region32: #{tpu_custom_call.1} parent=5 // pred_fallthru
        _
      %p266 = scmp.le.s32.totalorder 1, %s22
      %p267 = scmp.lt.s32.totalorder %s22, 3
      %p268 = pnand %p266, %p267
      %p269 = pneg %p268
      // Predicated region
      $region37: #{tpu_custom_call.1} parent=5 // pred_check
        _
      $region38: #{tpu_custom_call.1} parent=5 // pred_check_branch
        %271 = sbr.rel (%p268) target = $region40
      $region39: #{tpu_custom_call.1} parent=5 // pred_region
        %s272 = ssub.s32 %s22, 1
        %s273 = smul.u32 32, %s27
        %p274 = scmp.lt.s32.totalorder %s273, 63
        %s275 = scalar_select %p274, %s273, 63
        %s276 = smul.addr %s275, 8
        %s277 = scalar_lea.vmem %s0, %s276
        %p278 = pneg %p48
        %p279 = pneg %p45
        %p280 = pneg %p69
        %p281 = pneg %p66
        %p282 = pneg %p90
        %p283 = pneg %p87
        %p284 = pneg %p111
        %p285 = pneg %p108
        %p286 = pneg %p132
        %p287 = pneg %p129
        %p288 = pneg %p158
        %p289 = pneg %p155
        %s290 = sand.u32 %s145, 1
        %s291 = scalar_lea.sflag [#allocation4], %s290
        %s292 = sand.u32 %s145, 1
        %s293 = smul.addr %s292, 256
        %s294 = scalar_lea.vmem [#allocation3], %s293
        %p295 = pneg %p184
        %p296 = pneg %p181
        %s297 = sand.u32 %s27, 1
        %s298 = scalar_lea.sflag [#allocation6], %s297
        %s299 = sand.u32 %s171, 1
        %s300 = smul.addr %s299, 256
        %s301 = scalar_lea.vmem [#allocation5], %s300
        %p302 = pneg %p205
        %p303 = pneg %p202
        %p304 = pneg %p226
        %p305 = pneg %p223
        %s306 = smul.u32 32, %s27
        %p307 = scmp.lt.s32.totalorder %s306, 63
        %s308 = scalar_select %p307, %s306, 63
        %s309 = smul.addr %s308, 8
        %s310 = scalar_lea.vmem %s0, %s309
        %s311 = smul.u32 32, %s27
        %s312 = smul.u32 32, %s27
        %s313 = smul.u32 32, %s27
        %p315 = scmp.eq.s32.totalorder %s27, 0
        // Predicated region
        $region41: #{tpu_custom_call.1} parent=39 // pred_check
          %p316 = pneg %p315
        $region42: #{tpu_custom_call.1} parent=39 // pred_check_branch
          %318 = sbr.rel (%p316) target = $region44
        $region43: #{tpu_custom_call.1} parent=39 // pred_region
          %319 = vst [vmem:[#allocation2] sm:$0xff] 0
          %320 = vst [vmem:[#allocation2 + $0x8] sm:$0xff] 0
          %321 = vst [vmem:[#allocation2 + $0x10] sm:$0xff] 0
          %322 = vst [vmem:[#allocation2 + $0x18] sm:$0xff] 0
          %323 = vst [vmem:[#allocation2 + $0x20] sm:$0xff] 0
          %324 = vst [vmem:[#allocation2 + $0x28] sm:$0xff] 0
          %325 = vst [vmem:[#allocation2 + $0x30] sm:$0xff] 0
          %326 = vst [vmem:[#allocation2 + $0x38] sm:$0xff] 0
          %327 = vst [vmem:[#allocation2 + $0x40] sm:$0xff] 0
          %328 = vst [vmem:[#allocation2 + $0x48] sm:$0xff] 0
          %329 = vst [vmem:[#allocation2 + $0x50] sm:$0xff] 0
          %330 = vst [vmem:[#allocation2 + $0x58] sm:$0xff] 0
          %331 = vst [vmem:[#allocation2 + $0x60] sm:$0xff] 0
          %332 = vst [vmem:[#allocation2 + $0x68] sm:$0xff] 0
          %333 = vst [vmem:[#allocation2 + $0x70] sm:$0xff] 0
          %334 = vst [vmem:[#allocation2 + $0x78] sm:$0xff] 0
          %335 = vst [vmem:[#allocation2 + $0x80] sm:$0xff] 0
          %336 = vst [vmem:[#allocation2 + $0x88] sm:$0xff] 0
          %337 = vst [vmem:[#allocation2 + $0x90] sm:$0xff] 0
          %338 = vst [vmem:[#allocation2 + $0x98] sm:$0xff] 0
          %339 = vst [vmem:[#allocation2 + $0xa0] sm:$0xff] 0
          %340 = vst [vmem:[#allocation2 + $0xa8] sm:$0xff] 0
          %341 = vst [vmem:[#allocation2 + $0xb0] sm:$0xff] 0
          %342 = vst [vmem:[#allocation2 + $0xb8] sm:$0xff] 0
          %343 = vst [vmem:[#allocation2 + $0xc0] sm:$0xff] 0
          %344 = vst [vmem:[#allocation2 + $0xc8] sm:$0xff] 0
          %345 = vst [vmem:[#allocation2 + $0xd0] sm:$0xff] 0
          %346 = vst [vmem:[#allocation2 + $0xd8] sm:$0xff] 0
          %347 = vst [vmem:[#allocation2 + $0xe0] sm:$0xff] 0
          %348 = vst [vmem:[#allocation2 + $0xe8] sm:$0xff] 0
          %349 = vst [vmem:[#allocation2 + $0xf0] sm:$0xff] 0
          %350 = vst [vmem:[#allocation2 + $0xf8] sm:$0xff] 0
          %351 = vst [vmem:[#allocation2 + $0x100] sm:$0xff] 0
          %352 = vst [vmem:[#allocation2 + $0x108] sm:$0xff] 0
          %353 = vst [vmem:[#allocation2 + $0x110] sm:$0xff] 0
          %354 = vst [vmem:[#allocation2 + $0x118] sm:$0xff] 0
          %355 = vst [vmem:[#allocation2 + $0x120] sm:$0xff] 0
          %356 = vst [vmem:[#allocation2 + $0x128] sm:$0xff] 0
          %357 = vst [vmem:[#allocation2 + $0x130] sm:$0xff] 0
          %358 = vst [vmem:[#allocation2 + $0x138] sm:$0xff] 0
          %359 = vst [vmem:[#allocation2 + $0x140] sm:$0xff] 0
          %360 = vst [vmem:[#allocation2 + $0x148] sm:$0xff] 0
          %361 = vst [vmem:[#allocation2 + $0x150] sm:$0xff] 0
          %362 = vst [vmem:[#allocation2 + $0x158] sm:$0xff] 0
          %363 = vst [vmem:[#allocation2 + $0x160] sm:$0xff] 0
          %364 = vst [vmem:[#allocation2 + $0x168] sm:$0xff] 0
          %365 = vst [vmem:[#allocation2 + $0x170] sm:$0xff] 0
          %366 = vst [vmem:[#allocation2 + $0x178] sm:$0xff] 0
          %367 = vst [vmem:[#allocation2 + $0x180] sm:$0xff] 0
          %368 = vst [vmem:[#allocation2 + $0x188] sm:$0xff] 0
          %369 = vst [vmem:[#allocation2 + $0x190] sm:$0xff] 0
          %370 = vst [vmem:[#allocation2 + $0x198] sm:$0xff] 0
          %371 = vst [vmem:[#allocation2 + $0x1a0] sm:$0xff] 0
          %372 = vst [vmem:[#allocation2 + $0x1a8] sm:$0xff] 0
          %373 = vst [vmem:[#allocation2 + $0x1b0] sm:$0xff] 0
          %374 = vst [vmem:[#allocation2 + $0x1b8] sm:$0xff] 0
          %375 = vst [vmem:[#allocation2 + $0x1c0] sm:$0xff] 0
          %376 = vst [vmem:[#allocation2 + $0x1c8] sm:$0xff] 0
          %377 = vst [vmem:[#allocation2 + $0x1d0] sm:$0xff] 0
          %378 = vst [vmem:[#allocation2 + $0x1d8] sm:$0xff] 0
          %379 = vst [vmem:[#allocation2 + $0x1e0] sm:$0xff] 0
          %380 = vst [vmem:[#allocation2 + $0x1e8] sm:$0xff] 0
          %381 = vst [vmem:[#allocation2 + $0x1f0] sm:$0xff] 0
          %382 = vst [vmem:[#allocation2 + $0x1f8] sm:$0xff] 0
          %383 = vst [vmem:[#allocation2 + $0x200] sm:$0xff] 0
          %384 = vst [vmem:[#allocation2 + $0x208] sm:$0xff] 0
          %385 = vst [vmem:[#allocation2 + $0x210] sm:$0xff] 0
          %386 = vst [vmem:[#allocation2 + $0x218] sm:$0xff] 0
          %387 = vst [vmem:[#allocation2 + $0x220] sm:$0xff] 0
          %388 = vst [vmem:[#allocation2 + $0x228] sm:$0xff] 0
          %389 = vst [vmem:[#allocation2 + $0x230] sm:$0xff] 0
          %390 = vst [vmem:[#allocation2 + $0x238] sm:$0xff] 0
          %391 = vst [vmem:[#allocation2 + $0x240] sm:$0xff] 0
          %392 = vst [vmem:[#allocation2 + $0x248] sm:$0xff] 0
          %393 = vst [vmem:[#allocation2 + $0x250] sm:$0xff] 0
          %394 = vst [vmem:[#allocation2 + $0x258] sm:$0xff] 0
          %395 = vst [vmem:[#allocation2 + $0x260] sm:$0xff] 0
          %396 = vst [vmem:[#allocation2 + $0x268] sm:$0xff] 0
          %397 = vst [vmem:[#allocation2 + $0x270] sm:$0xff] 0
          %398 = vst [vmem:[#allocation2 + $0x278] sm:$0xff] 0
          %399 = vst [vmem:[#allocation2 + $0x280] sm:$0xff] 0
          %400 = vst [vmem:[#allocation2 + $0x288] sm:$0xff] 0
          %401 = vst [vmem:[#allocation2 + $0x290] sm:$0xff] 0
          %402 = vst [vmem:[#allocation2 + $0x298] sm:$0xff] 0
          %403 = vst [vmem:[#allocation2 + $0x2a0] sm:$0xff] 0
          %404 = vst [vmem:[#allocation2 + $0x2a8] sm:$0xff] 0
          %405 = vst [vmem:[#allocation2 + $0x2b0] sm:$0xff] 0
          %406 = vst [vmem:[#allocation2 + $0x2b8] sm:$0xff] 0
          %407 = vst [vmem:[#allocation2 + $0x2c0] sm:$0xff] 0
          %408 = vst [vmem:[#allocation2 + $0x2c8] sm:$0xff] 0
          %409 = vst [vmem:[#allocation2 + $0x2d0] sm:$0xff] 0
          %410 = vst [vmem:[#allocation2 + $0x2d8] sm:$0xff] 0
          %411 = vst [vmem:[#allocation2 + $0x2e0] sm:$0xff] 0
          %412 = vst [vmem:[#allocation2 + $0x2e8] sm:$0xff] 0
          %413 = vst [vmem:[#allocation2 + $0x2f0] sm:$0xff] 0
          %414 = vst [vmem:[#allocation2 + $0x2f8] sm:$0xff] 0
          %415 = vst [vmem:[#allocation2 + $0x300] sm:$0xff] 0
          %416 = vst [vmem:[#allocation2 + $0x308] sm:$0xff] 0
          %417 = vst [vmem:[#allocation2 + $0x310] sm:$0xff] 0
          %418 = vst [vmem:[#allocation2 + $0x318] sm:$0xff] 0
          %419 = vst [vmem:[#allocation2 + $0x320] sm:$0xff] 0
          %420 = vst [vmem:[#allocation2 + $0x328] sm:$0xff] 0
          %421 = vst [vmem:[#allocation2 + $0x330] sm:$0xff] 0
          %422 = vst [vmem:[#allocation2 + $0x338] sm:$0xff] 0
          %423 = vst [vmem:[#allocation2 + $0x340] sm:$0xff] 0
          %424 = vst [vmem:[#allocation2 + $0x348] sm:$0xff] 0
          %425 = vst [vmem:[#allocation2 + $0x350] sm:$0xff] 0
          %426 = vst [vmem:[#allocation2 + $0x358] sm:$0xff] 0
          %427 = vst [vmem:[#allocation2 + $0x360] sm:$0xff] 0
          %428 = vst [vmem:[#allocation2 + $0x368] sm:$0xff] 0
          %429 = vst [vmem:[#allocation2 + $0x370] sm:$0xff] 0
          %430 = vst [vmem:[#allocation2 + $0x378] sm:$0xff] 0
          %431 = vst [vmem:[#allocation2 + $0x380] sm:$0xff] 0
          %432 = vst [vmem:[#allocation2 + $0x388] sm:$0xff] 0
          %433 = vst [vmem:[#allocation2 + $0x390] sm:$0xff] 0
          %434 = vst [vmem:[#allocation2 + $0x398] sm:$0xff] 0
          %435 = vst [vmem:[#allocation2 + $0x3a0] sm:$0xff] 0
          %436 = vst [vmem:[#allocation2 + $0x3a8] sm:$0xff] 0
          %437 = vst [vmem:[#allocation2 + $0x3b0] sm:$0xff] 0
          %438 = vst [vmem:[#allocation2 + $0x3b8] sm:$0xff] 0
          %439 = vst [vmem:[#allocation2 + $0x3c0] sm:$0xff] 0
          %440 = vst [vmem:[#allocation2 + $0x3c8] sm:$0xff] 0
          %441 = vst [vmem:[#allocation2 + $0x3d0] sm:$0xff] 0
          %442 = vst [vmem:[#allocation2 + $0x3d8] sm:$0xff] 0
          %443 = vst [vmem:[#allocation2 + $0x3e0] sm:$0xff] 0
          %444 = vst [vmem:[#allocation2 + $0x3e8] sm:$0xff] 0
          %445 = vst [vmem:[#allocation2 + $0x3f0] sm:$0xff] 0
          %446 = vst [vmem:[#allocation2 + $0x3f8] sm:$0xff] 0
          %447 = vst [vmem:[#allocation2 + $0x400] sm:$0xff] 0
          %448 = vst [vmem:[#allocation2 + $0x408] sm:$0xff] 0
          %449 = vst [vmem:[#allocation2 + $0x410] sm:$0xff] 0
          %450 = vst [vmem:[#allocation2 + $0x418] sm:$0xff] 0
          %451 = vst [vmem:[#allocation2 + $0x420] sm:$0xff] 0
          %452 = vst [vmem:[#allocation2 + $0x428] sm:$0xff] 0
          %453 = vst [vmem:[#allocation2 + $0x430] sm:$0xff] 0
          %454 = vst [vmem:[#allocation2 + $0x438] sm:$0xff] 0
          %455 = vst [vmem:[#allocation2 + $0x440] sm:$0xff] 0
          %456 = vst [vmem:[#allocation2 + $0x448] sm:$0xff] 0
          %457 = vst [vmem:[#allocation2 + $0x450] sm:$0xff] 0
          %458 = vst [vmem:[#allocation2 + $0x458] sm:$0xff] 0
          %459 = vst [vmem:[#allocation2 + $0x460] sm:$0xff] 0
          %460 = vst [vmem:[#allocation2 + $0x468] sm:$0xff] 0
          %461 = vst [vmem:[#allocation2 + $0x470] sm:$0xff] 0
          %462 = vst [vmem:[#allocation2 + $0x478] sm:$0xff] 0
          %463 = vst [vmem:[#allocation7] sm:$0x3] 0.0
          %464 = vst [vmem:[#allocation8] sm:$0x3] 0.0
        $region44: #{tpu_custom_call.1} parent=39 // pred_fallthru
          _
        %v465 = vld [vmem:[%s310] sm:$0xff]
        %v466 = vld [vmem:[%s310 + $0x8] sm:$0xff]
        %v467 = vld [vmem:[%s310 + $0x10] sm:$0xff]
        %v468 = vld [vmem:[%s310 + $0x18] sm:$0xff]
        %v469 = vld [vmem:[%s310 + $0x20] sm:$0xff]
        %v470 = vld [vmem:[%s310 + $0x28] sm:$0xff]
        %v471 = vld [vmem:[%s310 + $0x30] sm:$0xff]
        %v472 = vld [vmem:[%s310 + $0x38] sm:$0xff]
        %v473 = vld [vmem:[%s310 + $0x40] sm:$0xff]
        %v474 = vld [vmem:[%s310 + $0x48] sm:$0xff]
        %v475 = vld [vmem:[%s310 + $0x50] sm:$0xff]
        %v476 = vld [vmem:[%s310 + $0x58] sm:$0xff]
        %v477 = vld [vmem:[%s310 + $0x60] sm:$0xff]
        %v478 = vld [vmem:[%s310 + $0x68] sm:$0xff]
        %v479 = vld [vmem:[%s310 + $0x70] sm:$0xff]
        %v480 = vld [vmem:[%s310 + $0x78] sm:$0xff]
        %v481 = vld [vmem:[%s310 + $0x80] sm:$0xff]
        %v482 = vld [vmem:[%s310 + $0x88] sm:$0xff]
        %v483 = vld [vmem:[%s310 + $0x90] sm:$0xff]
        %v484 = vld [vmem:[%s310 + $0x98] sm:$0xff]
        %v485 = vld [vmem:[%s310 + $0xa0] sm:$0xff]
        %v486 = vld [vmem:[%s310 + $0xa8] sm:$0xff]
        %v487 = vld [vmem:[%s310 + $0xb0] sm:$0xff]
        %v488 = vld [vmem:[%s310 + $0xb8] sm:$0xff]
        %v489 = vld [vmem:[%s310 + $0xc0] sm:$0xff]
        %v490 = vld [vmem:[%s310 + $0xc8] sm:$0xff]
        %v491 = vld [vmem:[%s310 + $0xd0] sm:$0xff]
        %v492 = vld [vmem:[%s310 + $0xd8] sm:$0xff]
        %v493 = vld [vmem:[%s310 + $0xe0] sm:$0xff]
        %v494 = vld [vmem:[%s310 + $0xe8] sm:$0xff]
        %v495 = vld [vmem:[%s310 + $0xf0] sm:$0xff]
        %v496 = vld [vmem:[%s310 + $0xf8] sm:$0xff]
        %v497 = vld [vmem:[%s1] sm:$0xff]
        %v498 = vld [vmem:[%s1 + $0x8] sm:$0xff]
        %v499 = vld [vmem:[%s1 + $0x10] sm:$0xff]
        %v500 = vld [vmem:[%s1 + $0x18] sm:$0xff]
        %v501 = vld [vmem:[%s1 + $0x20] sm:$0xff]
        %v502 = vld [vmem:[%s1 + $0x28] sm:$0xff]
        %v503 = vld [vmem:[%s1 + $0x30] sm:$0xff]
        %v504 = vld [vmem:[%s1 + $0x38] sm:$0xff]
        %v505 = vld [vmem:[%s1 + $0x40] sm:$0xff]
        %v506 = vld [vmem:[%s1 + $0x48] sm:$0xff]
        %v507 = vld [vmem:[%s1 + $0x50] sm:$0xff]
        %v508 = vld [vmem:[%s1 + $0x58] sm:$0xff]
        %v509 = vld [vmem:[%s1 + $0x60] sm:$0xff]
        %v510 = vld [vmem:[%s1 + $0x68] sm:$0xff]
        %v511 = vld [vmem:[%s1 + $0x70] sm:$0xff]
        %v512 = vld [vmem:[%s1 + $0x78] sm:$0xff]
        %v513 = vld [vmem:[%s1 + $0x80] sm:$0xff]
        %v514 = vld [vmem:[%s1 + $0x88] sm:$0xff]
        %v515 = vld [vmem:[%s1 + $0x90] sm:$0xff]
        %v516 = vld [vmem:[%s1 + $0x98] sm:$0xff]
        %v517 = vld [vmem:[%s1 + $0xa0] sm:$0xff]
        %v518 = vld [vmem:[%s1 + $0xa8] sm:$0xff]
        %v519 = vld [vmem:[%s1 + $0xb0] sm:$0xff]
        %v520 = vld [vmem:[%s1 + $0xb8] sm:$0xff]
        %v521 = vld [vmem:[%s1 + $0xc0] sm:$0xff]
        %v522 = vld [vmem:[%s1 + $0xc8] sm:$0xff]
        %v523 = vld [vmem:[%s1 + $0xd0] sm:$0xff]
        %v524 = vld [vmem:[%s1 + $0xd8] sm:$0xff]
        %v525 = vld [vmem:[%s1 + $0xe0] sm:$0xff]
        %v526 = vld [vmem:[%s1 + $0xe8] sm:$0xff]
        %v527 = vld [vmem:[%s1 + $0xf0] sm:$0xff]
        %v528 = vld [vmem:[%s1 + $0xf8] sm:$0xff]
        %530 = vset.pattern.permute.xlu0 0
        %531 = vperm.xlu0 %530, %v497
        %v532 = vpop.permute.xlu0 %531
        %535 = vset.pattern.permute.xlu0 0
        %536 = vperm.xlu0 %535, %v498
        %v537 = vpop.permute.xlu0 %536
        %540 = vset.pattern.permute.xlu0 0
        %541 = vperm.xlu0 %540, %v499
        %v542 = vpop.permute.xlu0 %541
        %545 = vset.pattern.permute.xlu0 0
        %546 = vperm.xlu0 %545, %v500
        %v547 = vpop.permute.xlu0 %546
        %550 = vset.pattern.permute.xlu0 0
        %551 = vperm.xlu0 %550, %v501
        %v552 = vpop.permute.xlu0 %551
        %555 = vset.pattern.permute.xlu0 0
        %556 = vperm.xlu0 %555, %v502
        %v557 = vpop.permute.xlu0 %556
        %560 = vset.pattern.permute.xlu0 0
        %561 = vperm.xlu0 %560, %v503
        %v562 = vpop.permute.xlu0 %561
        %565 = vset.pattern.permute.xlu0 0
        %566 = vperm.xlu0 %565, %v504
        %v567 = vpop.permute.xlu0 %566
        %570 = vset.pattern.permute.xlu0 0
        %571 = vperm.xlu0 %570, %v505
        %v572 = vpop.permute.xlu0 %571
        %575 = vset.pattern.permute.xlu0 0
        %576 = vperm.xlu0 %575, %v506
        %v577 = vpop.permute.xlu0 %576
        %580 = vset.pattern.permute.xlu0 0
        %581 = vperm.xlu0 %580, %v507
        %v582 = vpop.permute.xlu0 %581
        %585 = vset.pattern.permute.xlu0 0
        %586 = vperm.xlu0 %585, %v508
        %v587 = vpop.permute.xlu0 %586
        %590 = vset.pattern.permute.xlu0 0
        %591 = vperm.xlu0 %590, %v509
        %v592 = vpop.permute.xlu0 %591
        %595 = vset.pattern.permute.xlu0 0
        %596 = vperm.xlu0 %595, %v510
        %v597 = vpop.permute.xlu0 %596
        %600 = vset.pattern.permute.xlu0 0
        %601 = vperm.xlu0 %600, %v511
        %v602 = vpop.permute.xlu0 %601
        %605 = vset.pattern.permute.xlu0 0
        %606 = vperm.xlu0 %605, %v512
        %v607 = vpop.permute.xlu0 %606
        %610 = vset.pattern.permute.xlu0 0
        %611 = vperm.xlu0 %610, %v513
        %v612 = vpop.permute.xlu0 %611
        %615 = vset.pattern.permute.xlu0 0
        %616 = vperm.xlu0 %615, %v514
        %v617 = vpop.permute.xlu0 %616
        %620 = vset.pattern.permute.xlu0 0
        %621 = vperm.xlu0 %620, %v515
        %v622 = vpop.permute.xlu0 %621
        %625 = vset.pattern.permute.xlu0 0
        %626 = vperm.xlu0 %625, %v516
        %v627 = vpop.permute.xlu0 %626
        %630 = vset.pattern.permute.xlu0 0
        %631 = vperm.xlu0 %630, %v517
        %v632 = vpop.permute.xlu0 %631
        %635 = vset.pattern.permute.xlu0 0
        %636 = vperm.xlu0 %635, %v518
        %v637 = vpop.permute.xlu0 %636
        %640 = vset.pattern.permute.xlu0 0
        %641 = vperm.xlu0 %640, %v519
        %v642 = vpop.permute.xlu0 %641
        %645 = vset.pattern.permute.xlu0 0
        %646 = vperm.xlu0 %645, %v520
        %v647 = vpop.permute.xlu0 %646
        %650 = vset.pattern.permute.xlu0 0
        %651 = vperm.xlu0 %650, %v521
        %v652 = vpop.permute.xlu0 %651
        %655 = vset.pattern.permute.xlu0 0
        %656 = vperm.xlu0 %655, %v522
        %v657 = vpop.permute.xlu0 %656
        %660 = vset.pattern.permute.xlu0 0
        %661 = vperm.xlu0 %660, %v523
        %v662 = vpop.permute.xlu0 %661
        %665 = vset.pattern.permute.xlu0 0
        %666 = vperm.xlu0 %665, %v524
        %v667 = vpop.permute.xlu0 %666
        %670 = vset.pattern.permute.xlu0 0
        %671 = vperm.xlu0 %670, %v525
        %v672 = vpop.permute.xlu0 %671
        %675 = vset.pattern.permute.xlu0 0
        %676 = vperm.xlu0 %675, %v526
        %v677 = vpop.permute.xlu0 %676
        %680 = vset.pattern.permute.xlu0 0
        %681 = vperm.xlu0 %680, %v527
        %v682 = vpop.permute.xlu0 %681
        %685 = vset.pattern.permute.xlu0 0
        %686 = vperm.xlu0 %685, %v528
        %v687 = vpop.permute.xlu0 %686
        %v689 = vmul.f32 %v465, %v532
        %v690 = vmul.f32 %v466, %v537
        %v691 = vmul.f32 %v467, %v542
        %v692 = vmul.f32 %v468, %v547
        %v693 = vmul.f32 %v469, %v552
        %v694 = vmul.f32 %v470, %v557
        %v695 = vmul.f32 %v471, %v562
        %v696 = vmul.f32 %v472, %v567
        %v697 = vmul.f32 %v473, %v572
        %v698 = vmul.f32 %v474, %v577
        %v699 = vmul.f32 %v475, %v582
        %v700 = vmul.f32 %v476, %v587
        %v701 = vmul.f32 %v477, %v592
        %v702 = vmul.f32 %v478, %v597
        %v703 = vmul.f32 %v479, %v602
        %v704 = vmul.f32 %v480, %v607
        %v705 = vmul.f32 %v481, %v612
        %v706 = vmul.f32 %v482, %v617
        %v707 = vmul.f32 %v483, %v622
        %v708 = vmul.f32 %v484, %v627
        %v709 = vmul.f32 %v485, %v632
        %v710 = vmul.f32 %v486, %v637
        %v711 = vmul.f32 %v487, %v642
        %v712 = vmul.f32 %v488, %v647
        %v713 = vmul.f32 %v489, %v652
        %v714 = vmul.f32 %v490, %v657
        %v715 = vmul.f32 %v491, %v662
        %v716 = vmul.f32 %v492, %v667
        %v717 = vmul.f32 %v493, %v672
        %v718 = vmul.f32 %v494, %v677
        %v719 = vmul.f32 %v495, %v682
        %v720 = vmul.f32 %v496, %v687
        %v721 = vld [vmem:[%s2] sm:$0xff]
        %v722 = vld [vmem:[%s2 + $0x8] sm:$0xff]
        %v723 = vld [vmem:[%s2 + $0x10] sm:$0xff]
        %v724 = vld [vmem:[%s2 + $0x18] sm:$0xff]
        %v725 = vld [vmem:[%s2 + $0x20] sm:$0xff]
        %v726 = vld [vmem:[%s2 + $0x28] sm:$0xff]
        %v727 = vld [vmem:[%s2 + $0x30] sm:$0xff]
        %v728 = vld [vmem:[%s2 + $0x38] sm:$0xff]
        %v729 = vld [vmem:[%s2 + $0x40] sm:$0xff]
        %v730 = vld [vmem:[%s2 + $0x48] sm:$0xff]
        %v731 = vld [vmem:[%s2 + $0x50] sm:$0xff]
        %v732 = vld [vmem:[%s2 + $0x58] sm:$0xff]
        %v733 = vld [vmem:[%s2 + $0x60] sm:$0xff]
        %v734 = vld [vmem:[%s2 + $0x68] sm:$0xff]
        %v735 = vld [vmem:[%s2 + $0x70] sm:$0xff]
        %v736 = vld [vmem:[%s2 + $0x78] sm:$0xff]
        %v737 = vld [vmem:[%s2 + $0x80] sm:$0xff]
        %v738 = vld [vmem:[%s2 + $0x88] sm:$0xff]
        %v739 = vld [vmem:[%s2 + $0x90] sm:$0xff]
        %v740 = vld [vmem:[%s2 + $0x98] sm:$0xff]
        %v741 = vld [vmem:[%s2 + $0xa0] sm:$0xff]
        %v742 = vld [vmem:[%s2 + $0xa8] sm:$0xff]
        %v743 = vld [vmem:[%s2 + $0xb0] sm:$0xff]
        %v744 = vld [vmem:[%s2 + $0xb8] sm:$0xff]
        %v745 = vld [vmem:[%s2 + $0xc0] sm:$0xff]
        %v746 = vld [vmem:[%s2 + $0xc8] sm:$0xff]
        %v747 = vld [vmem:[%s2 + $0xd0] sm:$0xff]
        %v748 = vld [vmem:[%s2 + $0xd8] sm:$0xff]
        %v749 = vld [vmem:[%s2 + $0xe0] sm:$0xff]
        %v750 = vld [vmem:[%s2 + $0xe8] sm:$0xff]
        %v751 = vld [vmem:[%s2 + $0xf0] sm:$0xff]
        %v752 = vld [vmem:[%s2 + $0xf8] sm:$0xff]
        %754 = vset.pattern.permute.xlu0 0
        %755 = vperm.xlu0 %754, %v721
        %v756 = vpop.permute.xlu0 %755
        %759 = vset.pattern.permute.xlu0 0
        %760 = vperm.xlu0 %759, %v722
        %v761 = vpop.permute.xlu0 %760
        %764 = vset.pattern.permute.xlu0 0
        %765 = vperm.xlu0 %764, %v723
        %v766 = vpop.permute.xlu0 %765
        %769 = vset.pattern.permute.xlu0 0
        %770 = vperm.xlu0 %769, %v724
        %v771 = vpop.permute.xlu0 %770
        %774 = vset.pattern.permute.xlu0 0
        %775 = vperm.xlu0 %774, %v725
        %v776 = vpop.permute.xlu0 %775
        %779 = vset.pattern.permute.xlu0 0
        %780 = vperm.xlu0 %779, %v726
        %v781 = vpop.permute.xlu0 %780
        %784 = vset.pattern.permute.xlu0 0
        %785 = vperm.xlu0 %784, %v727
        %v786 = vpop.permute.xlu0 %785
        %789 = vset.pattern.permute.xlu0 0
        %790 = vperm.xlu0 %789, %v728
        %v791 = vpop.permute.xlu0 %790
        %794 = vset.pattern.permute.xlu0 0
        %795 = vperm.xlu0 %794, %v729
        %v796 = vpop.permute.xlu0 %795
        %799 = vset.pattern.permute.xlu0 0
        %800 = vperm.xlu0 %799, %v730
        %v801 = vpop.permute.xlu0 %800
        %804 = vset.pattern.permute.xlu0 0
        %805 = vperm.xlu0 %804, %v731
        %v806 = vpop.permute.xlu0 %805
        %809 = vset.pattern.permute.xlu0 0
        %810 = vperm.xlu0 %809, %v732
        %v811 = vpop.permute.xlu0 %810
        %814 = vset.pattern.permute.xlu0 0
        %815 = vperm.xlu0 %814, %v733
        %v816 = vpop.permute.xlu0 %815
        %819 = vset.pattern.permute.xlu0 0
        %820 = vperm.xlu0 %819, %v734
        %v821 = vpop.permute.xlu0 %820
        %824 = vset.pattern.permute.xlu0 0
        %825 = vperm.xlu0 %824, %v735
        %v826 = vpop.permute.xlu0 %825
        %829 = vset.pattern.permute.xlu0 0
        %830 = vperm.xlu0 %829, %v736
        %v831 = vpop.permute.xlu0 %830
        %834 = vset.pattern.permute.xlu0 0
        %835 = vperm.xlu0 %834, %v737
        %v836 = vpop.permute.xlu0 %835
        %839 = vset.pattern.permute.xlu0 0
        %840 = vperm.xlu0 %839, %v738
        %v841 = vpop.permute.xlu0 %840
        %844 = vset.pattern.permute.xlu0 0
        %845 = vperm.xlu0 %844, %v739
        %v846 = vpop.permute.xlu0 %845
        %849 = vset.pattern.permute.xlu0 0
        %850 = vperm.xlu0 %849, %v740
        %v851 = vpop.permute.xlu0 %850
        %854 = vset.pattern.permute.xlu0 0
        %855 = vperm.xlu0 %854, %v741
        %v856 = vpop.permute.xlu0 %855
        %859 = vset.pattern.permute.xlu0 0
        %860 = vperm.xlu0 %859, %v742
        %v861 = vpop.permute.xlu0 %860
        %864 = vset.pattern.permute.xlu0 0
        %865 = vperm.xlu0 %864, %v743
        %v866 = vpop.permute.xlu0 %865
        %869 = vset.pattern.permute.xlu0 0
        %870 = vperm.xlu0 %869, %v744
        %v871 = vpop.permute.xlu0 %870
        %874 = vset.pattern.permute.xlu0 0
        %875 = vperm.xlu0 %874, %v745
        %v876 = vpop.permute.xlu0 %875
        %879 = vset.pattern.permute.xlu0 0
        %880 = vperm.xlu0 %879, %v746
        %v881 = vpop.permute.xlu0 %880
        %884 = vset.pattern.permute.xlu0 0
        %885 = vperm.xlu0 %884, %v747
        %v886 = vpop.permute.xlu0 %885
        %889 = vset.pattern.permute.xlu0 0
        %890 = vperm.xlu0 %889, %v748
        %v891 = vpop.permute.xlu0 %890
        %894 = vset.pattern.permute.xlu0 0
        %895 = vperm.xlu0 %894, %v749
        %v896 = vpop.permute.xlu0 %895
        %899 = vset.pattern.permute.xlu0 0
        %900 = vperm.xlu0 %899, %v750
        %v901 = vpop.permute.xlu0 %900
        %904 = vset.pattern.permute.xlu0 0
        %905 = vperm.xlu0 %904, %v751
        %v906 = vpop.permute.xlu0 %905
        %909 = vset.pattern.permute.xlu0 0
        %910 = vperm.xlu0 %909, %v752
        %v911 = vpop.permute.xlu0 %910
        %v913 = vmul.f32 %v465, %v756
        %v914 = vmul.f32 %v466, %v761
        %v915 = vmul.f32 %v467, %v766
        %v916 = vmul.f32 %v468, %v771
        %v917 = vmul.f32 %v469, %v776
        %v918 = vmul.f32 %v470, %v781
        %v919 = vmul.f32 %v471, %v786
        %v920 = vmul.f32 %v472, %v791
        %v921 = vmul.f32 %v473, %v796
        %v922 = vmul.f32 %v474, %v801
        %v923 = vmul.f32 %v475, %v806
        %v924 = vmul.f32 %v476, %v811
        %v925 = vmul.f32 %v477, %v816
        %v926 = vmul.f32 %v478, %v821
        %v927 = vmul.f32 %v479, %v826
        %v928 = vmul.f32 %v480, %v831
        %v929 = vmul.f32 %v481, %v836
        %v930 = vmul.f32 %v482, %v841
        %v931 = vmul.f32 %v483, %v846
        %v932 = vmul.f32 %v484, %v851
        %v933 = vmul.f32 %v485, %v856
        %v934 = vmul.f32 %v486, %v861
        %v935 = vmul.f32 %v487, %v866
        %v936 = vmul.f32 %v488, %v871
        %v937 = vmul.f32 %v489, %v876
        %v938 = vmul.f32 %v490, %v881
        %v939 = vmul.f32 %v491, %v886
        %v940 = vmul.f32 %v492, %v891
        %v941 = vmul.f32 %v493, %v896
        %v942 = vmul.f32 %v494, %v901
        %v943 = vmul.f32 %v495, %v906
        %v944 = vmul.f32 %v496, %v911
        %vm945 = vcmask 31744
        %946 = vst.msk [vmem:[#allocation2] sm:$0xff] %vm945, 0
        %vm947 = vcmask 24576
        %vm948 = vsmask.f32 256
        %vm949 = vmand %vm947, %vm948
        %v950 = vld [vmem:[#allocation2 + $0x48] sm:$0x1]
        %v951 = vsel %vm949, 0, %v950
        %952 = vst [vmem:[#allocation2 + $0x48] sm:$0x1] %v951
        %v953 = vpack.c.bf16 %v914, %v913
        %v954 = vpack.c.bf16 %v916, %v915
        %v955 = vpack.c.bf16 %v918, %v917
        %v956 = vpack.c.bf16 %v920, %v919
        %v957 = vpack.c.bf16 %v922, %v921
        %v958 = vpack.c.bf16 %v924, %v923
        %v959 = vpack.c.bf16 %v926, %v925
        %v960 = vpack.c.bf16 %v928, %v927
        %v961 = vpack.c.bf16 %v930, %v929
        %v962 = vpack.c.bf16 %v932, %v931
        %v963 = vpack.c.bf16 %v934, %v933
        %v964 = vpack.c.bf16 %v936, %v935
        %v965 = vpack.c.bf16 %v938, %v937
        %v966 = vpack.c.bf16 %v940, %v939
        %v967 = vpack.c.bf16 %v942, %v941
        %v969 = vshrl.u32 %v953, 16
        %v971 = vrot.slane %v969, 7
        %v972 = vshll.u32 %v953, 16
        %v974 = vor.u32 %v971, %v972
        %v976 = vshrl.u32 %v954, 16
        %v978 = vrot.slane %v976, 7
        %v979 = vshll.u32 %v954, 16
        %v981 = vor.u32 %v978, %v979
        %v982 = vsel %vm948, %v971, %v981
        %v984 = vshrl.u32 %v955, 16
        %v986 = vrot.slane %v984, 7
        %v987 = vshll.u32 %v955, 16
        %v989 = vor.u32 %v986, %v987
        %v990 = vsel %vm948, %v978, %v989
        %v992 = vshrl.u32 %v956, 16
        %v994 = vrot.slane %v992, 7
        %v995 = vshll.u32 %v956, 16
        %v997 = vor.u32 %v994, %v995
        %v998 = vsel %vm948, %v986, %v997
        %v1000 = vshrl.u32 %v957, 16
        %v1002 = vrot.slane %v1000, 7
        %v1003 = vshll.u32 %v957, 16
        %v1005 = vor.u32 %v1002, %v1003
        %v1006 = vsel %vm948, %v994, %v1005
        %v1008 = vshrl.u32 %v958, 16
        %v1010 = vrot.slane %v1008, 7
        %v1011 = vshll.u32 %v958, 16
        %v1013 = vor.u32 %v1010, %v1011
        %v1014 = vsel %vm948, %v1002, %v1013
        %v1016 = vshrl.u32 %v959, 16
        %v1018 = vrot.slane %v1016, 7
        %v1019 = vshll.u32 %v959, 16
        %v1021 = vor.u32 %v1018, %v1019
        %v1022 = vsel %vm948, %v1010, %v1021
        %v1024 = vshrl.u32 %v960, 16
        %v1026 = vrot.slane %v1024, 7
        %v1027 = vshll.u32 %v960, 16
        %v1029 = vor.u32 %v1026, %v1027
        %v1030 = vsel %vm948, %v1018, %v1029
        %v1032 = vshrl.u32 %v961, 16
        %v1034 = vrot.slane %v1032, 7
        %v1035 = vshll.u32 %v961, 16
        %v1037 = vor.u32 %v1034, %v1035
        %v1038 = vsel %vm948, %v1026, %v1037
        %v1040 = vshrl.u32 %v962, 16
        %v1042 = vrot.slane %v1040, 7
        %v1043 = vshll.u32 %v962, 16
        %v1045 = vor.u32 %v1042, %v1043
        %v1046 = vsel %vm948, %v1034, %v1045
        %v1048 = vshrl.u32 %v963, 16
        %v1050 = vrot.slane %v1048, 7
        %v1051 = vshll.u32 %v963, 16
        %v1053 = vor.u32 %v1050, %v1051
        %v1054 = vsel %vm948, %v1042, %v1053
        %v1056 = vshrl.u32 %v964, 16
        %v1058 = vrot.slane %v1056, 7
        %v1059 = vshll.u32 %v964, 16
        %v1061 = vor.u32 %v1058, %v1059
        %v1062 = vsel %vm948, %v1050, %v1061
        %v1064 = vshrl.u32 %v965, 16
        %v1066 = vrot.slane %v1064, 7
        %v1067 = vshll.u32 %v965, 16
        %v1069 = vor.u32 %v1066, %v1067
        %v1070 = vsel %vm948, %v1058, %v1069
        %v1072 = vshrl.u32 %v966, 16
        %v1074 = vrot.slane %v1072, 7
        %v1075 = vshll.u32 %v966, 16
        %v1077 = vor.u32 %v1074, %v1075
        %v1078 = vsel %vm948, %v1066, %v1077
        %v1080 = vshrl.u32 %v967, 16
        %v1082 = vrot.slane %v1080, 7
        %v1083 = vshll.u32 %v967, 16
        %v1085 = vor.u32 %v1082, %v1083
        %v1086 = vsel %vm948, %v1074, %v1085
        %vm1102 = vcmask 31744
        %vm1103 = vsmask.f32 7938
        %vm1104 = vmand %vm1102, %vm1103
        %v1105 = vld [vmem:[#allocation2 + $0x48] sm:$0xff]
        %v1106 = vsel %vm1104, %v974, %v1105
        %1107 = vst [vmem:[#allocation2 + $0x48] sm:$0xff] %v1106
        %1108 = vst.msk [vmem:[#allocation2 + $0x90] sm:$0xff] %vm945, %v982
        %1109 = vst.msk [vmem:[#allocation2 + $0xd8] sm:$0xff] %vm945, %v990
        %1110 = vst.msk [vmem:[#allocation2 + $0x120] sm:$0xff] %vm945, %v998
        %1111 = vst.msk [vmem:[#allocation2 + $0x168] sm:$0xff] %vm945, %v1006
        %1112 = vst.msk [vmem:[#allocation2 + $0x1b0] sm:$0xff] %vm945, %v1014
        %1113 = vst.msk [vmem:[#allocation2 + $0x1f8] sm:$0xff] %vm945, %v1022
        %1114 = vst.msk [vmem:[#allocation2 + $0x240] sm:$0xff] %vm945, %v1030
        %1115 = vst.msk [vmem:[#allocation2 + $0x288] sm:$0xff] %vm945, %v1038
        %1116 = vst.msk [vmem:[#allocation2 + $0x2d0] sm:$0xff] %vm945, %v1046
        %1117 = vst.msk [vmem:[#allocation2 + $0x318] sm:$0xff] %vm945, %v1054
        %1118 = vst.msk [vmem:[#allocation2 + $0x360] sm:$0xff] %vm945, %v1062
        %1119 = vst.msk [vmem:[#allocation2 + $0x3a8] sm:$0xff] %vm945, %v1070
        %1120 = vst.msk [vmem:[#allocation2 + $0x3f0] sm:$0xff] %vm945, %v1078
        %1121 = vst.msk [vmem:[#allocation2 + $0x438] sm:$0xff] %vm945, %v1086
        %1122 = vst.msk [vmem:[#allocation2 + $0x8] sm:$0xff] %vm945, 0
        %v1123 = vpack.c.bf16 %v466, %v465
        %v1124 = vpack.c.bf16 %v468, %v467
        %v1125 = vpack.c.bf16 %v470, %v469
        %v1126 = vpack.c.bf16 %v472, %v471
        %v1127 = vpack.c.bf16 %v474, %v473
        %v1128 = vpack.c.bf16 %v476, %v475
        %v1129 = vpack.c.bf16 %v478, %v477
        %v1130 = vpack.c.bf16 %v480, %v479
        %v1131 = vpack.c.bf16 %v482, %v481
        %v1132 = vpack.c.bf16 %v484, %v483
        %v1133 = vpack.c.bf16 %v486, %v485
        %v1134 = vpack.c.bf16 %v488, %v487
        %v1135 = vpack.c.bf16 %v490, %v489
        %v1136 = vpack.c.bf16 %v492, %v491
        %v1137 = vpack.c.bf16 %v494, %v493
        %1138 = vst.msk [vmem:[#allocation2 + $0x50] sm:$0xff] %vm945, %v1123
        %1139 = vst.msk [vmem:[#allocation2 + $0x98] sm:$0xff] %vm945, %v1124
        %1140 = vst.msk [vmem:[#allocation2 + $0xe0] sm:$0xff] %vm945, %v1125
        %1141 = vst.msk [vmem:[#allocation2 + $0x128] sm:$0xff] %vm945, %v1126
        %1142 = vst.msk [vmem:[#allocation2 + $0x170] sm:$0xff] %vm945, %v1127
        %1143 = vst.msk [vmem:[#allocation2 + $0x1b8] sm:$0xff] %vm945, %v1128
        %1144 = vst.msk [vmem:[#allocation2 + $0x200] sm:$0xff] %vm945, %v1129
        %1145 = vst.msk [vmem:[#allocation2 + $0x248] sm:$0xff] %vm945, %v1130
        %1146 = vst.msk [vmem:[#allocation2 + $0x290] sm:$0xff] %vm945, %v1131
        %1147 = vst.msk [vmem:[#allocation2 + $0x2d8] sm:$0xff] %vm945, %v1132
        %1148 = vst.msk [vmem:[#allocation2 + $0x320] sm:$0xff] %vm945, %v1133
        %1149 = vst.msk [vmem:[#allocation2 + $0x368] sm:$0xff] %vm945, %v1134
        %1150 = vst.msk [vmem:[#allocation2 + $0x3b0] sm:$0xff] %vm945, %v1135
        %1151 = vst.msk [vmem:[#allocation2 + $0x3f8] sm:$0xff] %vm945, %v1136
        %1152 = vst.msk [vmem:[#allocation2 + $0x440] sm:$0xff] %vm945, %v1137
        %vm1153 = vsmask.f32 7424
        %vm1154 = vmand %vm1102, %vm1153
        %v1155 = vld [vmem:[#allocation2 + $0x10] sm:$0xff]
        %v1156 = vsel %vm1154, 0, %v1155
        %1157 = vst [vmem:[#allocation2 + $0x10] sm:$0xff] %v1156
        %v1158 = vpack.c.bf16 %v690, %v689
        %v1159 = vpack.c.bf16 %v692, %v691
        %v1160 = vpack.c.bf16 %v694, %v693
        %v1161 = vpack.c.bf16 %v696, %v695
        %v1162 = vpack.c.bf16 %v698, %v697
        %v1163 = vpack.c.bf16 %v700, %v699
        %v1164 = vpack.c.bf16 %v702, %v701
        %v1165 = vpack.c.bf16 %v704, %v703
        %v1166 = vpack.c.bf16 %v706, %v705
        %v1167 = vpack.c.bf16 %v708, %v707
        %v1168 = vpack.c.bf16 %v710, %v709
        %v1169 = vpack.c.bf16 %v712, %v711
        %v1170 = vpack.c.bf16 %v714, %v713
        %v1171 = vpack.c.bf16 %v716, %v715
        %v1172 = vpack.c.bf16 %v718, %v717
        %v1173 = vpack.c.bf16 %v719, %v719
        %v1175 = vshll.u32 %v1158, 16
        %v1177 = vrot.slane %v1175, 1
        %v1178 = vshrl.u32 %v1158, 16
        %v1180 = vor.u32 %v1178, %v1177
        %v1182 = vshll.u32 %v1159, 16
        %v1184 = vrot.slane %v1182, 1
        %v1185 = vsel %vm1153, %v1180, %v1184
        %v1186 = vshrl.u32 %v1159, 16
        %v1188 = vor.u32 %v1186, %v1184
        %v1190 = vshll.u32 %v1160, 16
        %v1192 = vrot.slane %v1190, 1
        %v1193 = vsel %vm1153, %v1188, %v1192
        %v1194 = vshrl.u32 %v1160, 16
        %v1196 = vor.u32 %v1194, %v1192
        %v1198 = vshll.u32 %v1161, 16
        %v1200 = vrot.slane %v1198, 1
        %v1201 = vsel %vm1153, %v1196, %v1200
        %v1202 = vshrl.u32 %v1161, 16
        %v1204 = vor.u32 %v1202, %v1200
        %v1206 = vshll.u32 %v1162, 16
        %v1208 = vrot.slane %v1206, 1
        %v1209 = vsel %vm1153, %v1204, %v1208
        %v1210 = vshrl.u32 %v1162, 16
        %v1212 = vor.u32 %v1210, %v1208
        %v1214 = vshll.u32 %v1163, 16
        %v1216 = vrot.slane %v1214, 1
        %v1217 = vsel %vm1153, %v1212, %v1216
        %v1218 = vshrl.u32 %v1163, 16
        %v1220 = vor.u32 %v1218, %v1216
        %v1222 = vshll.u32 %v1164, 16
        %v1224 = vrot.slane %v1222, 1
        %v1225 = vsel %vm1153, %v1220, %v1224
        %v1226 = vshrl.u32 %v1164, 16
        %v1228 = vor.u32 %v1226, %v1224
        %v1230 = vshll.u32 %v1165, 16
        %v1232 = vrot.slane %v1230, 1
        %v1233 = vsel %vm1153, %v1228, %v1232
        %v1234 = vshrl.u32 %v1165, 16
        %v1236 = vor.u32 %v1234, %v1232
        %v1238 = vshll.u32 %v1166, 16
        %v1240 = vrot.slane %v1238, 1
        %v1241 = vsel %vm1153, %v1236, %v1240
        %v1242 = vshrl.u32 %v1166, 16
        %v1244 = vor.u32 %v1242, %v1240
        %v1246 = vshll.u32 %v1167, 16
        %v1248 = vrot.slane %v1246, 1
        %v1249 = vsel %vm1153, %v1244, %v1248
        %v1250 = vshrl.u32 %v1167, 16
        %v1252 = vor.u32 %v1250, %v1248
        %v1254 = vshll.u32 %v1168, 16
        %v1256 = vrot.slane %v1254, 1
        %v1257 = vsel %vm1153, %v1252, %v1256
        %v1258 = vshrl.u32 %v1168, 16
        %v1260 = vor.u32 %v1258, %v1256
        %v1262 = vshll.u32 %v1169, 16
        %v1264 = vrot.slane %v1262, 1
        %v1265 = vsel %vm1153, %v1260, %v1264
        %v1266 = vshrl.u32 %v1169, 16
        %v1268 = vor.u32 %v1266, %v1264
        %v1270 = vshll.u32 %v1170, 16
        %v1272 = vrot.slane %v1270, 1
        %v1273 = vsel %vm1153, %v1268, %v1272
        %v1274 = vshrl.u32 %v1170, 16
        %v1276 = vor.u32 %v1274, %v1272
        %v1278 = vshll.u32 %v1171, 16
        %v1280 = vrot.slane %v1278, 1
        %v1281 = vsel %vm1153, %v1276, %v1280
        %v1282 = vshrl.u32 %v1171, 16
        %v1284 = vor.u32 %v1282, %v1280
        %v1286 = vshll.u32 %v1172, 16
        %v1288 = vrot.slane %v1286, 1
        %v1289 = vsel %vm1153, %v1284, %v1288
        %v1290 = vshrl.u32 %v1172, 16
        %v1292 = vor.u32 %v1290, %v1288
        %v1294 = vshll.u32 %v1173, 16
        %v1296 = vrot.slane %v1294, 1
        %v1297 = vsel %vm1153, %v1292, %v1296
        %vm1314 = vcmask 31751
        %vm1315 = vsmask.f32 7966
        %vm1316 = vmand %vm1314, %vm1315
        %v1317 = vld [vmem:[#allocation2 + $0x10] sm:$0x80]
        %v1318 = vsel %vm1316, %v1177, %v1317
        %1319 = vst [vmem:[#allocation2 + $0x10] sm:$0x80] %v1318
        %1320 = vst.msk [vmem:[#allocation2 + $0x58] sm:$0xff] %vm945, %v1185
        %1321 = vst.msk [vmem:[#allocation2 + $0xa0] sm:$0xff] %vm945, %v1193
        %1322 = vst.msk [vmem:[#allocation2 + $0xe8] sm:$0xff] %vm945, %v1201
        %1323 = vst.msk [vmem:[#allocation2 + $0x130] sm:$0xff] %vm945, %v1209
        %1324 = vst.msk [vmem:[#allocation2 + $0x178] sm:$0xff] %vm945, %v1217
        %1325 = vst.msk [vmem:[#allocation2 + $0x1c0] sm:$0xff] %vm945, %v1225
        %1326 = vst.msk [vmem:[#allocation2 + $0x208] sm:$0xff] %vm945, %v1233
        %1327 = vst.msk [vmem:[#allocation2 + $0x250] sm:$0xff] %vm945, %v1241
        %1328 = vst.msk [vmem:[#allocation2 + $0x298] sm:$0xff] %vm945, %v1249
        %1329 = vst.msk [vmem:[#allocation2 + $0x2e0] sm:$0xff] %vm945, %v1257
        %1330 = vst.msk [vmem:[#allocation2 + $0x328] sm:$0xff] %vm945, %v1265
        %1331 = vst.msk [vmem:[#allocation2 + $0x370] sm:$0xff] %vm945, %v1273
        %1332 = vst.msk [vmem:[#allocation2 + $0x3b8] sm:$0xff] %vm945, %v1281
        %1333 = vst.msk [vmem:[#allocation2 + $0x400] sm:$0xff] %vm945, %v1289
        %1334 = vst.msk [vmem:[#allocation2 + $0x448] sm:$0xff] %vm945, %v1297
        %v1335 = vld [vmem:[#allocation2 + $0x18] sm:$0x1]
        %v1336 = vsel %vm949, 0, %v1335
        %1337 = vst [vmem:[#allocation2 + $0x18] sm:$0x1] %v1336
        %v1338 = vpack.c.bf16 %v944, %v943
        %v1340 = vshrl.u32 %v1338, 16
        %v1342 = vrot.slane %v1340, 7
        %v1343 = vshll.u32 %v1338, 16
        %v1345 = vor.u32 %v1342, %v1343
        %v1346 = vsel %vm948, %v1082, %v1345
        %v1348 = vld [vmem:[#allocation2 + $0x18] sm:$0xff]
        %v1349 = vsel %vm1104, %v974, %v1348
        %1350 = vst [vmem:[#allocation2 + $0x18] sm:$0xff] %v1349
        %1351 = vst.msk [vmem:[#allocation2 + $0x60] sm:$0xff] %vm945, %v982
        %1352 = vst.msk [vmem:[#allocation2 + $0xa8] sm:$0xff] %vm945, %v990
        %1353 = vst.msk [vmem:[#allocation2 + $0xf0] sm:$0xff] %vm945, %v998
        %1354 = vst.msk [vmem:[#allocation2 + $0x138] sm:$0xff] %vm945, %v1006
        %1355 = vst.msk [vmem:[#allocation2 + $0x180] sm:$0xff] %vm945, %v1014
        %1356 = vst.msk [vmem:[#allocation2 + $0x1c8] sm:$0xff] %vm945, %v1022
        %1357 = vst.msk [vmem:[#allocation2 + $0x210] sm:$0xff] %vm945, %v1030
        %1358 = vst.msk [vmem:[#allocation2 + $0x258] sm:$0xff] %vm945, %v1038
        %1359 = vst.msk [vmem:[#allocation2 + $0x2a0] sm:$0xff] %vm945, %v1046
        %1360 = vst.msk [vmem:[#allocation2 + $0x2e8] sm:$0xff] %vm945, %v1054
        %1361 = vst.msk [vmem:[#allocation2 + $0x330] sm:$0xff] %vm945, %v1062
        %1362 = vst.msk [vmem:[#allocation2 + $0x378] sm:$0xff] %vm945, %v1070
        %1363 = vst.msk [vmem:[#allocation2 + $0x3c0] sm:$0xff] %vm945, %v1078
        %1364 = vst.msk [vmem:[#allocation2 + $0x408] sm:$0xff] %vm945, %v1086
        %1365 = vst.msk [vmem:[#allocation2 + $0x450] sm:$0xff] %vm945, %v1346
        %v1366 = vpack.c.bf16 %v496, %v495
        %1367 = vst.msk [vmem:[#allocation2 + $0x20] sm:$0xff] %vm945, %v1123
        %1368 = vst.msk [vmem:[#allocation2 + $0x68] sm:$0xff] %vm945, %v1124
        %1369 = vst.msk [vmem:[#allocation2 + $0xb0] sm:$0xff] %vm945, %v1125
        %1370 = vst.msk [vmem:[#allocation2 + $0xf8] sm:$0xff] %vm945, %v1126
        %1371 = vst.msk [vmem:[#allocation2 + $0x140] sm:$0xff] %vm945, %v1127
        %1372 = vst.msk [vmem:[#allocation2 + $0x188] sm:$0xff] %vm945, %v1128
        %1373 = vst.msk [vmem:[#allocation2 + $0x1d0] sm:$0xff] %vm945, %v1129
        %1374 = vst.msk [vmem:[#allocation2 + $0x218] sm:$0xff] %vm945, %v1130
        %1375 = vst.msk [vmem:[#allocation2 + $0x260] sm:$0xff] %vm945, %v1131
        %1376 = vst.msk [vmem:[#allocation2 + $0x2a8] sm:$0xff] %vm945, %v1132
        %1377 = vst.msk [vmem:[#allocation2 + $0x2f0] sm:$0xff] %vm945, %v1133
        %1378 = vst.msk [vmem:[#allocation2 + $0x338] sm:$0xff] %vm945, %v1134
        %1379 = vst.msk [vmem:[#allocation2 + $0x380] sm:$0xff] %vm945, %v1135
        %1380 = vst.msk [vmem:[#allocation2 + $0x3c8] sm:$0xff] %vm945, %v1136
        %1381 = vst.msk [vmem:[#allocation2 + $0x410] sm:$0xff] %vm945, %v1137
        %1382 = vst.msk [vmem:[#allocation2 + $0x458] sm:$0xff] %vm945, %v1366
        %v1383 = vld [vmem:[#allocation2 + $0x460] sm:$0x80]
        %v1384 = vsel %vm1316, 0, %v1383
        %1385 = vst [vmem:[#allocation2 + $0x460] sm:$0x80] %v1384
        %v1386 = vpack.c.bf16 %v720, %v719
        %v1388 = vshll.u32 %v1386, 16
        %v1390 = vrot.slane %v1388, 1
        %v1391 = vsel %vm1153, %v1292, %v1390
        %v1392 = vshrl.u32 %v1386, 16
        %v1394 = vor.u32 %v1392, %v1390
        %1397 = vst.msk [vmem:[#allocation2 + $0x28] sm:$0xff] %vm945, %v1185
        %1398 = vst.msk [vmem:[#allocation2 + $0x70] sm:$0xff] %vm945, %v1193
        %1399 = vst.msk [vmem:[#allocation2 + $0xb8] sm:$0xff] %vm945, %v1201
        %1400 = vst.msk [vmem:[#allocation2 + $0x100] sm:$0xff] %vm945, %v1209
        %1401 = vst.msk [vmem:[#allocation2 + $0x148] sm:$0xff] %vm945, %v1217
        %1402 = vst.msk [vmem:[#allocation2 + $0x190] sm:$0xff] %vm945, %v1225
        %1403 = vst.msk [vmem:[#allocation2 + $0x1d8] sm:$0xff] %vm945, %v1233
        %1404 = vst.msk [vmem:[#allocation2 + $0x220] sm:$0xff] %vm945, %v1241
        %1405 = vst.msk [vmem:[#allocation2 + $0x268] sm:$0xff] %vm945, %v1249
        %1406 = vst.msk [vmem:[#allocation2 + $0x2b0] sm:$0xff] %vm945, %v1257
        %1407 = vst.msk [vmem:[#allocation2 + $0x2f8] sm:$0xff] %vm945, %v1265
        %1408 = vst.msk [vmem:[#allocation2 + $0x340] sm:$0xff] %vm945, %v1273
        %1409 = vst.msk [vmem:[#allocation2 + $0x388] sm:$0xff] %vm945, %v1281
        %1410 = vst.msk [vmem:[#allocation2 + $0x3d0] sm:$0xff] %vm945, %v1289
        %1411 = vst.msk [vmem:[#allocation2 + $0x418] sm:$0xff] %vm945, %v1391
        %v1412 = vld [vmem:[#allocation2 + $0x460] sm:$0xff]
        %v1413 = vsel %vm1154, %v1394, %v1412
        %1414 = vst [vmem:[#allocation2 + $0x460] sm:$0xff] %v1413
        %v1415 = vld [vmem:[#allocation2 + $0x468] sm:$0xff]
        %v1416 = vsel %vm1104, 0, %v1415
        %1417 = vst [vmem:[#allocation2 + $0x468] sm:$0xff] %v1416
        %v1418 = vpack.c.bf16 %v915, %v914
        %v1419 = vpack.c.bf16 %v917, %v916
        %v1420 = vpack.c.bf16 %v919, %v918
        %v1421 = vpack.c.bf16 %v921, %v920
        %v1422 = vpack.c.bf16 %v923, %v922
        %v1423 = vpack.c.bf16 %v925, %v924
        %v1424 = vpack.c.bf16 %v927, %v926
        %v1425 = vpack.c.bf16 %v929, %v928
        %v1426 = vpack.c.bf16 %v931, %v930
        %v1427 = vpack.c.bf16 %v933, %v932
        %v1428 = vpack.c.bf16 %v935, %v934
        %v1429 = vpack.c.bf16 %v937, %v936
        %v1430 = vpack.c.bf16 %v939, %v938
        %v1431 = vpack.c.bf16 %v941, %v940
        %v1432 = vpack.c.bf16 %v943, %v942
        %v1433 = vpack.c.bf16 %v944, %v944
        %vm1434 = vsmask.f32 4352
        %v1436 = vshrl.u32 %v1418, 16
        %v1438 = vrot.slane %v1436, 3
        %v1439 = vshll.u32 %v1418, 16
        %v1441 = vrot.slane %v1439, 4
        %v1442 = vor.u32 %v1438, %v1441
        %v1444 = vshrl.u32 %v1419, 16
        %v1446 = vrot.slane %v1444, 3
        %v1447 = vshll.u32 %v1419, 16
        %v1449 = vrot.slane %v1447, 4
        %v1450 = vor.u32 %v1446, %v1449
        %v1451 = vsel %vm1434, %v1442, %v1450
        %v1453 = vshrl.u32 %v1420, 16
        %v1455 = vrot.slane %v1453, 3
        %v1456 = vshll.u32 %v1420, 16
        %v1458 = vrot.slane %v1456, 4
        %v1459 = vor.u32 %v1455, %v1458
        %v1460 = vsel %vm1434, %v1450, %v1459
        %v1462 = vshrl.u32 %v1421, 16
        %v1464 = vrot.slane %v1462, 3
        %v1465 = vshll.u32 %v1421, 16
        %v1467 = vrot.slane %v1465, 4
        %v1468 = vor.u32 %v1464, %v1467
        %v1469 = vsel %vm1434, %v1459, %v1468
        %v1471 = vshrl.u32 %v1422, 16
        %v1473 = vrot.slane %v1471, 3
        %v1474 = vshll.u32 %v1422, 16
        %v1476 = vrot.slane %v1474, 4
        %v1477 = vor.u32 %v1473, %v1476
        %v1478 = vsel %vm1434, %v1468, %v1477
        %v1480 = vshrl.u32 %v1423, 16
        %v1482 = vrot.slane %v1480, 3
        %v1483 = vshll.u32 %v1423, 16
        %v1485 = vrot.slane %v1483, 4
        %v1486 = vor.u32 %v1482, %v1485
        %v1487 = vsel %vm1434, %v1477, %v1486
        %v1489 = vshrl.u32 %v1424, 16
        %v1491 = vrot.slane %v1489, 3
        %v1492 = vshll.u32 %v1424, 16
        %v1494 = vrot.slane %v1492, 4
        %v1495 = vor.u32 %v1491, %v1494
        %v1496 = vsel %vm1434, %v1486, %v1495
        %v1498 = vshrl.u32 %v1425, 16
        %v1500 = vrot.slane %v1498, 3
        %v1501 = vshll.u32 %v1425, 16
        %v1503 = vrot.slane %v1501, 4
        %v1504 = vor.u32 %v1500, %v1503
        %v1505 = vsel %vm1434, %v1495, %v1504
        %v1507 = vshrl.u32 %v1426, 16
        %v1509 = vrot.slane %v1507, 3
        %v1510 = vshll.u32 %v1426, 16
        %v1512 = vrot.slane %v1510, 4
        %v1513 = vor.u32 %v1509, %v1512
        %v1514 = vsel %vm1434, %v1504, %v1513
        %v1516 = vshrl.u32 %v1427, 16
        %v1518 = vrot.slane %v1516, 3
        %v1519 = vshll.u32 %v1427, 16
        %v1521 = vrot.slane %v1519, 4
        %v1522 = vor.u32 %v1518, %v1521
        %v1523 = vsel %vm1434, %v1513, %v1522
        %v1525 = vshrl.u32 %v1428, 16
        %v1527 = vrot.slane %v1525, 3
        %v1528 = vshll.u32 %v1428, 16
        %v1530 = vrot.slane %v1528, 4
        %v1531 = vor.u32 %v1527, %v1530
        %v1532 = vsel %vm1434, %v1522, %v1531
        %v1534 = vshrl.u32 %v1429, 16
        %v1536 = vrot.slane %v1534, 3
        %v1537 = vshll.u32 %v1429, 16
        %v1539 = vrot.slane %v1537, 4
        %v1540 = vor.u32 %v1536, %v1539
        %v1541 = vsel %vm1434, %v1531, %v1540
        %v1543 = vshrl.u32 %v1430, 16
        %v1545 = vrot.slane %v1543, 3
        %v1546 = vshll.u32 %v1430, 16
        %v1548 = vrot.slane %v1546, 4
        %v1549 = vor.u32 %v1545, %v1548
        %v1550 = vsel %vm1434, %v1540, %v1549
        %v1552 = vshrl.u32 %v1431, 16
        %v1554 = vrot.slane %v1552, 3
        %v1555 = vshll.u32 %v1431, 16
        %v1557 = vrot.slane %v1555, 4
        %v1558 = vor.u32 %v1554, %v1557
        %v1559 = vsel %vm1434, %v1549, %v1558
        %v1561 = vshrl.u32 %v1432, 16
        %v1563 = vrot.slane %v1561, 3
        %v1564 = vshll.u32 %v1432, 16
        %v1566 = vrot.slane %v1564, 4
        %v1567 = vor.u32 %v1563, %v1566
        %v1568 = vsel %vm1434, %v1558, %v1567
        %v1570 = vshrl.u32 %v1433, 16
        %v1572 = vrot.slane %v1570, 3
        %v1573 = vshll.u32 %v1433, 16
        %v1575 = vrot.slane %v1573, 4
        %v1576 = vor.u32 %v1572, %v1575
        %v1577 = vsel %vm1434, %v1567, %v1576
        %1594 = vst.msk [vmem:[#allocation2 + $0x30] sm:$0xff] %vm945, %v1451
        %1595 = vst.msk [vmem:[#allocation2 + $0x78] sm:$0xff] %vm945, %v1460
        %1596 = vst.msk [vmem:[#allocation2 + $0xc0] sm:$0xff] %vm945, %v1469
        %1597 = vst.msk [vmem:[#allocation2 + $0x108] sm:$0xff] %vm945, %v1478
        %1598 = vst.msk [vmem:[#allocation2 + $0x150] sm:$0xff] %vm945, %v1487
        %1599 = vst.msk [vmem:[#allocation2 + $0x198] sm:$0xff] %vm945, %v1496
        %1600 = vst.msk [vmem:[#allocation2 + $0x1e0] sm:$0xff] %vm945, %v1505
        %1601 = vst.msk [vmem:[#allocation2 + $0x228] sm:$0xff] %vm945, %v1514
        %1602 = vst.msk [vmem:[#allocation2 + $0x270] sm:$0xff] %vm945, %v1523
        %1603 = vst.msk [vmem:[#allocation2 + $0x2b8] sm:$0xff] %vm945, %v1532
        %1604 = vst.msk [vmem:[#allocation2 + $0x300] sm:$0xff] %vm945, %v1541
        %1605 = vst.msk [vmem:[#allocation2 + $0x348] sm:$0xff] %vm945, %v1550
        %1606 = vst.msk [vmem:[#allocation2 + $0x390] sm:$0xff] %vm945, %v1559
        %1607 = vst.msk [vmem:[#allocation2 + $0x3d8] sm:$0xff] %vm945, %v1568
        %1608 = vst.msk [vmem:[#allocation2 + $0x420] sm:$0xff] %vm945, %v1577
        %v1609 = vld [vmem:[#allocation2 + $0x468] sm:$0x1]
        %v1610 = vsel %vm949, %v1572, %v1609
        %1611 = vst [vmem:[#allocation2 + $0x468] sm:$0x1] %v1610
        %1612 = vst.msk [vmem:[#allocation2 + $0x470] sm:$0xff] %vm945, 0
        %1613 = vst.msk [vmem:[#allocation2 + $0x38] sm:$0xff] %vm945, %v1124
        %1614 = vst.msk [vmem:[#allocation2 + $0x80] sm:$0xff] %vm945, %v1125
        %1615 = vst.msk [vmem:[#allocation2 + $0xc8] sm:$0xff] %vm945, %v1126
        %1616 = vst.msk [vmem:[#allocation2 + $0x110] sm:$0xff] %vm945, %v1127
        %1617 = vst.msk [vmem:[#allocation2 + $0x158] sm:$0xff] %vm945, %v1128
        %1618 = vst.msk [vmem:[#allocation2 + $0x1a0] sm:$0xff] %vm945, %v1129
        %1619 = vst.msk [vmem:[#allocation2 + $0x1e8] sm:$0xff] %vm945, %v1130
        %1620 = vst.msk [vmem:[#allocation2 + $0x230] sm:$0xff] %vm945, %v1131
        %1621 = vst.msk [vmem:[#allocation2 + $0x278] sm:$0xff] %vm945, %v1132
        %1622 = vst.msk [vmem:[#allocation2 + $0x2c0] sm:$0xff] %vm945, %v1133
        %1623 = vst.msk [vmem:[#allocation2 + $0x308] sm:$0xff] %vm945, %v1134
        %1624 = vst.msk [vmem:[#allocation2 + $0x350] sm:$0xff] %vm945, %v1135
        %1625 = vst.msk [vmem:[#allocation2 + $0x398] sm:$0xff] %vm945, %v1136
        %1626 = vst.msk [vmem:[#allocation2 + $0x3e0] sm:$0xff] %vm945, %v1137
        %1627 = vst.msk [vmem:[#allocation2 + $0x428] sm:$0xff] %vm945, %v1366
        %v1628 = vld [vmem:[#allocation2 + $0x430] sm:$0x80]
        %v1629 = vsel %vm1316, 0, %v1628
        %1630 = vst [vmem:[#allocation2 + $0x430] sm:$0x80] %v1629
        %1631 = vst.msk [vmem:[#allocation2 + $0x478] sm:$0xff] %vm945, 0
        %1632 = vst.msk [vmem:[#allocation2 + $0x40] sm:$0xff] %vm945, %v1193
        %1633 = vst.msk [vmem:[#allocation2 + $0x88] sm:$0xff] %vm945, %v1201
        %1634 = vst.msk [vmem:[#allocation2 + $0xd0] sm:$0xff] %vm945, %v1209
        %1635 = vst.msk [vmem:[#allocation2 + $0x118] sm:$0xff] %vm945, %v1217
        %1636 = vst.msk [vmem:[#allocation2 + $0x160] sm:$0xff] %vm945, %v1225
        %1637 = vst.msk [vmem:[#allocation2 + $0x1a8] sm:$0xff] %vm945, %v1233
        %1638 = vst.msk [vmem:[#allocation2 + $0x1f0] sm:$0xff] %vm945, %v1241
        %1639 = vst.msk [vmem:[#allocation2 + $0x238] sm:$0xff] %vm945, %v1249
        %1640 = vst.msk [vmem:[#allocation2 + $0x280] sm:$0xff] %vm945, %v1257
        %1641 = vst.msk [vmem:[#allocation2 + $0x2c8] sm:$0xff] %vm945, %v1265
        %1642 = vst.msk [vmem:[#allocation2 + $0x310] sm:$0xff] %vm945, %v1273
        %1643 = vst.msk [vmem:[#allocation2 + $0x358] sm:$0xff] %vm945, %v1281
        %1644 = vst.msk [vmem:[#allocation2 + $0x3a0] sm:$0xff] %vm945, %v1289
        %1645 = vst.msk [vmem:[#allocation2 + $0x3e8] sm:$0xff] %vm945, %v1391
        %v1646 = vld [vmem:[#allocation2 + $0x430] sm:$0xff]
        %v1647 = vsel %vm1154, %v1394, %v1646
        %1648 = vst [vmem:[#allocation2 + $0x430] sm:$0xff] %v1647
        %v1649 = vld [vmem:[#allocation2] sm:$0xff]
        %v1650 = vld [vmem:[#allocation2 + $0x8] sm:$0xff]
        %v1651 = vld [vmem:[#allocation2 + $0x10] sm:$0xff]
        %v1652 = vld [vmem:[#allocation2 + $0x18] sm:$0xff]
        %v1653 = vld [vmem:[#allocation2 + $0x20] sm:$0xff]
        %v1654 = vld [vmem:[#allocation2 + $0x28] sm:$0xff]
        %v1655 = vld [vmem:[#allocation2 + $0x30] sm:$0xff]
        %v1656 = vld [vmem:[#allocation2 + $0x38] sm:$0xff]
        %v1657 = vld [vmem:[#allocation2 + $0x40] sm:$0xff]
        %v1658 = vld [vmem:[#allocation2 + $0x48] sm:$0xff]
        %v1659 = vld [vmem:[#allocation2 + $0x50] sm:$0xff]
        %v1660 = vld [vmem:[#allocation2 + $0x58] sm:$0xff]
        %v1661 = vld [vmem:[#allocation2 + $0x60] sm:$0xff]
        %v1662 = vld [vmem:[#allocation2 + $0x68] sm:$0xff]
        %v1663 = vld [vmem:[#allocation2 + $0x70] sm:$0xff]
        %v1664 = vld [vmem:[#allocation2 + $0x78] sm:$0xff]
        %v1665 = vld [vmem:[#allocation2 + $0x80] sm:$0xff]
        %v1666 = vld [vmem:[#allocation2 + $0x88] sm:$0xff]
        %v1667 = vld [vmem:[#allocation2 + $0x90] sm:$0xff]
        %v1668 = vld [vmem:[#allocation2 + $0x98] sm:$0xff]
        %v1669 = vld [vmem:[#allocation2 + $0xa0] sm:$0xff]
        %v1670 = vld [vmem:[#allocation2 + $0xa8] sm:$0xff]
        %v1671 = vld [vmem:[#allocation2 + $0xb0] sm:$0xff]
        %v1672 = vld [vmem:[#allocation2 + $0xb8] sm:$0xff]
        %v1673 = vld [vmem:[#allocation2 + $0xc0] sm:$0xff]
        %v1674 = vld [vmem:[#allocation2 + $0xc8] sm:$0xff]
        %v1675 = vld [vmem:[#allocation2 + $0xd0] sm:$0xff]
        %v1676 = vld [vmem:[#allocation2 + $0xd8] sm:$0xff]
        %v1677 = vld [vmem:[#allocation2 + $0xe0] sm:$0xff]
        %v1678 = vld [vmem:[#allocation2 + $0xe8] sm:$0xff]
        %v1679 = vld [vmem:[#allocation2 + $0xf0] sm:$0xff]
        %v1680 = vld [vmem:[#allocation2 + $0xf8] sm:$0xff]
        %v1681 = vld [vmem:[#allocation2 + $0x100] sm:$0xff]
        %v1682 = vld [vmem:[#allocation2 + $0x108] sm:$0xff]
        %v1683 = vld [vmem:[#allocation2 + $0x110] sm:$0xff]
        %v1684 = vld [vmem:[#allocation2 + $0x118] sm:$0xff]
        %v1685 = vld [vmem:[#allocation2 + $0x120] sm:$0xff]
        %v1686 = vld [vmem:[#allocation2 + $0x128] sm:$0xff]
        %v1687 = vld [vmem:[#allocation2 + $0x130] sm:$0xff]
        %v1688 = vld [vmem:[#allocation2 + $0x138] sm:$0xff]
        %v1689 = vld [vmem:[#allocation2 + $0x140] sm:$0xff]
        %v1690 = vld [vmem:[#allocation2 + $0x148] sm:$0xff]
        %v1691 = vld [vmem:[#allocation2 + $0x150] sm:$0xff]
        %v1692 = vld [vmem:[#allocation2 + $0x158] sm:$0xff]
        %v1693 = vld [vmem:[#allocation2 + $0x160] sm:$0xff]
        %v1694 = vld [vmem:[#allocation2 + $0x168] sm:$0xff]
        %v1695 = vld [vmem:[#allocation2 + $0x170] sm:$0xff]
        %v1696 = vld [vmem:[#allocation2 + $0x178] sm:$0xff]
        %v1697 = vld [vmem:[#allocation2 + $0x180] sm:$0xff]
        %v1698 = vld [vmem:[#allocation2 + $0x188] sm:$0xff]
        %v1699 = vld [vmem:[#allocation2 + $0x190] sm:$0xff]
        %v1700 = vld [vmem:[#allocation2 + $0x198] sm:$0xff]
        %v1701 = vld [vmem:[#allocation2 + $0x1a0] sm:$0xff]
        %v1702 = vld [vmem:[#allocation2 + $0x1a8] sm:$0xff]
        %v1703 = vld [vmem:[#allocation2 + $0x1b0] sm:$0xff]
        %v1704 = vld [vmem:[#allocation2 + $0x1b8] sm:$0xff]
        %v1705 = vld [vmem:[#allocation2 + $0x1c0] sm:$0xff]
        %v1706 = vld [vmem:[#allocation2 + $0x1c8] sm:$0xff]
        %v1707 = vld [vmem:[#allocation2 + $0x1d0] sm:$0xff]
        %v1708 = vld [vmem:[#allocation2 + $0x1d8] sm:$0xff]
        %v1709 = vld [vmem:[#allocation2 + $0x1e0] sm:$0xff]
        %v1710 = vld [vmem:[#allocation2 + $0x1e8] sm:$0xff]
        %v1711 = vld [vmem:[#allocation2 + $0x1f0] sm:$0xff]
        %v1712 = vld [vmem:[#allocation2 + $0x1f8] sm:$0xff]
        %v1713 = vld [vmem:[#allocation2 + $0x200] sm:$0xff]
        %v1714 = vld [vmem:[#allocation2 + $0x208] sm:$0xff]
        %v1715 = vld [vmem:[#allocation2 + $0x210] sm:$0xff]
        %v1716 = vld [vmem:[#allocation2 + $0x218] sm:$0xff]
        %v1717 = vld [vmem:[#allocation2 + $0x220] sm:$0xff]
        %v1718 = vld [vmem:[#allocation2 + $0x228] sm:$0xff]
        %v1719 = vld [vmem:[#allocation2 + $0x230] sm:$0xff]
        %v1720 = vld [vmem:[#allocation2 + $0x238] sm:$0xff]
        %v1721 = vld [vmem:[#allocation2 + $0x240] sm:$0xff]
        %v1722 = vld [vmem:[#allocation2 + $0x248] sm:$0xff]
        %v1723 = vld [vmem:[#allocation2 + $0x250] sm:$0xff]
        %v1724 = vld [vmem:[#allocation2 + $0x258] sm:$0xff]
        %v1725 = vld [vmem:[#allocation2 + $0x260] sm:$0xff]
        %v1726 = vld [vmem:[#allocation2 + $0x268] sm:$0xff]
        %v1727 = vld [vmem:[#allocation2 + $0x270] sm:$0xff]
        %v1728 = vld [vmem:[#allocation2 + $0x278] sm:$0xff]
        %v1729 = vld [vmem:[#allocation2 + $0x280] sm:$0xff]
        %v1730 = vld [vmem:[#allocation2 + $0x288] sm:$0xff]
        %v1731 = vld [vmem:[#allocation2 + $0x290] sm:$0xff]
        %v1732 = vld [vmem:[#allocation2 + $0x298] sm:$0xff]
        %v1733 = vld [vmem:[#allocation2 + $0x2a0] sm:$0xff]
        %v1734 = vld [vmem:[#allocation2 + $0x2a8] sm:$0xff]
        %v1735 = vld [vmem:[#allocation2 + $0x2b0] sm:$0xff]
        %v1736 = vld [vmem:[#allocation2 + $0x2b8] sm:$0xff]
        %v1737 = vld [vmem:[#allocation2 + $0x2c0] sm:$0xff]
        %v1738 = vld [vmem:[#allocation2 + $0x2c8] sm:$0xff]
        %v1739 = vld [vmem:[#allocation2 + $0x2d0] sm:$0xff]
        %v1740 = vld [vmem:[#allocation2 + $0x2d8] sm:$0xff]
        %v1741 = vld [vmem:[#allocation2 + $0x2e0] sm:$0xff]
        %v1742 = vld [vmem:[#allocation2 + $0x2e8] sm:$0xff]
        %v1743 = vld [vmem:[#allocation2 + $0x2f0] sm:$0xff]
        %v1744 = vld [vmem:[#allocation2 + $0x2f8] sm:$0xff]
        %v1745 = vld [vmem:[#allocation2 + $0x300] sm:$0xff]
        %v1746 = vld [vmem:[#allocation2 + $0x308] sm:$0xff]
        %v1747 = vld [vmem:[#allocation2 + $0x310] sm:$0xff]
        %v1748 = vld [vmem:[#allocation2 + $0x318] sm:$0xff]
        %v1749 = vld [vmem:[#allocation2 + $0x320] sm:$0xff]
        %v1750 = vld [vmem:[#allocation2 + $0x328] sm:$0xff]
        %v1751 = vld [vmem:[#allocation2 + $0x330] sm:$0xff]
        %v1752 = vld [vmem:[#allocation2 + $0x338] sm:$0xff]
        %v1753 = vld [vmem:[#allocation2 + $0x340] sm:$0xff]
        %v1754 = vld [vmem:[#allocation2 + $0x348] sm:$0xff]
        %v1755 = vld [vmem:[#allocation2 + $0x350] sm:$0xff]
        %v1756 = vld [vmem:[#allocation2 + $0x358] sm:$0xff]
        %v1757 = vld [vmem:[#allocation2 + $0x360] sm:$0xff]
        %v1758 = vld [vmem:[#allocation2 + $0x368] sm:$0xff]
        %v1759 = vld [vmem:[#allocation2 + $0x370] sm:$0xff]
        %v1760 = vld [vmem:[#allocation2 + $0x378] sm:$0xff]
        %v1761 = vld [vmem:[#allocation2 + $0x380] sm:$0xff]
        %v1762 = vld [vmem:[#allocation2 + $0x388] sm:$0xff]
        %v1763 = vld [vmem:[#allocation2 + $0x390] sm:$0xff]
        %v1764 = vld [vmem:[#allocation2 + $0x398] sm:$0xff]
        %v1765 = vld [vmem:[#allocation2 + $0x3a0] sm:$0xff]
        %v1766 = vld [vmem:[#allocation2 + $0x3a8] sm:$0xff]
        %v1767 = vld [vmem:[#allocation2 + $0x3b0] sm:$0xff]
        %v1768 = vld [vmem:[#allocation2 + $0x3b8] sm:$0xff]
        %v1769 = vld [vmem:[#allocation2 + $0x3c0] sm:$0xff]
        %v1770 = vld [vmem:[#allocation2 + $0x3c8] sm:$0xff]
        %v1771 = vld [vmem:[#allocation2 + $0x3d0] sm:$0xff]
        %v1772 = vld [vmem:[#allocation2 + $0x3d8] sm:$0xff]
        %v1773 = vld [vmem:[#allocation2 + $0x3e0] sm:$0xff]
        %v1774 = vld [vmem:[#allocation2 + $0x3e8] sm:$0xff]
        %v1775 = vld [vmem:[#allocation2 + $0x3f0] sm:$0xff]
        %v1776 = vld [vmem:[#allocation2 + $0x3f8] sm:$0xff]
        %v1777 = vld [vmem:[#allocation2 + $0x400] sm:$0xff]
        %v1778 = vld [vmem:[#allocation2 + $0x408] sm:$0xff]
        %v1779 = vld [vmem:[#allocation2 + $0x410] sm:$0xff]
        %v1780 = vld [vmem:[#allocation2 + $0x418] sm:$0xff]
        %v1781 = vld [vmem:[#allocation2 + $0x420] sm:$0xff]
        %v1782 = vld [vmem:[#allocation2 + $0x428] sm:$0xff]
        %v1783 = vld [vmem:[#allocation2 + $0x430] sm:$0xff]
        %v1784 = vld [vmem:[#allocation2 + $0x438] sm:$0xff]
        %v1785 = vld [vmem:[#allocation2 + $0x440] sm:$0xff]
        %v1786 = vld [vmem:[#allocation2 + $0x448] sm:$0xff]
        %v1787 = vld [vmem:[#allocation2 + $0x450] sm:$0xff]
        %v1788 = vld [vmem:[#allocation2 + $0x458] sm:$0xff]
        %v1789 = vld [vmem:[#allocation2 + $0x460] sm:$0xff]
        %v1790 = vld [vmem:[#allocation2 + $0x468] sm:$0xff]
        %v1791 = vld [vmem:[#allocation2 + $0x470] sm:$0xff]
        %v1792 = vld [vmem:[#allocation2 + $0x478] sm:$0xff]
        %v1793 = vld [vmem:[%s3] sm:$0xf]
        %v1794 = vld [vmem:[%s3 + $0x4] sm:$0xf]
        %v1795 = vld [vmem:[%s3 + $0x8] sm:$0xf]
        %v1796 = vld [vmem:[%s3 + $0xc] sm:$0xf]
        %v1797 = vld [vmem:[%s3 + $0x10] sm:$0xf]
        %v1798 = vld [vmem:[%s3 + $0x14] sm:$0xf]
        %v1799 = vld [vmem:[%s3 + $0x18] sm:$0xf]
        %v1800 = vld [vmem:[%s3 + $0x1c] sm:$0xf]
        %v1801 = vld [vmem:[%s3 + $0x20] sm:$0xf]
        %v1802 = vld [vmem:[%s3 + $0x24] sm:$0xf]
        %v1803 = vld [vmem:[%s3 + $0x28] sm:$0xf]
        %v1804 = vld [vmem:[%s3 + $0x2c] sm:$0xf]
        %v1805 = vld [vmem:[%s3 + $0x30] sm:$0xf]
        %v1806 = vld [vmem:[%s3 + $0x34] sm:$0xf]
        %v1807 = vld [vmem:[%s3 + $0x38] sm:$0xf]
        %v1808 = vld [vmem:[%s3 + $0x3c] sm:$0xf]
        %v1809 = vld [vmem:[%s3 + $0x40] sm:$0xf]
        %v1810 = vld [vmem:[%s3 + $0x44] sm:$0xf]
        %v1811 = vld [vmem:[%s3 + $0x48] sm:$0xf]
        %v1812 = vld [vmem:[%s3 + $0x4c] sm:$0xf]
        %v1813 = vld [vmem:[%s3 + $0x50] sm:$0xf]
        %v1814 = vld [vmem:[%s3 + $0x54] sm:$0xf]
        %v1815 = vld [vmem:[%s3 + $0x58] sm:$0xf]
        %v1816 = vld [vmem:[%s3 + $0x5c] sm:$0xf]
        %v1817 = vld [vmem:[%s3 + $0x60] sm:$0xf]
        %v1818 = vld [vmem:[%s3 + $0x64] sm:$0xf]
        %v1819 = vld [vmem:[%s3 + $0x68] sm:$0xf]
        %v1820 = vld [vmem:[%s3 + $0x6c] sm:$0xf]
        %v1821 = vld [vmem:[%s3 + $0x70] sm:$0xf]
        %v1822 = vld [vmem:[%s3 + $0x74] sm:$0xf]
        %v1823 = vld [vmem:[%s3 + $0x78] sm:$0xf]
        %v1824 = vld [vmem:[%s3 + $0x7c] sm:$0xf]
        %v1825 = vld [vmem:[%s3 + $0x80] sm:$0xf]
        %v1826 = vld [vmem:[%s3 + $0x84] sm:$0xf]
        %v1827 = vld [vmem:[%s3 + $0x88] sm:$0xf]
        %v1828 = vld [vmem:[%s3 + $0x8c] sm:$0xf]
        %v1829 = vld [vmem:[%s3 + $0x90] sm:$0xf]
        %v1830 = vld [vmem:[%s3 + $0x94] sm:$0xf]
        %v1831 = vld [vmem:[%s3 + $0x98] sm:$0xf]
        %v1832 = vld [vmem:[%s3 + $0x9c] sm:$0xf]
        %v1833 = vld [vmem:[%s3 + $0xa0] sm:$0xf]
        %v1834 = vld [vmem:[%s3 + $0xa4] sm:$0xf]
        %v1835 = vld [vmem:[%s3 + $0xa8] sm:$0xf]
        %v1836 = vld [vmem:[%s3 + $0xac] sm:$0xf]
        %v1837 = vld [vmem:[%s3 + $0xb0] sm:$0xf]
        %v1838 = vld [vmem:[%s3 + $0xb4] sm:$0xf]
        %v1839 = vld [vmem:[%s3 + $0xb8] sm:$0xf]
        %v1840 = vld [vmem:[%s3 + $0xbc] sm:$0xf]
        %v1841 = vld [vmem:[%s3 + $0xc0] sm:$0xf]
        %v1842 = vld [vmem:[%s3 + $0xc4] sm:$0xf]
        %v1843 = vld [vmem:[%s3 + $0xc8] sm:$0xf]
        %v1844 = vld [vmem:[%s3 + $0xcc] sm:$0xf]
        %v1845 = vld [vmem:[%s3 + $0xd0] sm:$0xf]
        %v1846 = vld [vmem:[%s3 + $0xd4] sm:$0xf]
        %v1847 = vld [vmem:[%s3 + $0xd8] sm:$0xf]
        %v1848 = vld [vmem:[%s3 + $0xdc] sm:$0xf]
        %v1849 = vld [vmem:[%s3 + $0xe0] sm:$0xf]
        %v1850 = vld [vmem:[%s3 + $0xe4] sm:$0xf]
        %v1851 = vld [vmem:[%s3 + $0xe8] sm:$0xf]
        %v1852 = vld [vmem:[%s3 + $0xec] sm:$0xf]
        %v1853 = vld [vmem:[%s3 + $0xf0] sm:$0xf]
        %v1854 = vld [vmem:[%s3 + $0xf4] sm:$0xf]
        %v1855 = vld [vmem:[%s3 + $0xf8] sm:$0xf]
        %v1856 = vld [vmem:[%s3 + $0xfc] sm:$0xf]
        %v1857 = vld [vmem:[%s3 + $0x100] sm:$0xf]
        %v1858 = vld [vmem:[%s3 + $0x104] sm:$0xf]
        %v1859 = vld [vmem:[%s3 + $0x108] sm:$0xf]
        %v1860 = vld [vmem:[%s3 + $0x10c] sm:$0xf]
        %v1861 = vld [vmem:[%s3 + $0x110] sm:$0xf]
        %v1862 = vld [vmem:[%s3 + $0x114] sm:$0xf]
        %v1863 = vld [vmem:[%s3 + $0x118] sm:$0xf]
        %v1864 = vld [vmem:[%s3 + $0x11c] sm:$0xf]
        %v1865 = vld [vmem:[%s3 + $0x120] sm:$0xf]
        %v1866 = vld [vmem:[%s3 + $0x124] sm:$0xf]
        %v1867 = vld [vmem:[%s3 + $0x128] sm:$0xf]
        %v1868 = vld [vmem:[%s3 + $0x12c] sm:$0xf]
        %v1869 = vld [vmem:[%s3 + $0x130] sm:$0xf]
        %v1870 = vld [vmem:[%s3 + $0x134] sm:$0xf]
        %v1871 = vld [vmem:[%s3 + $0x138] sm:$0xf]
        %v1872 = vld [vmem:[%s3 + $0x13c] sm:$0xf]
        %v1873 = vld [vmem:[%s3 + $0x140] sm:$0xf]
        %v1874 = vld [vmem:[%s3 + $0x144] sm:$0xf]
        %v1875 = vld [vmem:[%s3 + $0x148] sm:$0xf]
        %v1876 = vld [vmem:[%s3 + $0x14c] sm:$0xf]
        %v1877 = vld [vmem:[%s3 + $0x150] sm:$0xf]
        %v1878 = vld [vmem:[%s3 + $0x154] sm:$0xf]
        %v1879 = vld [vmem:[%s3 + $0x158] sm:$0xf]
        %v1880 = vld [vmem:[%s3 + $0x15c] sm:$0xf]
        %v1881 = vld [vmem:[%s3 + $0x160] sm:$0xf]
        %v1882 = vld [vmem:[%s3 + $0x164] sm:$0xf]
        %v1883 = vld [vmem:[%s3 + $0x168] sm:$0xf]
        %v1884 = vld [vmem:[%s3 + $0x16c] sm:$0xf]
        %v1885 = vld [vmem:[%s3 + $0x170] sm:$0xf]
        %v1886 = vld [vmem:[%s3 + $0x174] sm:$0xf]
        %v1887 = vld [vmem:[%s3 + $0x178] sm:$0xf]
        %v1888 = vld [vmem:[%s3 + $0x17c] sm:$0xf]
        %v1889 = vld [vmem:[%s3 + $0x180] sm:$0xf]
        %v1890 = vld [vmem:[%s3 + $0x184] sm:$0xf]
        %v1891 = vld [vmem:[%s3 + $0x188] sm:$0xf]
        %v1892 = vld [vmem:[%s3 + $0x18c] sm:$0xf]
        %v1893 = vld [vmem:[%s3 + $0x190] sm:$0xf]
        %v1894 = vld [vmem:[%s3 + $0x194] sm:$0xf]
        %v1895 = vld [vmem:[%s3 + $0x198] sm:$0xf]
        %v1896 = vld [vmem:[%s3 + $0x19c] sm:$0xf]
        %v1897 = vld [vmem:[%s3 + $0x1a0] sm:$0xf]
        %v1898 = vld [vmem:[%s3 + $0x1a4] sm:$0xf]
        %v1899 = vld [vmem:[%s3 + $0x1a8] sm:$0xf]
        %v1900 = vld [vmem:[%s3 + $0x1ac] sm:$0xf]
        %v1901 = vld [vmem:[%s3 + $0x1b0] sm:$0xf]
        %v1902 = vld [vmem:[%s3 + $0x1b4] sm:$0xf]
        %v1903 = vld [vmem:[%s3 + $0x1b8] sm:$0xf]
        %v1904 = vld [vmem:[%s3 + $0x1bc] sm:$0xf]
        %v1905 = vld [vmem:[%s3 + $0x1c0] sm:$0xf]
        %v1906 = vld [vmem:[%s3 + $0x1c4] sm:$0xf]
        %v1907 = vld [vmem:[%s3 + $0x1c8] sm:$0xf]
        %v1908 = vld [vmem:[%s3 + $0x1cc] sm:$0xf]
        %v1909 = vld [vmem:[%s3 + $0x1d0] sm:$0xf]
        %v1910 = vld [vmem:[%s3 + $0x1d4] sm:$0xf]
        %v1911 = vld [vmem:[%s3 + $0x1d8] sm:$0xf]
        %v1912 = vld [vmem:[%s3 + $0x1dc] sm:$0xf]
        %v1913 = vld [vmem:[%s3 + $0x1e0] sm:$0xf]
        %v1914 = vld [vmem:[%s3 + $0x1e4] sm:$0xf]
        %v1915 = vld [vmem:[%s3 + $0x1e8] sm:$0xf]
        %v1916 = vld [vmem:[%s3 + $0x1ec] sm:$0xf]
        %v1917 = vld [vmem:[%s3 + $0x1f0] sm:$0xf]
        %v1918 = vld [vmem:[%s3 + $0x1f4] sm:$0xf]
        %v1919 = vld [vmem:[%s3 + $0x1f8] sm:$0xf]
        %v1920 = vld [vmem:[%s3 + $0x1fc] sm:$0xf]
        %v1921 = vld [vmem:[%s3 + $0x200] sm:$0xf]
        %v1922 = vld [vmem:[%s3 + $0x204] sm:$0xf]
        %v1923 = vld [vmem:[%s3 + $0x208] sm:$0xf]
        %v1924 = vld [vmem:[%s3 + $0x20c] sm:$0xf]
        %v1925 = vld [vmem:[%s3 + $0x210] sm:$0xf]
        %v1926 = vld [vmem:[%s3 + $0x214] sm:$0xf]
        %v1927 = vld [vmem:[%s3 + $0x218] sm:$0xf]
        %v1928 = vld [vmem:[%s3 + $0x21c] sm:$0xf]
        %v1929 = vld [vmem:[%s3 + $0x220] sm:$0xf]
        %v1930 = vld [vmem:[%s3 + $0x224] sm:$0xf]
        %v1931 = vld [vmem:[%s3 + $0x228] sm:$0xf]
        %v1932 = vld [vmem:[%s3 + $0x22c] sm:$0xf]
        %v1933 = vld [vmem:[%s3 + $0x230] sm:$0xf]
        %v1934 = vld [vmem:[%s3 + $0x234] sm:$0xf]
        %v1935 = vld [vmem:[%s3 + $0x238] sm:$0xf]
        %v1936 = vld [vmem:[%s3 + $0x23c] sm:$0xf]
        %v2081 = vunpack.c.l.b16 %v1793
        %v2082 = vunpack.c.l.b16 %v1794
        %v2083 = vunpack.c.l.b16 %v1795
        %v2084 = vunpack.c.l.b16 %v1796
        %v2085 = vunpack.c.l.b16 %v1797
        %v2086 = vunpack.c.l.b16 %v1798
        %v2087 = vunpack.c.l.b16 %v1799
        %v2088 = vunpack.c.l.b16 %v1800
        %v2089 = vunpack.c.l.b16 %v1801
        %v2090 = vunpack.c.l.b16 %v1802
        %v2091 = vunpack.c.l.b16 %v1803
        %v2092 = vunpack.c.l.b16 %v1804
        %v2093 = vunpack.c.l.b16 %v1805
        %v2094 = vunpack.c.l.b16 %v1806
        %v2095 = vunpack.c.l.b16 %v1807
        %v2096 = vunpack.c.l.b16 %v1808
        %v2097 = vunpack.c.l.b16 %v1809
        %v2098 = vunpack.c.l.b16 %v1810
        %v2099 = vunpack.c.l.b16 %v1811
        %v2100 = vunpack.c.l.b16 %v1812
        %v2101 = vunpack.c.l.b16 %v1813
        %v2102 = vunpack.c.l.b16 %v1814
        %v2103 = vunpack.c.l.b16 %v1815
        %v2104 = vunpack.c.l.b16 %v1816
        %v2105 = vunpack.c.l.b16 %v1817
        %v2106 = vunpack.c.l.b16 %v1818
        %v2107 = vunpack.c.l.b16 %v1819
        %v2108 = vunpack.c.l.b16 %v1820
        %v2109 = vunpack.c.l.b16 %v1821
        %v2110 = vunpack.c.l.b16 %v1822
        %v2111 = vunpack.c.l.b16 %v1823
        %v2112 = vunpack.c.l.b16 %v1824
        %v2113 = vunpack.c.l.b16 %v1825
        %v2114 = vunpack.c.l.b16 %v1826
        %v2115 = vunpack.c.l.b16 %v1827
        %v2116 = vunpack.c.l.b16 %v1828
        %v2117 = vunpack.c.l.b16 %v1829
        %v2118 = vunpack.c.l.b16 %v1830
        %v2119 = vunpack.c.l.b16 %v1831
        %v2120 = vunpack.c.l.b16 %v1832
        %v2121 = vunpack.c.l.b16 %v1833
        %v2122 = vunpack.c.l.b16 %v1834
        %v2123 = vunpack.c.l.b16 %v1835
        %v2124 = vunpack.c.l.b16 %v1836
        %v2125 = vunpack.c.l.b16 %v1837
        %v2126 = vunpack.c.l.b16 %v1838
        %v2127 = vunpack.c.l.b16 %v1839
        %v2128 = vunpack.c.l.b16 %v1840
        %v2129 = vunpack.c.l.b16 %v1841
        %v2130 = vunpack.c.l.b16 %v1842
        %v2131 = vunpack.c.l.b16 %v1843
        %v2132 = vunpack.c.l.b16 %v1844
        %v2133 = vunpack.c.l.b16 %v1845
        %v2134 = vunpack.c.l.b16 %v1846
        %v2135 = vunpack.c.l.b16 %v1847
        %v2136 = vunpack.c.l.b16 %v1848
        %v2137 = vunpack.c.l.b16 %v1849
        %v2138 = vunpack.c.l.b16 %v1850
        %v2139 = vunpack.c.l.b16 %v1851
        %v2140 = vunpack.c.l.b16 %v1852
        %v2141 = vunpack.c.l.b16 %v1853
        %v2142 = vunpack.c.l.b16 %v1854
        %v2143 = vunpack.c.l.b16 %v1855
        %v2144 = vunpack.c.l.b16 %v1856
        %v2145 = vunpack.c.l.b16 %v1857
        %v2146 = vunpack.c.l.b16 %v1858
        %v2147 = vunpack.c.l.b16 %v1859
        %v2148 = vunpack.c.l.b16 %v1860
        %v2149 = vunpack.c.l.b16 %v1861
        %v2150 = vunpack.c.l.b16 %v1862
        %v2151 = vunpack.c.l.b16 %v1863
        %v2152 = vunpack.c.l.b16 %v1864
        %v2153 = vunpack.c.l.b16 %v1865
        %v2154 = vunpack.c.l.b16 %v1866
        %v2155 = vunpack.c.l.b16 %v1867
        %v2156 = vunpack.c.l.b16 %v1868
        %v2157 = vunpack.c.l.b16 %v1869
        %v2158 = vunpack.c.l.b16 %v1870
        %v2159 = vunpack.c.l.b16 %v1871
        %v2160 = vunpack.c.l.b16 %v1872
        %v2161 = vunpack.c.l.b16 %v1873
        %v2162 = vunpack.c.l.b16 %v1874
        %v2163 = vunpack.c.l.b16 %v1875
        %v2164 = vunpack.c.l.b16 %v1876
        %v2165 = vunpack.c.l.b16 %v1877
        %v2166 = vunpack.c.l.b16 %v1878
        %v2167 = vunpack.c.l.b16 %v1879
        %v2168 = vunpack.c.l.b16 %v1880
        %v2169 = vunpack.c.l.b16 %v1881
        %v2170 = vunpack.c.l.b16 %v1882
        %v2171 = vunpack.c.l.b16 %v1883
        %v2172 = vunpack.c.l.b16 %v1884
        %v2173 = vunpack.c.l.b16 %v1885
        %v2174 = vunpack.c.l.b16 %v1886
        %v2175 = vunpack.c.l.b16 %v1887
        %v2176 = vunpack.c.l.b16 %v1888
        %v2177 = vunpack.c.l.b16 %v1889
        %v2178 = vunpack.c.l.b16 %v1890
        %v2179 = vunpack.c.l.b16 %v1891
        %v2180 = vunpack.c.l.b16 %v1892
        %v2181 = vunpack.c.l.b16 %v1893
        %v2182 = vunpack.c.l.b16 %v1894
        %v2183 = vunpack.c.l.b16 %v1895
        %v2184 = vunpack.c.l.b16 %v1896
        %v2185 = vunpack.c.l.b16 %v1897
        %v2186 = vunpack.c.l.b16 %v1898
        %v2187 = vunpack.c.l.b16 %v1899
        %v2188 = vunpack.c.l.b16 %v1900
        %v2189 = vunpack.c.l.b16 %v1901
        %v2190 = vunpack.c.l.b16 %v1902
        %v2191 = vunpack.c.l.b16 %v1903
        %v2192 = vunpack.c.l.b16 %v1904
        %v2193 = vunpack.c.l.b16 %v1905
        %v2194 = vunpack.c.l.b16 %v1906
        %v2195 = vunpack.c.l.b16 %v1907
        %v2196 = vunpack.c.l.b16 %v1908
        %v2197 = vunpack.c.l.b16 %v1909
        %v2198 = vunpack.c.l.b16 %v1910
        %v2199 = vunpack.c.l.b16 %v1911
        %v2200 = vunpack.c.l.b16 %v1912
        %v2201 = vunpack.c.l.b16 %v1913
        %v2202 = vunpack.c.l.b16 %v1914
        %v2203 = vunpack.c.l.b16 %v1915
        %v2204 = vunpack.c.l.b16 %v1916
        %v2205 = vunpack.c.l.b16 %v1917
        %v2206 = vunpack.c.l.b16 %v1918
        %v2207 = vunpack.c.l.b16 %v1919
        %v2208 = vunpack.c.l.b16 %v1920
        %v2209 = vunpack.c.l.b16 %v1921
        %v2210 = vunpack.c.l.b16 %v1922
        %v2211 = vunpack.c.l.b16 %v1923
        %v2212 = vunpack.c.l.b16 %v1924
        %v2213 = vunpack.c.l.b16 %v1925
        %v2214 = vunpack.c.l.b16 %v1926
        %v2215 = vunpack.c.l.b16 %v1927
        %v2216 = vunpack.c.l.b16 %v1928
        %v2217 = vunpack.c.l.b16 %v1929
        %v2218 = vunpack.c.l.b16 %v1930
        %v2219 = vunpack.c.l.b16 %v1931
        %v2220 = vunpack.c.l.b16 %v1932
        %v2221 = vunpack.c.l.b16 %v1933
        %v2222 = vunpack.c.l.b16 %v1934
        %v2223 = vunpack.c.l.b16 %v1935
        %v2224 = vunpack.c.l.b16 %v1936
        %v2225 = vpack.c.b16 %v2082, %v2081
        %v2226 = vpack.c.b16 %v2084, %v2083
        %v2227 = vpack.c.b16 %v2086, %v2085
        %v2228 = vpack.c.b16 %v2088, %v2087
        %v2229 = vpack.c.b16 %v2090, %v2089
        %v2230 = vpack.c.b16 %v2092, %v2091
        %v2231 = vpack.c.b16 %v2094, %v2093
        %v2232 = vpack.c.b16 %v2096, %v2095
        %v2233 = vpack.c.b16 %v2098, %v2097
        %v2234 = vpack.c.b16 %v2100, %v2099
        %v2235 = vpack.c.b16 %v2102, %v2101
        %v2236 = vpack.c.b16 %v2104, %v2103
        %v2237 = vpack.c.b16 %v2106, %v2105
        %v2238 = vpack.c.b16 %v2108, %v2107
        %v2239 = vpack.c.b16 %v2110, %v2109
        %v2240 = vpack.c.b16 %v2112, %v2111
        %v2241 = vpack.c.b16 %v2114, %v2113
        %v2242 = vpack.c.b16 %v2116, %v2115
        %v2243 = vpack.c.b16 %v2118, %v2117
        %v2244 = vpack.c.b16 %v2120, %v2119
        %v2245 = vpack.c.b16 %v2122, %v2121
        %v2246 = vpack.c.b16 %v2124, %v2123
        %v2247 = vpack.c.b16 %v2126, %v2125
        %v2248 = vpack.c.b16 %v2128, %v2127
        %v2249 = vpack.c.b16 %v2130, %v2129
        %v2250 = vpack.c.b16 %v2132, %v2131
        %v2251 = vpack.c.b16 %v2134, %v2133
        %v2252 = vpack.c.b16 %v2136, %v2135
        %v2253 = vpack.c.b16 %v2138, %v2137
        %v2254 = vpack.c.b16 %v2140, %v2139
        %v2255 = vpack.c.b16 %v2142, %v2141
        %v2256 = vpack.c.b16 %v2144, %v2143
        %v2257 = vpack.c.b16 %v2146, %v2145
        %v2258 = vpack.c.b16 %v2148, %v2147
        %v2259 = vpack.c.b16 %v2150, %v2149
        %v2260 = vpack.c.b16 %v2152, %v2151
        %v2261 = vpack.c.b16 %v2154, %v2153
        %v2262 = vpack.c.b16 %v2156, %v2155
        %v2263 = vpack.c.b16 %v2158, %v2157
        %v2264 = vpack.c.b16 %v2160, %v2159
        %v2265 = vpack.c.b16 %v2162, %v2161
        %v2266 = vpack.c.b16 %v2164, %v2163
        %v2267 = vpack.c.b16 %v2166, %v2165
        %v2268 = vpack.c.b16 %v2168, %v2167
        %v2269 = vpack.c.b16 %v2170, %v2169
        %v2270 = vpack.c.b16 %v2172, %v2171
        %v2271 = vpack.c.b16 %v2174, %v2173
        %v2272 = vpack.c.b16 %v2176, %v2175
        %v2273 = vpack.c.b16 %v2178, %v2177
        %v2274 = vpack.c.b16 %v2180, %v2179
        %v2275 = vpack.c.b16 %v2182, %v2181
        %v2276 = vpack.c.b16 %v2184, %v2183
        %v2277 = vpack.c.b16 %v2186, %v2185
        %v2278 = vpack.c.b16 %v2188, %v2187
        %v2279 = vpack.c.b16 %v2190, %v2189
        %v2280 = vpack.c.b16 %v2192, %v2191
        %v2281 = vpack.c.b16 %v2194, %v2193
        %v2282 = vpack.c.b16 %v2196, %v2195
        %v2283 = vpack.c.b16 %v2198, %v2197
        %v2284 = vpack.c.b16 %v2200, %v2199
        %v2285 = vpack.c.b16 %v2202, %v2201
        %v2286 = vpack.c.b16 %v2204, %v2203
        %v2287 = vpack.c.b16 %v2206, %v2205
        %v2288 = vpack.c.b16 %v2208, %v2207
        %v2289 = vpack.c.b16 %v2210, %v2209
        %v2290 = vpack.c.b16 %v2212, %v2211
        %v2291 = vpack.c.b16 %v2214, %v2213
        %v2292 = vpack.c.b16 %v2216, %v2215
        %v2293 = vpack.c.b16 %v2218, %v2217
        %v2294 = vpack.c.b16 %v2220, %v2219
        %v2295 = vpack.c.b16 %v2222, %v2221
        %v2296 = vpack.c.b16 %v2224, %v2223
        %2369 = vmatprep.subr.bf16.mxu0 0
        %2370 = vmatpush1.bf16.msra.mxu0 %v2225
        %2371 = vmatprep.subr.bf16.mxu0 0
        %2372 = vmatpush1.bf16.msra.mxu0 %v2226
        %2373 = vmatprep.subr.bf16.mxu0 0
        %2374 = vmatpush1.bf16.msra.mxu0 %v2227
        %2375 = vmatprep.subr.bf16.mxu0 0
        %2376 = vmatpush1.bf16.msra.mxu0 %v2228
        %2377 = vmatprep.subr.bf16.mxu0 0
        %2378 = vmatpush1.bf16.msra.mxu0 %v2229
        %2379 = vmatprep.subr.bf16.mxu0 0
        %2380 = vmatpush1.bf16.msra.mxu0 %v2230
        %2381 = vmatprep.subr.bf16.mxu0 0
        %2382 = vmatpush1.bf16.msra.mxu0 %v2231
        %2383 = vmatprep.subr.bf16.mxu0 0
        %2384 = vmatpush1.bf16.msra.mxu0 %v2232
        %2385 = vmatprep.subr.bf16.mxu0 0
        %2386 = vmatpush1.bf16.msra.mxu0 %v2233
        %2387 = vmatprep.subr.bf16.mxu0 0
        %2388 = vmatpush1.bf16.msra.mxu0 %v2234
        %2389 = vmatprep.subr.bf16.mxu0 0
        %2390 = vmatpush1.bf16.msra.mxu0 %v2235
        %2391 = vmatprep.subr.bf16.mxu0 0
        %2392 = vmatpush1.bf16.msra.mxu0 %v2236
        %2393 = vmatprep.subr.bf16.mxu0 0
        %2394 = vmatpush1.bf16.msra.mxu0 %v2237
        %2395 = vmatprep.subr.bf16.mxu0 0
        %2396 = vmatpush1.bf16.msra.mxu0 %v2238
        %2397 = vmatprep.subr.bf16.mxu0 0
        %2398 = vmatpush1.bf16.msra.mxu0 %v2239
        %2399 = vmatprep.subr.bf16.mxu0 0
        %2400 = vmatpush1.bf16.msra.mxu0 %v2240
        %2401 = vmatprep.mubr.bf16.mxu0 %v1650
        %2402 = vmatmul.mubr.bf16.gmra.mrb[0].mxu0 %v1649
        %v2403 = vpop.f32.mrb[0].mxu0
        %v2404 = vadd.f32 0.0, %v2403
        %v2405 = vpop.f32.mrb[0].mxu0
        %v2406 = vpop.f32.mrb[0].mxu0
        %v2407 = vadd.f32 0.0, %v2406
        %v2408 = vpop.f32.mrb[0].mxu0
        %2409 = vmatprep.mubr.bf16.mxu0 %v1659
        %2410 = vmatmul.mubr.bf16.gmra.mrb[0].mxu0 %v1658
        %v2411 = vpop.f32.mrb[0].mxu0
        %v2412 = vadd.f32 0.0, %v2411
        %v2413 = vpop.f32.mrb[0].mxu0
        %v2414 = vpop.f32.mrb[0].mxu0
        %v2415 = vadd.f32 0.0, %v2414
        %v2416 = vpop.f32.mrb[0].mxu0
        %2417 = vmatprep.mubr.bf16.mxu0 %v1668
        %2418 = vmatmul.mubr.bf16.gmra.mrb[0].mxu0 %v1667
        %v2419 = vpop.f32.mrb[0].mxu0
        %v2420 = vadd.f32 0.0, %v2419
        %v2421 = vpop.f32.mrb[0].mxu0
        %v2422 = vpop.f32.mrb[0].mxu0
        %v2423 = vadd.f32 0.0, %v2422
        %v2424 = vpop.f32.mrb[0].mxu0
        %2425 = vmatprep.mubr.bf16.mxu0 %v1677
        %2426 = vmatmul.mubr.bf16.gmra.mrb[0].mxu0 %v1676
        %v2427 = vpop.f32.mrb[0].mxu0
        %v2428 = vadd.f32 0.0, %v2427
        %v2429 = vpop.f32.mrb[0].mxu0
        %v2430 = vpop.f32.mrb[0].mxu0
        %v2431 = vadd.f32 0.0, %v2430
        %v2432 = vpop.f32.mrb[0].mxu0
        %2433 = vmatprep.mubr.bf16.mxu0 %v1686
        %2434 = vmatmul.mubr.bf16.gmra.mrb[0].mxu0 %v1685
        %v2435 = vpop.f32.mrb[0].mxu0
        %v2436 = vadd.f32 0.0, %v2435
        %v2437 = vpop.f32.mrb[0].mxu0
        %v2438 = vpop.f32.mrb[0].mxu0
        %v2439 = vadd.f32 0.0, %v2438
        %v2440 = vpop.f32.mrb[0].mxu0
        %2441 = vmatprep.mubr.bf16.mxu0 %v1695
        %2442 = vmatmul.mubr.bf16.gmra.mrb[0].mxu0 %v1694
        %v2443 = vpop.f32.mrb[0].mxu0
        %v2444 = vadd.f32 0.0, %v2443
        %v2445 = vpop.f32.mrb[0].mxu0
        %v2446 = vpop.f32.mrb[0].mxu0
        %v2447 = vadd.f32 0.0, %v2446
        %v2448 = vpop.f32.mrb[0].mxu0
        %2449 = vmatprep.mubr.bf16.mxu0 %v1704
        %2450 = vmatmul.mubr.bf16.gmra.mrb[0].mxu0 %v1703
        %v2451 = vpop.f32.mrb[0].mxu0
        %v2452 = vadd.f32 0.0, %v2451
        %v2453 = vpop.f32.mrb[0].mxu0
        %v2454 = vpop.f32.mrb[0].mxu0
        %v2455 = vadd.f32 0.0, %v2454
        %v2456 = vpop.f32.mrb[0].mxu0
        %2457 = vmatprep.mubr.bf16.mxu0 %v1713
        %2458 = vmatmul.mubr.bf16.gmra.mrb[0].mxu0 %v1712
        %v2459 = vpop.f32.mrb[0].mxu0
        %v2460 = vadd.f32 0.0, %v2459
        %v2461 = vpop.f32.mrb[0].mxu0
        %v2462 = vpop.f32.mrb[0].mxu0
        %v2463 = vadd.f32 0.0, %v2462
        %v2464 = vpop.f32.mrb[0].mxu0
        %2465 = vmatprep.mubr.bf16.mxu0 %v1722
        %2466 = vmatmul.mubr.bf16.gmra.mrb[0].mxu0 %v1721
        %v2467 = vpop.f32.mrb[0].mxu0
        %v2468 = vadd.f32 0.0, %v2467
        %v2469 = vpop.f32.mrb[0].mxu0
        %v2470 = vpop.f32.mrb[0].mxu0
        %v2471 = vadd.f32 0.0, %v2470
        %v2472 = vpop.f32.mrb[0].mxu0
        %2473 = vmatprep.mubr.bf16.mxu0 %v1731
        %2474 = vmatmul.mubr.bf16.gmra.mrb[0].mxu0 %v1730
        %v2475 = vpop.f32.mrb[0].mxu0
        %v2476 = vadd.f32 0.0, %v2475
        %v2477 = vpop.f32.mrb[0].mxu0
        %v2478 = vpop.f32.mrb[0].mxu0
        %v2479 = vadd.f32 0.0, %v2478
        %v2480 = vpop.f32.mrb[0].mxu0
        %2481 = vmatprep.mubr.bf16.mxu0 %v1740
        %2482 = vmatmul.mubr.bf16.gmra.mrb[0].mxu0 %v1739
        %v2483 = vpop.f32.mrb[0].mxu0
        %v2484 = vadd.f32 0.0, %v2483
        %v2485 = vpop.f32.mrb[0].mxu0
        %v2486 = vpop.f32.mrb[0].mxu0
        %v2487 = vadd.f32 0.0, %v2486
        %v2488 = vpop.f32.mrb[0].mxu0
        %2489 = vmatprep.mubr.bf16.mxu0 %v1749
        %2490 = vmatmul.mubr.bf16.gmra.mrb[0].mxu0 %v1748
        %v2491 = vpop.f32.mrb[0].mxu0
        %v2492 = vadd.f32 0.0, %v2491
        %v2493 = vpop.f32.mrb[0].mxu0
        %v2494 = vpop.f32.mrb[0].mxu0
        %v2495 = vadd.f32 0.0, %v2494
        %v2496 = vpop.f32.mrb[0].mxu0
        %2497 = vmatprep.mubr.bf16.mxu0 %v1758
        %2498 = vmatmul.mubr.bf16.gmra.mrb[0].mxu0 %v1757
        %v2499 = vpop.f32.mrb[0].mxu0
        %v2500 = vadd.f32 0.0, %v2499
        %v2501 = vpop.f32.mrb[0].mxu0
        %v2502 = vpop.f32.mrb[0].mxu0
        %v2503 = vadd.f32 0.0, %v2502
        %v2504 = vpop.f32.mrb[0].mxu0
        %2505 = vmatprep.mubr.bf16.mxu0 %v1767
        %2506 = vmatmul.mubr.bf16.gmra.mrb[0].mxu0 %v1766
        %v2507 = vpop.f32.mrb[0].mxu0
        %v2508 = vadd.f32 0.0, %v2507
        %v2509 = vpop.f32.mrb[0].mxu0
        %v2510 = vpop.f32.mrb[0].mxu0
        %v2511 = vadd.f32 0.0, %v2510
        %v2512 = vpop.f32.mrb[0].mxu0
        %2513 = vmatprep.mubr.bf16.mxu0 %v1776
        %2514 = vmatmul.mubr.bf16.gmra.mrb[0].mxu0 %v1775
        %v2515 = vpop.f32.mrb[0].mxu0
        %v2516 = vadd.f32 0.0, %v2515
        %v2517 = vpop.f32.mrb[0].mxu0
        %v2518 = vpop.f32.mrb[0].mxu0
        %v2519 = vadd.f32 0.0, %v2518
        %v2520 = vpop.f32.mrb[0].mxu0
        %2521 = vmatprep.mubr.bf16.mxu0 %v1785
        %2522 = vmatmul.mubr.bf16.gmra.mrb[0].mxu0 %v1784
        %v2523 = vpop.f32.mrb[0].mxu0
        %v2524 = vadd.f32 0.0, %v2523
        %v2525 = vpop.f32.mrb[0].mxu0
        %v2526 = vpop.f32.mrb[0].mxu0
        %v2527 = vadd.f32 0.0, %v2526
        %v2528 = vpop.f32.mrb[0].mxu0
        %2529 = vdwg.mxu0
        %2530 = vmatprep.subr.bf16.mxu0 0
        %2531 = vmatpush1.bf16.msra.mxu0 %v2241
        %2532 = vmatprep.subr.bf16.mxu0 0
        %2533 = vmatpush1.bf16.msra.mxu0 %v2242
        %2534 = vmatprep.subr.bf16.mxu0 0
        %2535 = vmatpush1.bf16.msra.mxu0 %v2243
        %2536 = vmatprep.subr.bf16.mxu0 0
        %2537 = vmatpush1.bf16.msra.mxu0 %v2244
        %2538 = vmatprep.subr.bf16.mxu0 0
        %2539 = vmatpush1.bf16.msra.mxu0 %v2245
        %2540 = vmatprep.subr.bf16.mxu0 0
        %2541 = vmatpush1.bf16.msra.mxu0 %v2246
        %2542 = vmatprep.subr.bf16.mxu0 0
        %2543 = vmatpush1.bf16.msra.mxu0 %v2247
        %2544 = vmatprep.subr.bf16.mxu0 0
        %2545 = vmatpush1.bf16.msra.mxu0 %v2248
        %2546 = vmatprep.subr.bf16.mxu0 0
        %2547 = vmatpush1.bf16.msra.mxu0 %v2249
        %2548 = vmatprep.subr.bf16.mxu0 0
        %2549 = vmatpush1.bf16.msra.mxu0 %v2250
        %2550 = vmatprep.subr.bf16.mxu0 0
        %2551 = vmatpush1.bf16.msra.mxu0 %v2251
        %2552 = vmatprep.subr.bf16.mxu0 0
        %2553 = vmatpush1.bf16.msra.mxu0 %v2252
        %2554 = vmatprep.subr.bf16.mxu0 0
        %2555 = vmatpush1.bf16.msra.mxu0 %v2253
        %2556 = vmatprep.subr.bf16.mxu0 0
        %2557 = vmatpush1.bf16.msra.mxu0 %v2254
        %2558 = vmatprep.subr.bf16.mxu0 0
        %2559 = vmatpush1.bf16.msra.mxu0 %v2255
        %2560 = vmatprep.subr.bf16.mxu0 0
        %2561 = vmatpush1.bf16.msra.mxu0 %v2256
        %2562 = vmatprep.mubr.bf16.mxu0 %v1652
        %2563 = vmatmul.mubr.bf16.gmra.mrb[0].mxu0 %v1651
        %v2564 = vpop.f32.mrb[0].mxu0
        %v2565 = vadd.f32 %v2404, %v2564
        %v2566 = vpop.f32.mrb[0].mxu0
        %v2567 = vpop.f32.mrb[0].mxu0
        %v2568 = vadd.f32 %v2407, %v2567
        %v2569 = vpop.f32.mrb[0].mxu0
        %2570 = vmatprep.mubr.bf16.mxu0 %v1661
        %2571 = vmatmul.mubr.bf16.gmra.mrb[0].mxu0 %v1660
        %v2572 = vpop.f32.mrb[0].mxu0
        %v2573 = vadd.f32 %v2412, %v2572
        %v2574 = vpop.f32.mrb[0].mxu0
        %v2575 = vpop.f32.mrb[0].mxu0
        %v2576 = vadd.f32 %v2415, %v2575
        %v2577 = vpop.f32.mrb[0].mxu0
        %2578 = vmatprep.mubr.bf16.mxu0 %v1670
        %2579 = vmatmul.mubr.bf16.gmra.mrb[0].mxu0 %v1669
        %v2580 = vpop.f32.mrb[0].mxu0
        %v2581 = vadd.f32 %v2420, %v2580
        %v2582 = vpop.f32.mrb[0].mxu0
        %v2583 = vpop.f32.mrb[0].mxu0
        %v2584 = vadd.f32 %v2423, %v2583
        %v2585 = vpop.f32.mrb[0].mxu0
        %2586 = vmatprep.mubr.bf16.mxu0 %v1679
        %2587 = vmatmul.mubr.bf16.gmra.mrb[0].mxu0 %v1678
        %v2588 = vpop.f32.mrb[0].mxu0
        %v2589 = vadd.f32 %v2428, %v2588
        %v2590 = vpop.f32.mrb[0].mxu0
        %v2591 = vpop.f32.mrb[0].mxu0
        %v2592 = vadd.f32 %v2431, %v2591
        %v2593 = vpop.f32.mrb[0].mxu0
        %2594 = vmatprep.mubr.bf16.mxu0 %v1688
        %2595 = vmatmul.mubr.bf16.gmra.mrb[0].mxu0 %v1687
        %v2596 = vpop.f32.mrb[0].mxu0
        %v2597 = vadd.f32 %v2436, %v2596
        %v2598 = vpop.f32.mrb[0].mxu0
        %v2599 = vpop.f32.mrb[0].mxu0
        %v2600 = vadd.f32 %v2439, %v2599
        %v2601 = vpop.f32.mrb[0].mxu0
        %2602 = vmatprep.mubr.bf16.mxu0 %v1697
        %2603 = vmatmul.mubr.bf16.gmra.mrb[0].mxu0 %v1696
        %v2604 = vpop.f32.mrb[0].mxu0
        %v2605 = vadd.f32 %v2444, %v2604
        %v2606 = vpop.f32.mrb[0].mxu0
        %v2607 = vpop.f32.mrb[0].mxu0
        %v2608 = vadd.f32 %v2447, %v2607
        %v2609 = vpop.f32.mrb[0].mxu0
        %2610 = vmatprep.mubr.bf16.mxu0 %v1706
        %2611 = vmatmul.mubr.bf16.gmra.mrb[0].mxu0 %v1705
        %v2612 = vpop.f32.mrb[0].mxu0
        %v2613 = vadd.f32 %v2452, %v2612
        %v2614 = vpop.f32.mrb[0].mxu0
        %v2615 = vpop.f32.mrb[0].mxu0
        %v2616 = vadd.f32 %v2455, %v2615
        %v2617 = vpop.f32.mrb[0].mxu0
        %2618 = vmatprep.mubr.bf16.mxu0 %v1715
        %2619 = vmatmul.mubr.bf16.gmra.mrb[0].mxu0 %v1714
        %v2620 = vpop.f32.mrb[0].mxu0
        %v2621 = vadd.f32 %v2460, %v2620
        %v2622 = vpop.f32.mrb[0].mxu0
        %v2623 = vpop.f32.mrb[0].mxu0
        %v2624 = vadd.f32 %v2463, %v2623
        %v2625 = vpop.f32.mrb[0].mxu0
        %2626 = vmatprep.mubr.bf16.mxu0 %v1724
        %2627 = vmatmul.mubr.bf16.gmra.mrb[0].mxu0 %v1723
        %v2628 = vpop.f32.mrb[0].mxu0
        %v2629 = vadd.f32 %v2468, %v2628
        %v2630 = vpop.f32.mrb[0].mxu0
        %v2631 = vpop.f32.mrb[0].mxu0
        %v2632 = vadd.f32 %v2471, %v2631
        %v2633 = vpop.f32.mrb[0].mxu0
        %2634 = vmatprep.mubr.bf16.mxu0 %v1733
        %2635 = vmatmul.mubr.bf16.gmra.mrb[0].mxu0 %v1732
        %v2636 = vpop.f32.mrb[0].mxu0
        %v2637 = vadd.f32 %v2476, %v2636
        %v2638 = vpop.f32.mrb[0].mxu0
        %v2639 = vpop.f32.mrb[0].mxu0
        %v2640 = vadd.f32 %v2479, %v2639
        %v2641 = vpop.f32.mrb[0].mxu0
        %2642 = vmatprep.mubr.bf16.mxu0 %v1742
        %2643 = vmatmul.mubr.bf16.gmra.mrb[0].mxu0 %v1741
        %v2644 = vpop.f32.mrb[0].mxu0
        %v2645 = vadd.f32 %v2484, %v2644
        %v2646 = vpop.f32.mrb[0].mxu0
        %v2647 = vpop.f32.mrb[0].mxu0
        %v2648 = vadd.f32 %v2487, %v2647
        %v2649 = vpop.f32.mrb[0].mxu0
        %2650 = vmatprep.mubr.bf16.mxu0 %v1751
        %2651 = vmatmul.mubr.bf16.gmra.mrb[0].mxu0 %v1750
        %v2652 = vpop.f32.mrb[0].mxu0
        %v2653 = vadd.f32 %v2492, %v2652
        %v2654 = vpop.f32.mrb[0].mxu0
        %v2655 = vpop.f32.mrb[0].mxu0
        %v2656 = vadd.f32 %v2495, %v2655
        %v2657 = vpop.f32.mrb[0].mxu0
        %2658 = vmatprep.mubr.bf16.mxu0 %v1760
        %2659 = vmatmul.mubr.bf16.gmra.mrb[0].mxu0 %v1759
        %v2660 = vpop.f32.mrb[0].mxu0
        %v2661 = vadd.f32 %v2500, %v2660
        %v2662 = vpop.f32.mrb[0].mxu0
        %v2663 = vpop.f32.mrb[0].mxu0
        %v2664 = vadd.f32 %v2503, %v2663
        %v2665 = vpop.f32.mrb[0].mxu0
        %2666 = vmatprep.mubr.bf16.mxu0 %v1769
        %2667 = vmatmul.mubr.bf16.gmra.mrb[0].mxu0 %v1768
        %v2668 = vpop.f32.mrb[0].mxu0
        %v2669 = vadd.f32 %v2508, %v2668
        %v2670 = vpop.f32.mrb[0].mxu0
        %v2671 = vpop.f32.mrb[0].mxu0
        %v2672 = vadd.f32 %v2511, %v2671
        %v2673 = vpop.f32.mrb[0].mxu0
        %2674 = vmatprep.mubr.bf16.mxu0 %v1778
        %2675 = vmatmul.mubr.bf16.gmra.mrb[0].mxu0 %v1777
        %v2676 = vpop.f32.mrb[0].mxu0
        %v2677 = vadd.f32 %v2516, %v2676
        %v2678 = vpop.f32.mrb[0].mxu0
        %v2679 = vpop.f32.mrb[0].mxu0
        %v2680 = vadd.f32 %v2519, %v2679
        %v2681 = vpop.f32.mrb[0].mxu0
        %2682 = vmatprep.mubr.bf16.mxu0 %v1787
        %2683 = vmatmul.mubr.bf16.gmra.mrb[0].mxu0 %v1786
        %v2684 = vpop.f32.mrb[0].mxu0
        %v2685 = vadd.f32 %v2524, %v2684
        %v2686 = vpop.f32.mrb[0].mxu0
        %v2687 = vpop.f32.mrb[0].mxu0
        %v2688 = vadd.f32 %v2527, %v2687
        %v2689 = vpop.f32.mrb[0].mxu0
        %2690 = vdwg.mxu0
        %2691 = vmatprep.subr.bf16.mxu0 0
        %2692 = vmatpush1.bf16.msra.mxu0 %v2257
        %2693 = vmatprep.subr.bf16.mxu0 0
        %2694 = vmatpush1.bf16.msra.mxu0 %v2258
        %2695 = vmatprep.subr.bf16.mxu0 0
        %2696 = vmatpush1.bf16.msra.mxu0 %v2259
        %2697 = vmatprep.subr.bf16.mxu0 0
        %2698 = vmatpush1.bf16.msra.mxu0 %v2260
        %2699 = vmatprep.subr.bf16.mxu0 0
        %2700 = vmatpush1.bf16.msra.mxu0 %v2261
        %2701 = vmatprep.subr.bf16.mxu0 0
        %2702 = vmatpush1.bf16.msra.mxu0 %v2262
        %2703 = vmatprep.subr.bf16.mxu0 0
        %2704 = vmatpush1.bf16.msra.mxu0 %v2263
        %2705 = vmatprep.subr.bf16.mxu0 0
        %2706 = vmatpush1.bf16.msra.mxu0 %v2264
        %2707 = vmatprep.subr.bf16.mxu0 0
        %2708 = vmatpush1.bf16.msra.mxu0 %v2265
        %2709 = vmatprep.subr.bf16.mxu0 0
        %2710 = vmatpush1.bf16.msra.mxu0 %v2266
        %2711 = vmatprep.subr.bf16.mxu0 0
        %2712 = vmatpush1.bf16.msra.mxu0 %v2267
        %2713 = vmatprep.subr.bf16.mxu0 0
        %2714 = vmatpush1.bf16.msra.mxu0 %v2268
        %2715 = vmatprep.subr.bf16.mxu0 0
        %2716 = vmatpush1.bf16.msra.mxu0 %v2269
        %2717 = vmatprep.subr.bf16.mxu0 0
        %2718 = vmatpush1.bf16.msra.mxu0 %v2270
        %2719 = vmatprep.subr.bf16.mxu0 0
        %2720 = vmatpush1.bf16.msra.mxu0 %v2271
        %2721 = vmatprep.subr.bf16.mxu0 0
        %2722 = vmatpush1.bf16.msra.mxu0 %v2272
        %2723 = vmatprep.mubr.bf16.mxu0 %v1654
        %2724 = vmatmul.mubr.bf16.gmra.mrb[0].mxu0 %v1653
        %v2725 = vpop.f32.mrb[0].mxu0
        %v2726 = vadd.f32 %v2565, %v2725
        %v2727 = vpop.f32.mrb[0].mxu0
        %v2728 = vpop.f32.mrb[0].mxu0
        %v2729 = vadd.f32 %v2568, %v2728
        %v2730 = vpop.f32.mrb[0].mxu0
        %2731 = vmatprep.mubr.bf16.mxu0 %v1663
        %2732 = vmatmul.mubr.bf16.gmra.mrb[0].mxu0 %v1662
        %v2733 = vpop.f32.mrb[0].mxu0
        %v2734 = vadd.f32 %v2573, %v2733
        %v2735 = vpop.f32.mrb[0].mxu0
        %v2736 = vpop.f32.mrb[0].mxu0
        %v2737 = vadd.f32 %v2576, %v2736
        %v2738 = vpop.f32.mrb[0].mxu0
        %2739 = vmatprep.mubr.bf16.mxu0 %v1672
        %2740 = vmatmul.mubr.bf16.gmra.mrb[0].mxu0 %v1671
        %v2741 = vpop.f32.mrb[0].mxu0
        %v2742 = vadd.f32 %v2581, %v2741
        %v2743 = vpop.f32.mrb[0].mxu0
        %v2744 = vpop.f32.mrb[0].mxu0
        %v2745 = vadd.f32 %v2584, %v2744
        %v2746 = vpop.f32.mrb[0].mxu0
        %2747 = vmatprep.mubr.bf16.mxu0 %v1681
        %2748 = vmatmul.mubr.bf16.gmra.mrb[0].mxu0 %v1680
        %v2749 = vpop.f32.mrb[0].mxu0
        %v2750 = vadd.f32 %v2589, %v2749
        %v2751 = vpop.f32.mrb[0].mxu0
        %v2752 = vpop.f32.mrb[0].mxu0
        %v2753 = vadd.f32 %v2592, %v2752
        %v2754 = vpop.f32.mrb[0].mxu0
        %2755 = vmatprep.mubr.bf16.mxu0 %v1690
        %2756 = vmatmul.mubr.bf16.gmra.mrb[0].mxu0 %v1689
        %v2757 = vpop.f32.mrb[0].mxu0
        %v2758 = vadd.f32 %v2597, %v2757
        %v2759 = vpop.f32.mrb[0].mxu0
        %v2760 = vpop.f32.mrb[0].mxu0
        %v2761 = vadd.f32 %v2600, %v2760
        %v2762 = vpop.f32.mrb[0].mxu0
        %2763 = vmatprep.mubr.bf16.mxu0 %v1699
        %2764 = vmatmul.mubr.bf16.gmra.mrb[0].mxu0 %v1698
        %v2765 = vpop.f32.mrb[0].mxu0
        %v2766 = vadd.f32 %v2605, %v2765
        %v2767 = vpop.f32.mrb[0].mxu0
        %v2768 = vpop.f32.mrb[0].mxu0
        %v2769 = vadd.f32 %v2608, %v2768
        %v2770 = vpop.f32.mrb[0].mxu0
        %2771 = vmatprep.mubr.bf16.mxu0 %v1708
        %2772 = vmatmul.mubr.bf16.gmra.mrb[0].mxu0 %v1707
        %v2773 = vpop.f32.mrb[0].mxu0
        %v2774 = vadd.f32 %v2613, %v2773
        %v2775 = vpop.f32.mrb[0].mxu0
        %v2776 = vpop.f32.mrb[0].mxu0
        %v2777 = vadd.f32 %v2616, %v2776
        %v2778 = vpop.f32.mrb[0].mxu0
        %2779 = vmatprep.mubr.bf16.mxu0 %v1717
        %2780 = vmatmul.mubr.bf16.gmra.mrb[0].mxu0 %v1716
        %v2781 = vpop.f32.mrb[0].mxu0
        %v2782 = vadd.f32 %v2621, %v2781
        %v2783 = vpop.f32.mrb[0].mxu0
        %v2784 = vpop.f32.mrb[0].mxu0
        %v2785 = vadd.f32 %v2624, %v2784
        %v2786 = vpop.f32.mrb[0].mxu0
        %2787 = vmatprep.mubr.bf16.mxu0 %v1726
        %2788 = vmatmul.mubr.bf16.gmra.mrb[0].mxu0 %v1725
        %v2789 = vpop.f32.mrb[0].mxu0
        %v2790 = vadd.f32 %v2629, %v2789
        %v2791 = vpop.f32.mrb[0].mxu0
        %v2792 = vpop.f32.mrb[0].mxu0
        %v2793 = vadd.f32 %v2632, %v2792
        %v2794 = vpop.f32.mrb[0].mxu0
        %2795 = vmatprep.mubr.bf16.mxu0 %v1735
        %2796 = vmatmul.mubr.bf16.gmra.mrb[0].mxu0 %v1734
        %v2797 = vpop.f32.mrb[0].mxu0
        %v2798 = vadd.f32 %v2637, %v2797
        %v2799 = vpop.f32.mrb[0].mxu0
        %v2800 = vpop.f32.mrb[0].mxu0
        %v2801 = vadd.f32 %v2640, %v2800
        %v2802 = vpop.f32.mrb[0].mxu0
        %2803 = vmatprep.mubr.bf16.mxu0 %v1744
        %2804 = vmatmul.mubr.bf16.gmra.mrb[0].mxu0 %v1743
        %v2805 = vpop.f32.mrb[0].mxu0
        %v2806 = vadd.f32 %v2645, %v2805
        %v2807 = vpop.f32.mrb[0].mxu0
        %v2808 = vpop.f32.mrb[0].mxu0
        %v2809 = vadd.f32 %v2648, %v2808
        %v2810 = vpop.f32.mrb[0].mxu0
        %2811 = vmatprep.mubr.bf16.mxu0 %v1753
        %2812 = vmatmul.mubr.bf16.gmra.mrb[0].mxu0 %v1752
        %v2813 = vpop.f32.mrb[0].mxu0
        %v2814 = vadd.f32 %v2653, %v2813
        %v2815 = vpop.f32.mrb[0].mxu0
        %v2816 = vpop.f32.mrb[0].mxu0
        %v2817 = vadd.f32 %v2656, %v2816
        %v2818 = vpop.f32.mrb[0].mxu0
        %2819 = vmatprep.mubr.bf16.mxu0 %v1762
        %2820 = vmatmul.mubr.bf16.gmra.mrb[0].mxu0 %v1761
        %v2821 = vpop.f32.mrb[0].mxu0
        %v2822 = vadd.f32 %v2661, %v2821
        %v2823 = vpop.f32.mrb[0].mxu0
        %v2824 = vpop.f32.mrb[0].mxu0
        %v2825 = vadd.f32 %v2664, %v2824
        %v2826 = vpop.f32.mrb[0].mxu0
        %2827 = vmatprep.mubr.bf16.mxu0 %v1771
        %2828 = vmatmul.mubr.bf16.gmra.mrb[0].mxu0 %v1770
        %v2829 = vpop.f32.mrb[0].mxu0
        %v2830 = vadd.f32 %v2669, %v2829
        %v2831 = vpop.f32.mrb[0].mxu0
        %v2832 = vpop.f32.mrb[0].mxu0
        %v2833 = vadd.f32 %v2672, %v2832
        %v2834 = vpop.f32.mrb[0].mxu0
        %2835 = vmatprep.mubr.bf16.mxu0 %v1780
        %2836 = vmatmul.mubr.bf16.gmra.mrb[0].mxu0 %v1779
        %v2837 = vpop.f32.mrb[0].mxu0
        %v2838 = vadd.f32 %v2677, %v2837
        %v2839 = vpop.f32.mrb[0].mxu0
        %v2840 = vpop.f32.mrb[0].mxu0
        %v2841 = vadd.f32 %v2680, %v2840
        %v2842 = vpop.f32.mrb[0].mxu0
        %2843 = vmatprep.mubr.bf16.mxu0 %v1789
        %2844 = vmatmul.mubr.bf16.gmra.mrb[0].mxu0 %v1788
        %v2845 = vpop.f32.mrb[0].mxu0
        %v2846 = vadd.f32 %v2685, %v2845
        %v2847 = vpop.f32.mrb[0].mxu0
        %v2848 = vpop.f32.mrb[0].mxu0
        %v2849 = vadd.f32 %v2688, %v2848
        %v2850 = vpop.f32.mrb[0].mxu0
        %2851 = vdwg.mxu0
        %2852 = vmatprep.subr.bf16.mxu0 0
        %2853 = vmatpush1.bf16.msra.mxu0 %v2273
        %2854 = vmatprep.subr.bf16.mxu0 0
        %2855 = vmatpush1.bf16.msra.mxu0 %v2274
        %2856 = vmatprep.subr.bf16.mxu0 0
        %2857 = vmatpush1.bf16.msra.mxu0 %v2275
        %2858 = vmatprep.subr.bf16.mxu0 0
        %2859 = vmatpush1.bf16.msra.mxu0 %v2276
        %2860 = vmatprep.subr.bf16.mxu0 0
        %2861 = vmatpush1.bf16.msra.mxu0 %v2277
        %2862 = vmatprep.subr.bf16.mxu0 0
        %2863 = vmatpush1.bf16.msra.mxu0 %v2278
        %2864 = vmatprep.subr.bf16.mxu0 0
        %2865 = vmatpush1.bf16.msra.mxu0 %v2279
        %2866 = vmatprep.subr.bf16.mxu0 0
        %2867 = vmatpush1.bf16.msra.mxu0 %v2280
        %2868 = vmatprep.subr.bf16.mxu0 0
        %2869 = vmatpush1.bf16.msra.mxu0 %v2281
        %2870 = vmatprep.subr.bf16.mxu0 0
        %2871 = vmatpush1.bf16.msra.mxu0 %v2282
        %2872 = vmatprep.subr.bf16.mxu0 0
        %2873 = vmatpush1.bf16.msra.mxu0 %v2283
        %2874 = vmatprep.subr.bf16.mxu0 0
        %2875 = vmatpush1.bf16.msra.mxu0 %v2284
        %2876 = vmatprep.subr.bf16.mxu0 0
        %2877 = vmatpush1.bf16.msra.mxu0 %v2285
        %2878 = vmatprep.subr.bf16.mxu0 0
        %2879 = vmatpush1.bf16.msra.mxu0 %v2286
        %2880 = vmatprep.subr.bf16.mxu0 0
        %2881 = vmatpush1.bf16.msra.mxu0 %v2287
        %2882 = vmatprep.subr.bf16.mxu0 0
        %2883 = vmatpush1.bf16.msra.mxu0 %v2288
        %2884 = vmatprep.mubr.bf16.mxu0 %v1656
        %2885 = vmatmul.mubr.bf16.gmra.mrb[0].mxu0 %v1655
        %v2886 = vpop.f32.mrb[0].mxu0
        %v2887 = vadd.f32 %v2726, %v2886
        %v2888 = vpop.f32.mrb[0].mxu0
        %v2889 = vpop.f32.mrb[0].mxu0
        %v2890 = vadd.f32 %v2729, %v2889
        %v2891 = vpop.f32.mrb[0].mxu0
        %2892 = vmatprep.mubr.bf16.mxu0 %v1665
        %2893 = vmatmul.mubr.bf16.gmra.mrb[0].mxu0 %v1664
        %v2894 = vpop.f32.mrb[0].mxu0
        %v2895 = vadd.f32 %v2734, %v2894
        %v2896 = vpop.f32.mrb[0].mxu0
        %v2897 = vpop.f32.mrb[0].mxu0
        %v2898 = vadd.f32 %v2737, %v2897
        %v2899 = vpop.f32.mrb[0].mxu0
        %2900 = vmatprep.mubr.bf16.mxu0 %v1674
        %2901 = vmatmul.mubr.bf16.gmra.mrb[0].mxu0 %v1673
        %v2902 = vpop.f32.mrb[0].mxu0
        %v2903 = vadd.f32 %v2742, %v2902
        %v2904 = vpop.f32.mrb[0].mxu0
        %v2905 = vpop.f32.mrb[0].mxu0
        %v2906 = vadd.f32 %v2745, %v2905
        %v2907 = vpop.f32.mrb[0].mxu0
        %2908 = vmatprep.mubr.bf16.mxu0 %v1683
        %2909 = vmatmul.mubr.bf16.gmra.mrb[0].mxu0 %v1682
        %v2910 = vpop.f32.mrb[0].mxu0
        %v2911 = vadd.f32 %v2750, %v2910
        %v2912 = vpop.f32.mrb[0].mxu0
        %v2913 = vpop.f32.mrb[0].mxu0
        %v2914 = vadd.f32 %v2753, %v2913
        %v2915 = vpop.f32.mrb[0].mxu0
        %2916 = vmatprep.mubr.bf16.mxu0 %v1692
        %2917 = vmatmul.mubr.bf16.gmra.mrb[0].mxu0 %v1691
        %v2918 = vpop.f32.mrb[0].mxu0
        %v2919 = vadd.f32 %v2758, %v2918
        %v2920 = vpop.f32.mrb[0].mxu0
        %v2921 = vpop.f32.mrb[0].mxu0
        %v2922 = vadd.f32 %v2761, %v2921
        %v2923 = vpop.f32.mrb[0].mxu0
        %2924 = vmatprep.mubr.bf16.mxu0 %v1701
        %2925 = vmatmul.mubr.bf16.gmra.mrb[0].mxu0 %v1700
        %v2926 = vpop.f32.mrb[0].mxu0
        %v2927 = vadd.f32 %v2766, %v2926
        %v2928 = vpop.f32.mrb[0].mxu0
        %v2929 = vpop.f32.mrb[0].mxu0
        %v2930 = vadd.f32 %v2769, %v2929
        %v2931 = vpop.f32.mrb[0].mxu0
        %2932 = vmatprep.mubr.bf16.mxu0 %v1710
        %2933 = vmatmul.mubr.bf16.gmra.mrb[0].mxu0 %v1709
        %v2934 = vpop.f32.mrb[0].mxu0
        %v2935 = vadd.f32 %v2774, %v2934
        %v2936 = vpop.f32.mrb[0].mxu0
        %v2937 = vpop.f32.mrb[0].mxu0
        %v2938 = vadd.f32 %v2777, %v2937
        %v2939 = vpop.f32.mrb[0].mxu0
        %2940 = vmatprep.mubr.bf16.mxu0 %v1719
        %2941 = vmatmul.mubr.bf16.gmra.mrb[0].mxu0 %v1718
        %v2942 = vpop.f32.mrb[0].mxu0
        %v2943 = vadd.f32 %v2782, %v2942
        %v2944 = vpop.f32.mrb[0].mxu0
        %v2945 = vpop.f32.mrb[0].mxu0
        %v2946 = vadd.f32 %v2785, %v2945
        %v2947 = vpop.f32.mrb[0].mxu0
        %2948 = vmatprep.mubr.bf16.mxu0 %v1728
        %2949 = vmatmul.mubr.bf16.gmra.mrb[0].mxu0 %v1727
        %v2950 = vpop.f32.mrb[0].mxu0
        %v2951 = vadd.f32 %v2790, %v2950
        %v2952 = vpop.f32.mrb[0].mxu0
        %v2953 = vpop.f32.mrb[0].mxu0
        %v2954 = vadd.f32 %v2793, %v2953
        %v2955 = vpop.f32.mrb[0].mxu0
        %2956 = vmatprep.mubr.bf16.mxu0 %v1737
        %2957 = vmatmul.mubr.bf16.gmra.mrb[0].mxu0 %v1736
        %v2958 = vpop.f32.mrb[0].mxu0
        %v2959 = vadd.f32 %v2798, %v2958
        %v2960 = vpop.f32.mrb[0].mxu0
        %v2961 = vpop.f32.mrb[0].mxu0
        %v2962 = vadd.f32 %v2801, %v2961
        %v2963 = vpop.f32.mrb[0].mxu0
        %2964 = vmatprep.mubr.bf16.mxu0 %v1746
        %2965 = vmatmul.mubr.bf16.gmra.mrb[0].mxu0 %v1745
        %v2966 = vpop.f32.mrb[0].mxu0
        %v2967 = vadd.f32 %v2806, %v2966
        %v2968 = vpop.f32.mrb[0].mxu0
        %v2969 = vpop.f32.mrb[0].mxu0
        %v2970 = vadd.f32 %v2809, %v2969
        %v2971 = vpop.f32.mrb[0].mxu0
        %2972 = vmatprep.mubr.bf16.mxu0 %v1755
        %2973 = vmatmul.mubr.bf16.gmra.mrb[0].mxu0 %v1754
        %v2974 = vpop.f32.mrb[0].mxu0
        %v2975 = vadd.f32 %v2814, %v2974
        %v2976 = vpop.f32.mrb[0].mxu0
        %v2977 = vpop.f32.mrb[0].mxu0
        %v2978 = vadd.f32 %v2817, %v2977
        %v2979 = vpop.f32.mrb[0].mxu0
        %2980 = vmatprep.mubr.bf16.mxu0 %v1764
        %2981 = vmatmul.mubr.bf16.gmra.mrb[0].mxu0 %v1763
        %v2982 = vpop.f32.mrb[0].mxu0
        %v2983 = vadd.f32 %v2822, %v2982
        %v2984 = vpop.f32.mrb[0].mxu0
        %v2985 = vpop.f32.mrb[0].mxu0
        %v2986 = vadd.f32 %v2825, %v2985
        %v2987 = vpop.f32.mrb[0].mxu0
        %2988 = vmatprep.mubr.bf16.mxu0 %v1773
        %2989 = vmatmul.mubr.bf16.gmra.mrb[0].mxu0 %v1772
        %v2990 = vpop.f32.mrb[0].mxu0
        %v2991 = vadd.f32 %v2830, %v2990
        %v2992 = vpop.f32.mrb[0].mxu0
        %v2993 = vpop.f32.mrb[0].mxu0
        %v2994 = vadd.f32 %v2833, %v2993
        %v2995 = vpop.f32.mrb[0].mxu0
        %2996 = vmatprep.mubr.bf16.mxu0 %v1782
        %2997 = vmatmul.mubr.bf16.gmra.mrb[0].mxu0 %v1781
        %v2998 = vpop.f32.mrb[0].mxu0
        %v2999 = vadd.f32 %v2838, %v2998
        %v3000 = vpop.f32.mrb[0].mxu0
        %v3001 = vpop.f32.mrb[0].mxu0
        %v3002 = vadd.f32 %v2841, %v3001
        %v3003 = vpop.f32.mrb[0].mxu0
        %3004 = vmatprep.mubr.bf16.mxu0 %v1791
        %3005 = vmatmul.mubr.bf16.gmra.mrb[0].mxu0 %v1790
        %v3006 = vpop.f32.mrb[0].mxu0
        %v3007 = vadd.f32 %v2846, %v3006
        %v3008 = vpop.f32.mrb[0].mxu0
        %v3009 = vpop.f32.mrb[0].mxu0
        %v3010 = vadd.f32 %v2849, %v3009
        %v3011 = vpop.f32.mrb[0].mxu0
        %3012 = vdwg.mxu0
        %3013 = vmatprep.subr.bf16.mxu0 0
        %3014 = vmatpush1.bf16.msra.mxu0 %v2289
        %3015 = vmatprep.subr.bf16.mxu0 0
        %3016 = vmatpush1.bf16.msra.mxu0 %v2290
        %3017 = vmatprep.subr.bf16.mxu0 0
        %3018 = vmatpush1.bf16.msra.mxu0 %v2291
        %3019 = vmatprep.subr.bf16.mxu0 0
        %3020 = vmatpush1.bf16.msra.mxu0 %v2292
        %3021 = vmatprep.subr.bf16.mxu0 0
        %3022 = vmatpush1.bf16.msra.mxu0 %v2293
        %3023 = vmatprep.subr.bf16.mxu0 0
        %3024 = vmatpush1.bf16.msra.mxu0 %v2294
        %3025 = vmatprep.subr.bf16.mxu0 0
        %3026 = vmatpush1.bf16.msra.mxu0 %v2295
        %3027 = vmatprep.subr.bf16.mxu0 0
        %3028 = vmatpush1.bf16.msra.mxu0 %v2296
        %3029 = vmatprep.subr.bf16.mxu0 0
        %3030 = vmatpush1.bf16.msra.mxu0 0
        %3031 = vmatprep.subr.bf16.mxu0 0
        %3032 = vmatpush1.bf16.msra.mxu0 0
        %3033 = vmatprep.subr.bf16.mxu0 0
        %3034 = vmatpush1.bf16.msra.mxu0 0
        %3035 = vmatprep.subr.bf16.mxu0 0
        %3036 = vmatpush1.bf16.msra.mxu0 0
        %3037 = vmatprep.subr.bf16.mxu0 0
        %3038 = vmatpush1.bf16.msra.mxu0 0
        %3039 = vmatprep.subr.bf16.mxu0 0
        %3040 = vmatpush1.bf16.msra.mxu0 0
        %3041 = vmatprep.subr.bf16.mxu0 0
        %3042 = vmatpush1.bf16.msra.mxu0 0
        %3043 = vmatprep.subr.bf16.mxu0 0
        %3044 = vmatpush1.bf16.msra.mxu0 0
        %3045 = vmatprep.mubr.bf16.mxu0 0
        %3046 = vmatmul.mubr.bf16.gmra.mrb[0].mxu0 %v1657
        %v3047 = vpop.f32.mrb[0].mxu0
        %v3048 = vadd.f32 %v2887, %v3047
        %v3049 = vpop.f32.mrb[0].mxu0
        %v3050 = vpop.f32.mrb[0].mxu0
        %v3051 = vadd.f32 %v2890, %v3050
        %v3052 = vpop.f32.mrb[0].mxu0
        %3053 = vmatprep.mubr.bf16.mxu0 0
        %3054 = vmatmul.mubr.bf16.gmra.mrb[0].mxu0 %v1666
        %v3055 = vpop.f32.mrb[0].mxu0
        %v3056 = vadd.f32 %v2895, %v3055
        %v3057 = vpop.f32.mrb[0].mxu0
        %v3058 = vpop.f32.mrb[0].mxu0
        %v3059 = vadd.f32 %v2898, %v3058
        %v3060 = vpop.f32.mrb[0].mxu0
        %3061 = vmatprep.mubr.bf16.mxu0 0
        %3062 = vmatmul.mubr.bf16.gmra.mrb[0].mxu0 %v1675
        %v3063 = vpop.f32.mrb[0].mxu0
        %v3064 = vadd.f32 %v2903, %v3063
        %v3065 = vpop.f32.mrb[0].mxu0
        %v3066 = vpop.f32.mrb[0].mxu0
        %v3067 = vadd.f32 %v2906, %v3066
        %v3068 = vpop.f32.mrb[0].mxu0
        %3069 = vmatprep.mubr.bf16.mxu0 0
        %3070 = vmatmul.mubr.bf16.gmra.mrb[0].mxu0 %v1684
        %v3071 = vpop.f32.mrb[0].mxu0
        %v3072 = vadd.f32 %v2911, %v3071
        %v3073 = vpop.f32.mrb[0].mxu0
        %v3074 = vpop.f32.mrb[0].mxu0
        %v3075 = vadd.f32 %v2914, %v3074
        %v3076 = vpop.f32.mrb[0].mxu0
        %3077 = vmatprep.mubr.bf16.mxu0 0
        %3078 = vmatmul.mubr.bf16.gmra.mrb[0].mxu0 %v1693
        %v3079 = vpop.f32.mrb[0].mxu0
        %v3080 = vadd.f32 %v2919, %v3079
        %v3081 = vpop.f32.mrb[0].mxu0
        %v3082 = vpop.f32.mrb[0].mxu0
        %v3083 = vadd.f32 %v2922, %v3082
        %v3084 = vpop.f32.mrb[0].mxu0
        %3085 = vmatprep.mubr.bf16.mxu0 0
        %3086 = vmatmul.mubr.bf16.gmra.mrb[0].mxu0 %v1702
        %v3087 = vpop.f32.mrb[0].mxu0
        %v3088 = vadd.f32 %v2927, %v3087
        %v3089 = vpop.f32.mrb[0].mxu0
        %v3090 = vpop.f32.mrb[0].mxu0
        %v3091 = vadd.f32 %v2930, %v3090
        %v3092 = vpop.f32.mrb[0].mxu0
        %3093 = vmatprep.mubr.bf16.mxu0 0
        %3094 = vmatmul.mubr.bf16.gmra.mrb[0].mxu0 %v1711
        %v3095 = vpop.f32.mrb[0].mxu0
        %v3096 = vadd.f32 %v2935, %v3095
        %v3097 = vpop.f32.mrb[0].mxu0
        %v3098 = vpop.f32.mrb[0].mxu0
        %v3099 = vadd.f32 %v2938, %v3098
        %v3100 = vpop.f32.mrb[0].mxu0
        %3101 = vmatprep.mubr.bf16.mxu0 0
        %3102 = vmatmul.mubr.bf16.gmra.mrb[0].mxu0 %v1720
        %v3103 = vpop.f32.mrb[0].mxu0
        %v3104 = vadd.f32 %v2943, %v3103
        %v3105 = vpop.f32.mrb[0].mxu0
        %v3106 = vpop.f32.mrb[0].mxu0
        %v3107 = vadd.f32 %v2946, %v3106
        %v3108 = vpop.f32.mrb[0].mxu0
        %3109 = vmatprep.mubr.bf16.mxu0 0
        %3110 = vmatmul.mubr.bf16.gmra.mrb[0].mxu0 %v1729
        %v3111 = vpop.f32.mrb[0].mxu0
        %v3112 = vadd.f32 %v2951, %v3111
        %v3113 = vpop.f32.mrb[0].mxu0
        %v3114 = vpop.f32.mrb[0].mxu0
        %v3115 = vadd.f32 %v2954, %v3114
        %v3116 = vpop.f32.mrb[0].mxu0
        %3117 = vmatprep.mubr.bf16.mxu0 0
        %3118 = vmatmul.mubr.bf16.gmra.mrb[0].mxu0 %v1738
        %v3119 = vpop.f32.mrb[0].mxu0
        %v3120 = vadd.f32 %v2959, %v3119
        %v3121 = vpop.f32.mrb[0].mxu0
        %v3122 = vpop.f32.mrb[0].mxu0
        %v3123 = vadd.f32 %v2962, %v3122
        %v3124 = vpop.f32.mrb[0].mxu0
        %3125 = vmatprep.mubr.bf16.mxu0 0
        %3126 = vmatmul.mubr.bf16.gmra.mrb[0].mxu0 %v1747
        %v3127 = vpop.f32.mrb[0].mxu0
        %v3128 = vadd.f32 %v2967, %v3127
        %v3129 = vpop.f32.mrb[0].mxu0
        %v3130 = vpop.f32.mrb[0].mxu0
        %v3131 = vadd.f32 %v2970, %v3130
        %v3132 = vpop.f32.mrb[0].mxu0
        %3133 = vmatprep.mubr.bf16.mxu0 0
        %3134 = vmatmul.mubr.bf16.gmra.mrb[0].mxu0 %v1756
        %v3135 = vpop.f32.mrb[0].mxu0
        %v3136 = vadd.f32 %v2975, %v3135
        %v3137 = vpop.f32.mrb[0].mxu0
        %v3138 = vpop.f32.mrb[0].mxu0
        %v3139 = vadd.f32 %v2978, %v3138
        %v3140 = vpop.f32.mrb[0].mxu0
        %3141 = vmatprep.mubr.bf16.mxu0 0
        %3142 = vmatmul.mubr.bf16.gmra.mrb[0].mxu0 %v1765
        %v3143 = vpop.f32.mrb[0].mxu0
        %v3144 = vadd.f32 %v2983, %v3143
        %v3145 = vpop.f32.mrb[0].mxu0
        %v3146 = vpop.f32.mrb[0].mxu0
        %v3147 = vadd.f32 %v2986, %v3146
        %v3148 = vpop.f32.mrb[0].mxu0
        %3149 = vmatprep.mubr.bf16.mxu0 0
        %3150 = vmatmul.mubr.bf16.gmra.mrb[0].mxu0 %v1774
        %v3151 = vpop.f32.mrb[0].mxu0
        %v3152 = vadd.f32 %v2991, %v3151
        %v3153 = vpop.f32.mrb[0].mxu0
        %v3154 = vpop.f32.mrb[0].mxu0
        %v3155 = vadd.f32 %v2994, %v3154
        %v3156 = vpop.f32.mrb[0].mxu0
        %3157 = vmatprep.mubr.bf16.mxu0 0
        %3158 = vmatmul.mubr.bf16.gmra.mrb[0].mxu0 %v1783
        %v3159 = vpop.f32.mrb[0].mxu0
        %v3160 = vadd.f32 %v2999, %v3159
        %v3161 = vpop.f32.mrb[0].mxu0
        %v3162 = vpop.f32.mrb[0].mxu0
        %v3163 = vadd.f32 %v3002, %v3162
        %v3164 = vpop.f32.mrb[0].mxu0
        %3165 = vmatprep.mubr.bf16.mxu0 0
        %3166 = vmatmul.mubr.bf16.gmra.mrb[0].mxu0 %v1792
        %v3167 = vpop.f32.mrb[0].mxu0
        %v3168 = vadd.f32 %v3007, %v3167
        %v3169 = vpop.f32.mrb[0].mxu0
        %v3170 = vpop.f32.mrb[0].mxu0
        %v3171 = vadd.f32 %v3010, %v3170
        %v3172 = vpop.f32.mrb[0].mxu0
        %3173 = vdwg.mxu0
        %3174 = vst [vmem:[%s294] sm:$0xff] %v3048
        %3175 = vst [vmem:[%s294 + $0x8] sm:$0xff] %v3051
        %3176 = vst [vmem:[%s294 + $0x10] sm:$0xff] %v3056
        %3177 = vst [vmem:[%s294 + $0x18] sm:$0xff] %v3059
        %3178 = vst [vmem:[%s294 + $0x20] sm:$0xff] %v3064
        %3179 = vst [vmem:[%s294 + $0x28] sm:$0xff] %v3067
        %3180 = vst [vmem:[%s294 + $0x30] sm:$0xff] %v3072
        %3181 = vst [vmem:[%s294 + $0x38] sm:$0xff] %v3075
        %3182 = vst [vmem:[%s294 + $0x40] sm:$0xff] %v3080
        %3183 = vst [vmem:[%s294 + $0x48] sm:$0xff] %v3083
        %3184 = vst [vmem:[%s294 + $0x50] sm:$0xff] %v3088
        %3185 = vst [vmem:[%s294 + $0x58] sm:$0xff] %v3091
        %3186 = vst [vmem:[%s294 + $0x60] sm:$0xff] %v3096
        %3187 = vst [vmem:[%s294 + $0x68] sm:$0xff] %v3099
        %3188 = vst [vmem:[%s294 + $0x70] sm:$0xff] %v3104
        %3189 = vst [vmem:[%s294 + $0x78] sm:$0xff] %v3107
        %3190 = vst [vmem:[%s294 + $0x80] sm:$0xff] %v3112
        %3191 = vst [vmem:[%s294 + $0x88] sm:$0xff] %v3115
        %3192 = vst [vmem:[%s294 + $0x90] sm:$0xff] %v3120
        %3193 = vst [vmem:[%s294 + $0x98] sm:$0xff] %v3123
        %3194 = vst [vmem:[%s294 + $0xa0] sm:$0xff] %v3128
        %3195 = vst [vmem:[%s294 + $0xa8] sm:$0xff] %v3131
        %3196 = vst [vmem:[%s294 + $0xb0] sm:$0xff] %v3136
        %3197 = vst [vmem:[%s294 + $0xb8] sm:$0xff] %v3139
        %3198 = vst [vmem:[%s294 + $0xc0] sm:$0xff] %v3144
        %3199 = vst [vmem:[%s294 + $0xc8] sm:$0xff] %v3147
        %3200 = vst [vmem:[%s294 + $0xd0] sm:$0xff] %v3152
        %3201 = vst [vmem:[%s294 + $0xd8] sm:$0xff] %v3155
        %3202 = vst [vmem:[%s294 + $0xe0] sm:$0xff] %v3160
        %3203 = vst [vmem:[%s294 + $0xe8] sm:$0xff] %v3163
        %3204 = vst [vmem:[%s294 + $0xf0] sm:$0xff] %v3168
        %3205 = vst [vmem:[%s294 + $0xf8] sm:$0xff] %v3171
        %v3206 = vld [vmem:[#allocation7] sm:$0x1]
        %v3207 = vadd.f32 %v3048, %v3051
        %v3208 = vadd.f32 %v3207, %v3056
        %v3209 = vadd.f32 %v3208, %v3059
        %v3210 = vadd.f32 %v3209, %v3064
        %v3211 = vadd.f32 %v3210, %v3067
        %v3212 = vadd.f32 %v3211, %v3072
        %v3213 = vadd.f32 %v3212, %v3075
        %v3214 = vadd.f32 %v3213, %v3080
        %v3215 = vadd.f32 %v3214, %v3083
        %v3216 = vadd.f32 %v3215, %v3088
        %v3217 = vadd.f32 %v3216, %v3091
        %v3218 = vadd.f32 %v3217, %v3096
        %v3219 = vadd.f32 %v3218, %v3099
        %v3220 = vadd.f32 %v3219, %v3104
        %v3221 = vadd.f32 %v3220, %v3107
        %v3222 = vadd.f32 %v3221, %v3112
        %v3223 = vadd.f32 %v3222, %v3115
        %v3224 = vadd.f32 %v3223, %v3120
        %v3225 = vadd.f32 %v3224, %v3123
        %v3226 = vadd.f32 %v3225, %v3128
        %v3227 = vadd.f32 %v3226, %v3131
        %v3228 = vadd.f32 %v3227, %v3136
        %v3229 = vadd.f32 %v3228, %v3139
        %v3230 = vadd.f32 %v3229, %v3144
        %v3231 = vadd.f32 %v3230, %v3147
        %v3232 = vadd.f32 %v3231, %v3152
        %v3233 = vadd.f32 %v3232, %v3155
        %v3234 = vadd.f32 %v3233, %v3160
        %v3235 = vadd.f32 %v3234, %v3163
        %v3236 = vadd.f32 %v3235, %v3168
        %v3237 = vadd.f32 %v3236, %v3171
        %v3238 = vrot.slane %v3237, 4
        %v3239 = vadd.f32 %v3237, %v3238
        %v3240 = vrot.slane %v3239, 2
        %v3241 = vadd.f32 %v3239, %v3240
        %v3242 = vrot.slane %v3241, 1
        %v3243 = vadd.f32 %v3241, %v3242
        %v3244 = vadd.f32 %v3206, %v3243
        %3245 = vst [vmem:[#allocation7] sm:$0x1] %v3244
        %v3246 = vld [vmem:[#allocation7 + $0x1] sm:$0x1]
        %v3247 = vmul.f32 %v3048, %v3048
        %v3248 = vmul.f32 %v3051, %v3051
        %v3249 = vmul.f32 %v3056, %v3056
        %v3250 = vmul.f32 %v3059, %v3059
        %v3251 = vmul.f32 %v3064, %v3064
        %v3252 = vmul.f32 %v3067, %v3067
        %v3253 = vmul.f32 %v3072, %v3072
        %v3254 = vmul.f32 %v3075, %v3075
        %v3255 = vmul.f32 %v3080, %v3080
        %v3256 = vmul.f32 %v3083, %v3083
        %v3257 = vmul.f32 %v3088, %v3088
        %v3258 = vmul.f32 %v3091, %v3091
        %v3259 = vmul.f32 %v3096, %v3096
        %v3260 = vmul.f32 %v3099, %v3099
        %v3261 = vmul.f32 %v3104, %v3104
        %v3262 = vmul.f32 %v3107, %v3107
        %v3263 = vmul.f32 %v3112, %v3112
        %v3264 = vmul.f32 %v3115, %v3115
        %v3265 = vmul.f32 %v3120, %v3120
        %v3266 = vmul.f32 %v3123, %v3123
        %v3267 = vmul.f32 %v3128, %v3128
        %v3268 = vmul.f32 %v3131, %v3131
        %v3269 = vmul.f32 %v3136, %v3136
        %v3270 = vmul.f32 %v3139, %v3139
        %v3271 = vmul.f32 %v3144, %v3144
        %v3272 = vmul.f32 %v3147, %v3147
        %v3273 = vmul.f32 %v3152, %v3152
        %v3274 = vmul.f32 %v3155, %v3155
        %v3275 = vmul.f32 %v3160, %v3160
        %v3276 = vmul.f32 %v3163, %v3163
        %v3277 = vmul.f32 %v3168, %v3168
        %v3278 = vmul.f32 %v3171, %v3171
        %v3279 = vadd.f32 %v3247, %v3248
        %v3280 = vadd.f32 %v3279, %v3249
        %v3281 = vadd.f32 %v3280, %v3250
        %v3282 = vadd.f32 %v3281, %v3251
        %v3283 = vadd.f32 %v3282, %v3252
        %v3284 = vadd.f32 %v3283, %v3253
        %v3285 = vadd.f32 %v3284, %v3254
        %v3286 = vadd.f32 %v3285, %v3255
        %v3287 = vadd.f32 %v3286, %v3256
        %v3288 = vadd.f32 %v3287, %v3257
        %v3289 = vadd.f32 %v3288, %v3258
        %v3290 = vadd.f32 %v3289, %v3259
        %v3291 = vadd.f32 %v3290, %v3260
        %v3292 = vadd.f32 %v3291, %v3261
        %v3293 = vadd.f32 %v3292, %v3262
        %v3294 = vadd.f32 %v3293, %v3263
        %v3295 = vadd.f32 %v3294, %v3264
        %v3296 = vadd.f32 %v3295, %v3265
        %v3297 = vadd.f32 %v3296, %v3266
        %v3298 = vadd.f32 %v3297, %v3267
        %v3299 = vadd.f32 %v3298, %v3268
        %v3300 = vadd.f32 %v3299, %v3269
        %v3301 = vadd.f32 %v3300, %v3270
        %v3302 = vadd.f32 %v3301, %v3271
        %v3303 = vadd.f32 %v3302, %v3272
        %v3304 = vadd.f32 %v3303, %v3273
        %v3305 = vadd.f32 %v3304, %v3274
        %v3306 = vadd.f32 %v3305, %v3275
        %v3307 = vadd.f32 %v3306, %v3276
        %v3308 = vadd.f32 %v3307, %v3277
        %v3309 = vadd.f32 %v3308, %v3278
        %v3310 = vrot.slane %v3309, 4
        %v3311 = vadd.f32 %v3309, %v3310
        %v3312 = vrot.slane %v3311, 2
        %v3313 = vadd.f32 %v3311, %v3312
        %v3314 = vrot.slane %v3313, 1
        %v3315 = vadd.f32 %v3313, %v3314
        %v3316 = vadd.f32 %v3246, %v3315
        %3317 = vst [vmem:[#allocation7 + $0x1] sm:$0x1] %v3316
        %v3318 = vld [vmem:[#allocation2 + $0x20] sm:$0xff]
        %v3319 = vld [vmem:[#allocation2 + $0x68] sm:$0xff]
        %v3320 = vld [vmem:[#allocation2 + $0xb0] sm:$0xff]
        %v3321 = vld [vmem:[#allocation2 + $0xf8] sm:$0xff]
        %v3322 = vld [vmem:[#allocation2 + $0x140] sm:$0xff]
        %v3323 = vld [vmem:[#allocation2 + $0x188] sm:$0xff]
        %v3324 = vld [vmem:[#allocation2 + $0x1d0] sm:$0xff]
        %v3325 = vld [vmem:[#allocation2 + $0x218] sm:$0xff]
        %v3326 = vld [vmem:[#allocation2 + $0x260] sm:$0xff]
        %v3327 = vld [vmem:[#allocation2 + $0x2a8] sm:$0xff]
        %v3328 = vld [vmem:[#allocation2 + $0x2f0] sm:$0xff]
        %v3329 = vld [vmem:[#allocation2 + $0x338] sm:$0xff]
        %v3330 = vld [vmem:[#allocation2 + $0x380] sm:$0xff]
        %v3331 = vld [vmem:[#allocation2 + $0x3c8] sm:$0xff]
        %v3332 = vld [vmem:[#allocation2 + $0x410] sm:$0xff]
        %v3333 = vld [vmem:[#allocation2 + $0x458] sm:$0xff]
        %v3334 = vld [vmem:[%s4] sm:$0xf]
        %v3335 = vld [vmem:[%s4 + $0x4] sm:$0xf]
        %v3336 = vld [vmem:[%s4 + $0x8] sm:$0xf]
        %v3337 = vld [vmem:[%s4 + $0xc] sm:$0xf]
        %v3338 = vld [vmem:[%s4 + $0x10] sm:$0xf]
        %v3339 = vld [vmem:[%s4 + $0x14] sm:$0xf]
        %v3340 = vld [vmem:[%s4 + $0x18] sm:$0xf]
        %v3341 = vld [vmem:[%s4 + $0x1c] sm:$0xf]
        %v3342 = vld [vmem:[%s4 + $0x20] sm:$0xf]
        %v3343 = vld [vmem:[%s4 + $0x24] sm:$0xf]
        %v3344 = vld [vmem:[%s4 + $0x28] sm:$0xf]
        %v3345 = vld [vmem:[%s4 + $0x2c] sm:$0xf]
        %v3346 = vld [vmem:[%s4 + $0x30] sm:$0xf]
        %v3347 = vld [vmem:[%s4 + $0x34] sm:$0xf]
        %v3348 = vld [vmem:[%s4 + $0x38] sm:$0xf]
        %v3349 = vld [vmem:[%s4 + $0x3c] sm:$0xf]
        %v3366 = vunpack.c.l.b16 %v3334
        %v3367 = vunpack.c.l.b16 %v3335
        %v3368 = vunpack.c.l.b16 %v3336
        %v3369 = vunpack.c.l.b16 %v3337
        %v3370 = vunpack.c.l.b16 %v3338
        %v3371 = vunpack.c.l.b16 %v3339
        %v3372 = vunpack.c.l.b16 %v3340
        %v3373 = vunpack.c.l.b16 %v3341
        %v3374 = vunpack.c.l.b16 %v3342
        %v3375 = vunpack.c.l.b16 %v3343
        %v3376 = vunpack.c.l.b16 %v3344
        %v3377 = vunpack.c.l.b16 %v3345
        %v3378 = vunpack.c.l.b16 %v3346
        %v3379 = vunpack.c.l.b16 %v3347
        %v3380 = vunpack.c.l.b16 %v3348
        %v3381 = vunpack.c.l.b16 %v3349
        %v3382 = vpack.c.b16 %v3367, %v3366
        %v3383 = vpack.c.b16 %v3369, %v3368
        %v3384 = vpack.c.b16 %v3371, %v3370
        %v3385 = vpack.c.b16 %v3373, %v3372
        %v3386 = vpack.c.b16 %v3375, %v3374
        %v3387 = vpack.c.b16 %v3377, %v3376
        %v3388 = vpack.c.b16 %v3379, %v3378
        %v3389 = vpack.c.b16 %v3381, %v3380
        %3398 = vmatprep.subr.bf16.mxu0 0
        %3399 = vmatpush1.bf16.msra.mxu0 %v3382
        %3400 = vmatprep.subr.bf16.mxu0 0
        %3401 = vmatpush1.bf16.msra.mxu0 %v3383
        %3402 = vmatprep.subr.bf16.mxu0 0
        %3403 = vmatpush1.bf16.msra.mxu0 %v3384
        %3404 = vmatprep.subr.bf16.mxu0 0
        %3405 = vmatpush1.bf16.msra.mxu0 %v3385
        %3406 = vmatprep.subr.bf16.mxu0 0
        %3407 = vmatpush1.bf16.msra.mxu0 %v3386
        %3408 = vmatprep.subr.bf16.mxu0 0
        %3409 = vmatpush1.bf16.msra.mxu0 %v3387
        %3410 = vmatprep.subr.bf16.mxu0 0
        %3411 = vmatpush1.bf16.msra.mxu0 %v3388
        %3412 = vmatprep.subr.bf16.mxu0 0
        %3413 = vmatpush1.bf16.msra.mxu0 %v3389
        %3414 = vmatprep.subr.bf16.mxu0 0
        %3415 = vmatpush1.bf16.msra.mxu0 0
        %3416 = vmatprep.subr.bf16.mxu0 0
        %3417 = vmatpush1.bf16.msra.mxu0 0
        %3418 = vmatprep.subr.bf16.mxu0 0
        %3419 = vmatpush1.bf16.msra.mxu0 0
        %3420 = vmatprep.subr.bf16.mxu0 0
        %3421 = vmatpush1.bf16.msra.mxu0 0
        %3422 = vmatprep.subr.bf16.mxu0 0
        %3423 = vmatpush1.bf16.msra.mxu0 0
        %3424 = vmatprep.subr.bf16.mxu0 0
        %3425 = vmatpush1.bf16.msra.mxu0 0
        %3426 = vmatprep.subr.bf16.mxu0 0
        %3427 = vmatpush1.bf16.msra.mxu0 0
        %3428 = vmatprep.subr.bf16.mxu0 0
        %3429 = vmatpush1.bf16.msra.mxu0 0
        %3430 = vmatprep.mubr.bf16.mxu0 0
        %3431 = vmatmul.mubr.bf16.gmra.mrb[0].mxu0 %v3318
        %v3432 = vpop.f32.mrb[0].mxu0
        %v3433 = vadd.f32 0.0, %v3432
        %v3434 = vpop.f32.mrb[0].mxu0
        %v3435 = vpop.f32.mrb[0].mxu0
        %v3436 = vadd.f32 0.0, %v3435
        %v3437 = vpop.f32.mrb[0].mxu0
        %3438 = vmatprep.mubr.bf16.mxu0 0
        %3439 = vmatmul.mubr.bf16.gmra.mrb[0].mxu0 %v3319
        %v3440 = vpop.f32.mrb[0].mxu0
        %v3441 = vadd.f32 0.0, %v3440
        %v3442 = vpop.f32.mrb[0].mxu0
        %v3443 = vpop.f32.mrb[0].mxu0
        %v3444 = vadd.f32 0.0, %v3443
        %v3445 = vpop.f32.mrb[0].mxu0
        %3446 = vmatprep.mubr.bf16.mxu0 0
        %3447 = vmatmul.mubr.bf16.gmra.mrb[0].mxu0 %v3320
        %v3448 = vpop.f32.mrb[0].mxu0
        %v3449 = vadd.f32 0.0, %v3448
        %v3450 = vpop.f32.mrb[0].mxu0
        %v3451 = vpop.f32.mrb[0].mxu0
        %v3452 = vadd.f32 0.0, %v3451
        %v3453 = vpop.f32.mrb[0].mxu0
        %3454 = vmatprep.mubr.bf16.mxu0 0
        %3455 = vmatmul.mubr.bf16.gmra.mrb[0].mxu0 %v3321
        %v3456 = vpop.f32.mrb[0].mxu0
        %v3457 = vadd.f32 0.0, %v3456
        %v3458 = vpop.f32.mrb[0].mxu0
        %v3459 = vpop.f32.mrb[0].mxu0
        %v3460 = vadd.f32 0.0, %v3459
        %v3461 = vpop.f32.mrb[0].mxu0
        %3462 = vmatprep.mubr.bf16.mxu0 0
        %3463 = vmatmul.mubr.bf16.gmra.mrb[0].mxu0 %v3322
        %v3464 = vpop.f32.mrb[0].mxu0
        %v3465 = vadd.f32 0.0, %v3464
        %v3466 = vpop.f32.mrb[0].mxu0
        %v3467 = vpop.f32.mrb[0].mxu0
        %v3468 = vadd.f32 0.0, %v3467
        %v3469 = vpop.f32.mrb[0].mxu0
        %3470 = vmatprep.mubr.bf16.mxu0 0
        %3471 = vmatmul.mubr.bf16.gmra.mrb[0].mxu0 %v3323
        %v3472 = vpop.f32.mrb[0].mxu0
        %v3473 = vadd.f32 0.0, %v3472
        %v3474 = vpop.f32.mrb[0].mxu0
        %v3475 = vpop.f32.mrb[0].mxu0
        %v3476 = vadd.f32 0.0, %v3475
        %v3477 = vpop.f32.mrb[0].mxu0
        %3478 = vmatprep.mubr.bf16.mxu0 0
        %3479 = vmatmul.mubr.bf16.gmra.mrb[0].mxu0 %v3324
        %v3480 = vpop.f32.mrb[0].mxu0
        %v3481 = vadd.f32 0.0, %v3480
        %v3482 = vpop.f32.mrb[0].mxu0
        %v3483 = vpop.f32.mrb[0].mxu0
        %v3484 = vadd.f32 0.0, %v3483
        %v3485 = vpop.f32.mrb[0].mxu0
        %3486 = vmatprep.mubr.bf16.mxu0 0
        %3487 = vmatmul.mubr.bf16.gmra.mrb[0].mxu0 %v3325
        %v3488 = vpop.f32.mrb[0].mxu0
        %v3489 = vadd.f32 0.0, %v3488
        %v3490 = vpop.f32.mrb[0].mxu0
        %v3491 = vpop.f32.mrb[0].mxu0
        %v3492 = vadd.f32 0.0, %v3491
        %v3493 = vpop.f32.mrb[0].mxu0
        %3494 = vmatprep.mubr.bf16.mxu0 0
        %3495 = vmatmul.mubr.bf16.gmra.mrb[0].mxu0 %v3326
        %v3496 = vpop.f32.mrb[0].mxu0
        %v3497 = vadd.f32 0.0, %v3496
        %v3498 = vpop.f32.mrb[0].mxu0
        %v3499 = vpop.f32.mrb[0].mxu0
        %v3500 = vadd.f32 0.0, %v3499
        %v3501 = vpop.f32.mrb[0].mxu0
        %3502 = vmatprep.mubr.bf16.mxu0 0
        %3503 = vmatmul.mubr.bf16.gmra.mrb[0].mxu0 %v3327
        %v3504 = vpop.f32.mrb[0].mxu0
        %v3505 = vadd.f32 0.0, %v3504
        %v3506 = vpop.f32.mrb[0].mxu0
        %v3507 = vpop.f32.mrb[0].mxu0
        %v3508 = vadd.f32 0.0, %v3507
        %v3509 = vpop.f32.mrb[0].mxu0
        %3510 = vmatprep.mubr.bf16.mxu0 0
        %3511 = vmatmul.mubr.bf16.gmra.mrb[0].mxu0 %v3328
        %v3512 = vpop.f32.mrb[0].mxu0
        %v3513 = vadd.f32 0.0, %v3512
        %v3514 = vpop.f32.mrb[0].mxu0
        %v3515 = vpop.f32.mrb[0].mxu0
        %v3516 = vadd.f32 0.0, %v3515
        %v3517 = vpop.f32.mrb[0].mxu0
        %3518 = vmatprep.mubr.bf16.mxu0 0
        %3519 = vmatmul.mubr.bf16.gmra.mrb[0].mxu0 %v3329
        %v3520 = vpop.f32.mrb[0].mxu0
        %v3521 = vadd.f32 0.0, %v3520
        %v3522 = vpop.f32.mrb[0].mxu0
        %v3523 = vpop.f32.mrb[0].mxu0
        %v3524 = vadd.f32 0.0, %v3523
        %v3525 = vpop.f32.mrb[0].mxu0
        %3526 = vmatprep.mubr.bf16.mxu0 0
        %3527 = vmatmul.mubr.bf16.gmra.mrb[0].mxu0 %v3330
        %v3528 = vpop.f32.mrb[0].mxu0
        %v3529 = vadd.f32 0.0, %v3528
        %v3530 = vpop.f32.mrb[0].mxu0
        %v3531 = vpop.f32.mrb[0].mxu0
        %v3532 = vadd.f32 0.0, %v3531
        %v3533 = vpop.f32.mrb[0].mxu0
        %3534 = vmatprep.mubr.bf16.mxu0 0
        %3535 = vmatmul.mubr.bf16.gmra.mrb[0].mxu0 %v3331
        %v3536 = vpop.f32.mrb[0].mxu0
        %v3537 = vadd.f32 0.0, %v3536
        %v3538 = vpop.f32.mrb[0].mxu0
        %v3539 = vpop.f32.mrb[0].mxu0
        %v3540 = vadd.f32 0.0, %v3539
        %v3541 = vpop.f32.mrb[0].mxu0
        %3542 = vmatprep.mubr.bf16.mxu0 0
        %3543 = vmatmul.mubr.bf16.gmra.mrb[0].mxu0 %v3332
        %v3544 = vpop.f32.mrb[0].mxu0
        %v3545 = vadd.f32 0.0, %v3544
        %v3546 = vpop.f32.mrb[0].mxu0
        %v3547 = vpop.f32.mrb[0].mxu0
        %v3548 = vadd.f32 0.0, %v3547
        %v3549 = vpop.f32.mrb[0].mxu0
        %3550 = vmatprep.mubr.bf16.mxu0 0
        %3551 = vmatmul.mubr.bf16.gmra.mrb[0].mxu0 %v3333
        %v3552 = vpop.f32.mrb[0].mxu0
        %v3553 = vadd.f32 0.0, %v3552
        %v3554 = vpop.f32.mrb[0].mxu0
        %v3555 = vpop.f32.mrb[0].mxu0
        %v3556 = vadd.f32 0.0, %v3555
        %v3557 = vpop.f32.mrb[0].mxu0
        %3558 = vdwg.mxu0
        %3559 = vst [vmem:[%s301] sm:$0xff] %v3433
        %3560 = vst [vmem:[%s301 + $0x8] sm:$0xff] %v3436
        %3561 = vst [vmem:[%s301 + $0x10] sm:$0xff] %v3441
        %3562 = vst [vmem:[%s301 + $0x18] sm:$0xff] %v3444
        %3563 = vst [vmem:[%s301 + $0x20] sm:$0xff] %v3449
        %3564 = vst [vmem:[%s301 + $0x28] sm:$0xff] %v3452
        %3565 = vst [vmem:[%s301 + $0x30] sm:$0xff] %v3457
        %3566 = vst [vmem:[%s301 + $0x38] sm:$0xff] %v3460
        %3567 = vst [vmem:[%s301 + $0x40] sm:$0xff] %v3465
        %3568 = vst [vmem:[%s301 + $0x48] sm:$0xff] %v3468
        %3569 = vst [vmem:[%s301 + $0x50] sm:$0xff] %v3473
        %3570 = vst [vmem:[%s301 + $0x58] sm:$0xff] %v3476
        %3571 = vst [vmem:[%s301 + $0x60] sm:$0xff] %v3481
        %3572 = vst [vmem:[%s301 + $0x68] sm:$0xff] %v3484
        %3573 = vst [vmem:[%s301 + $0x70] sm:$0xff] %v3489
        %3574 = vst [vmem:[%s301 + $0x78] sm:$0xff] %v3492
        %3575 = vst [vmem:[%s301 + $0x80] sm:$0xff] %v3497
        %3576 = vst [vmem:[%s301 + $0x88] sm:$0xff] %v3500
        %3577 = vst [vmem:[%s301 + $0x90] sm:$0xff] %v3505
        %3578 = vst [vmem:[%s301 + $0x98] sm:$0xff] %v3508
        %3579 = vst [vmem:[%s301 + $0xa0] sm:$0xff] %v3513
        %3580 = vst [vmem:[%s301 + $0xa8] sm:$0xff] %v3516
        %3581 = vst [vmem:[%s301 + $0xb0] sm:$0xff] %v3521
        %3582 = vst [vmem:[%s301 + $0xb8] sm:$0xff] %v3524
        %3583 = vst [vmem:[%s301 + $0xc0] sm:$0xff] %v3529
        %3584 = vst [vmem:[%s301 + $0xc8] sm:$0xff] %v3532
        %3585 = vst [vmem:[%s301 + $0xd0] sm:$0xff] %v3537
        %3586 = vst [vmem:[%s301 + $0xd8] sm:$0xff] %v3540
        %3587 = vst [vmem:[%s301 + $0xe0] sm:$0xff] %v3545
        %3588 = vst [vmem:[%s301 + $0xe8] sm:$0xff] %v3548
        %3589 = vst [vmem:[%s301 + $0xf0] sm:$0xff] %v3553
        %3590 = vst [vmem:[%s301 + $0xf8] sm:$0xff] %v3556
        %v3591 = vld [vmem:[#allocation8] sm:$0x1]
        %v3592 = vadd.f32 %v3433, %v3436
        %v3593 = vadd.f32 %v3592, %v3441
        %v3594 = vadd.f32 %v3593, %v3444
        %v3595 = vadd.f32 %v3594, %v3449
        %v3596 = vadd.f32 %v3595, %v3452
        %v3597 = vadd.f32 %v3596, %v3457
        %v3598 = vadd.f32 %v3597, %v3460
        %v3599 = vadd.f32 %v3598, %v3465
        %v3600 = vadd.f32 %v3599, %v3468
        %v3601 = vadd.f32 %v3600, %v3473
        %v3602 = vadd.f32 %v3601, %v3476
        %v3603 = vadd.f32 %v3602, %v3481
        %v3604 = vadd.f32 %v3603, %v3484
        %v3605 = vadd.f32 %v3604, %v3489
        %v3606 = vadd.f32 %v3605, %v3492
        %v3607 = vadd.f32 %v3606, %v3497
        %v3608 = vadd.f32 %v3607, %v3500
        %v3609 = vadd.f32 %v3608, %v3505
        %v3610 = vadd.f32 %v3609, %v3508
        %v3611 = vadd.f32 %v3610, %v3513
        %v3612 = vadd.f32 %v3611, %v3516
        %v3613 = vadd.f32 %v3612, %v3521
        %v3614 = vadd.f32 %v3613, %v3524
        %v3615 = vadd.f32 %v3614, %v3529
        %v3616 = vadd.f32 %v3615, %v3532
        %v3617 = vadd.f32 %v3616, %v3537
        %v3618 = vadd.f32 %v3617, %v3540
        %v3619 = vadd.f32 %v3618, %v3545
        %v3620 = vadd.f32 %v3619, %v3548
        %v3621 = vadd.f32 %v3620, %v3553
        %v3622 = vadd.f32 %v3621, %v3556
        %v3623 = vrot.slane %v3622, 4
        %v3624 = vadd.f32 %v3622, %v3623
        %v3625 = vrot.slane %v3624, 2
        %v3626 = vadd.f32 %v3624, %v3625
        %v3627 = vrot.slane %v3626, 1
        %v3628 = vadd.f32 %v3626, %v3627
        %v3629 = vadd.f32 %v3591, %v3628
        %3630 = vst [vmem:[#allocation8] sm:$0x1] %v3629
        %v3631 = vld [vmem:[#allocation8 + $0x1] sm:$0x1]
        %v3632 = vmul.f32 %v3433, %v3433
        %v3633 = vmul.f32 %v3436, %v3436
        %v3634 = vmul.f32 %v3441, %v3441
        %v3635 = vmul.f32 %v3444, %v3444
        %v3636 = vmul.f32 %v3449, %v3449
        %v3637 = vmul.f32 %v3452, %v3452
        %v3638 = vmul.f32 %v3457, %v3457
        %v3639 = vmul.f32 %v3460, %v3460
        %v3640 = vmul.f32 %v3465, %v3465
        %v3641 = vmul.f32 %v3468, %v3468
        %v3642 = vmul.f32 %v3473, %v3473
        %v3643 = vmul.f32 %v3476, %v3476
        %v3644 = vmul.f32 %v3481, %v3481
        %v3645 = vmul.f32 %v3484, %v3484
        %v3646 = vmul.f32 %v3489, %v3489
        %v3647 = vmul.f32 %v3492, %v3492
        %v3648 = vmul.f32 %v3497, %v3497
        %v3649 = vmul.f32 %v3500, %v3500
        %v3650 = vmul.f32 %v3505, %v3505
        %v3651 = vmul.f32 %v3508, %v3508
        %v3652 = vmul.f32 %v3513, %v3513
        %v3653 = vmul.f32 %v3516, %v3516
        %v3654 = vmul.f32 %v3521, %v3521
        %v3655 = vmul.f32 %v3524, %v3524
        %v3656 = vmul.f32 %v3529, %v3529
        %v3657 = vmul.f32 %v3532, %v3532
        %v3658 = vmul.f32 %v3537, %v3537
        %v3659 = vmul.f32 %v3540, %v3540
        %v3660 = vmul.f32 %v3545, %v3545
        %v3661 = vmul.f32 %v3548, %v3548
        %v3662 = vmul.f32 %v3553, %v3553
        %v3663 = vmul.f32 %v3556, %v3556
        %v3664 = vadd.f32 %v3632, %v3633
        %v3665 = vadd.f32 %v3664, %v3634
        %v3666 = vadd.f32 %v3665, %v3635
        %v3667 = vadd.f32 %v3666, %v3636
        %v3668 = vadd.f32 %v3667, %v3637
        %v3669 = vadd.f32 %v3668, %v3638
        %v3670 = vadd.f32 %v3669, %v3639
        %v3671 = vadd.f32 %v3670, %v3640
        %v3672 = vadd.f32 %v3671, %v3641
        %v3673 = vadd.f32 %v3672, %v3642
        %v3674 = vadd.f32 %v3673, %v3643
        %v3675 = vadd.f32 %v3674, %v3644
        %v3676 = vadd.f32 %v3675, %v3645
        %v3677 = vadd.f32 %v3676, %v3646
        %v3678 = vadd.f32 %v3677, %v3647
        %v3679 = vadd.f32 %v3678, %v3648
        %v3680 = vadd.f32 %v3679, %v3649
        %v3681 = vadd.f32 %v3680, %v3650
        %v3682 = vadd.f32 %v3681, %v3651
        %v3683 = vadd.f32 %v3682, %v3652
        %v3684 = vadd.f32 %v3683, %v3653
        %v3685 = vadd.f32 %v3684, %v3654
        %v3686 = vadd.f32 %v3685, %v3655
        %v3687 = vadd.f32 %v3686, %v3656
        %v3688 = vadd.f32 %v3687, %v3657
        %v3689 = vadd.f32 %v3688, %v3658
        %v3690 = vadd.f32 %v3689, %v3659
        %v3691 = vadd.f32 %v3690, %v3660
        %v3692 = vadd.f32 %v3691, %v3661
        %v3693 = vadd.f32 %v3692, %v3662
        %v3694 = vadd.f32 %v3693, %v3663
        %v3695 = vrot.slane %v3694, 4
        %v3696 = vadd.f32 %v3694, %v3695
        %v3697 = vrot.slane %v3696, 2
        %v3698 = vadd.f32 %v3696, %v3697
        %v3699 = vrot.slane %v3698, 1
        %v3700 = vadd.f32 %v3698, %v3699
        %v3701 = vadd.f32 %v3631, %v3700
        %3702 = vst [vmem:[#allocation8 + $0x1] sm:$0x1] %v3701
        %s3703 = sand.u32 %s145, 1
        %s3704 = scalar_lea.sflag [#allocation4], %s3703
        %s3705 = sand.u32 %s145, 1
        %s3706 = smul.addr %s3705, 256
        %s3707 = scalar_lea.vmem [#allocation3], %s3706
        %s3708 = sand.u32 %s27, 1
        %s3709 = scalar_lea.sflag [#allocation6], %s3708
        %s3710 = sand.u32 %s171, 1
        %s3711 = smul.addr %s3710, 256
        %s3712 = scalar_lea.vmem [#allocation5], %s3711
        // Predicated region
        $region45: #{tpu_custom_call.1} parent=39 // pred_check
          %p3713 = pneg %p155
        $region46: #{tpu_custom_call.1} parent=39 // pred_check_branch
          %3715 = sbr.rel (%p3713) target = $region48
        $region47: #{tpu_custom_call.1} parent=39 // pred_region
          %s3716 = smul.u32 32, %s27
          %s3718 = ssub.s32 4096, 4096
          %3719 = vsyncadd %s3704, %s3718
          %s3720 = smul.addr %s3716, 128
          %s3721 = scalar_lea.hbm %s5, %s3720
          %s3722 = sshll.u32 %s3707, 4
          %s3723 = int_to_ptr.vmem [resolvable:$true] %s3722
          %3728 = dma.vmem_to_hbm [thread:$0]  %s3723, 4096, %s3721, %s3704, 128, 128, 8
        $region48: #{tpu_custom_call.1} parent=39 // pred_fallthru
          _
        // Predicated region
        $region49: #{tpu_custom_call.1} parent=39 // pred_check
          %p3729 = pneg %p181
        $region50: #{tpu_custom_call.1} parent=39 // pred_check_branch
          %3731 = sbr.rel (%p3729) target = $region52
        $region51: #{tpu_custom_call.1} parent=39 // pred_region
          %s3732 = smul.u32 32, %s27
          %s3734 = ssub.s32 4096, 4096
          %3735 = vsyncadd %s3709, %s3734
          %s3736 = smul.addr %s3732, 128
          %s3737 = scalar_lea.hbm %s6, %s3736
          %s3738 = sshll.u32 %s3712, 4
          %s3739 = int_to_ptr.vmem [resolvable:$true] %s3738
          %3744 = dma.vmem_to_hbm [thread:$0]  %s3739, 4096, %s3737, %s3709, 128, 128, 8
        $region52: #{tpu_custom_call.1} parent=39 // pred_fallthru
          _
        // Predicated region
        $region53: #{tpu_custom_call.1} parent=39 // pred_check
          %p3745 = pneg %p202
        $region54: #{tpu_custom_call.1} parent=39 // pred_check_branch
          %3747 = sbr.rel (%p3745) target = $region56
        $region55: #{tpu_custom_call.1} parent=39 // pred_region
          %s3749 = ssub.s32 32, 32
          %3750 = vsyncadd [#allocation6], %s3749
          %s3752 = sshll.u32 [#allocation7], 4
          %s3753 = int_to_ptr.vmem [resolvable:$true] %s3752
          %3755 = dma.vmem_to_hbm [thread:$0]  %s3753, 32, %s7, [#allocation6]
        $region56: #{tpu_custom_call.1} parent=39 // pred_fallthru
          _
        // Predicated region
        $region57: #{tpu_custom_call.1} parent=39 // pred_check
          %p3756 = pneg %p223
        $region58: #{tpu_custom_call.1} parent=39 // pred_check_branch
          %3758 = sbr.rel (%p3756) target = $region60
        $region59: #{tpu_custom_call.1} parent=39 // pred_region
          %s3760 = ssub.s32 32, 32
          %3761 = vsyncadd [#allocation9], %s3760
          %s3763 = sshll.u32 [#allocation8], 4
          %s3764 = int_to_ptr.vmem [resolvable:$true] %s3763
          %3766 = dma.vmem_to_hbm [thread:$0]  %s3764, 32, %s8, [#allocation9]
        $region60: #{tpu_custom_call.1} parent=39 // pred_fallthru
          _
        // Predicated region
        $region61: #{tpu_custom_call.1} parent=39 // pred_check
          %p3767 = pneg %p202
        $region62: #{tpu_custom_call.1} parent=39 // pred_check_branch
          %3769 = sbr.rel (%p3767) target = $region64
        $region63: #{tpu_custom_call.1} parent=39 // pred_region
          %3770 = dma.done [#allocation6], 32
        $region64: #{tpu_custom_call.1} parent=39 // pred_fallthru
          _
        // Predicated region
        $region65: #{tpu_custom_call.1} parent=39 // pred_check
          %p3771 = pneg %p223
        $region66: #{tpu_custom_call.1} parent=39 // pred_check_branch
          %3773 = sbr.rel (%p3771) target = $region68
        $region67: #{tpu_custom_call.1} parent=39 // pred_region
          %3774 = dma.done [#allocation9], 32
        $region68: #{tpu_custom_call.1} parent=39 // pred_fallthru
          _
      $region40: #{tpu_custom_call.1} parent=5 // pred_fallthru
        _
      %p3775 = scmp.le.s32.totalorder 2, %s22
      // Predicated region
      $region69: #{tpu_custom_call.1} parent=5 // pred_check
        %p3776 = pneg %p3775
      $region70: #{tpu_custom_call.1} parent=5 // pred_check_branch
        %3778 = sbr.rel (%p3776) target = $region72
      $region71: #{tpu_custom_call.1} parent=5 // pred_region
        %s3779 = ssub.s32 %s22, 2
        // Predicated region
        $region73: #{tpu_custom_call.1} parent=71 // pred_check
          %p3780 = pneg %p161
        $region74: #{tpu_custom_call.1} parent=71 // pred_check_branch
          %3782 = sbr.rel (%p3780) target = $region76
        $region75: #{tpu_custom_call.1} parent=71 // pred_region
          %s3783 = sand.u32 %s146, 1
          %s3784 = scalar_lea.sflag [#allocation4], %s3783
          %s3785 = sand.u32 %s146, 1
          %s3786 = smul.addr %s3785, 256
          %s3787 = scalar_lea.vmem [#allocation3], %s3786
          %3788 = dma.done %s3784, 4096
        $region76: #{tpu_custom_call.1} parent=71 // pred_fallthru
          _
        // Predicated region
        $region77: #{tpu_custom_call.1} parent=71 // pred_check
          %p3789 = pneg %p187
        $region78: #{tpu_custom_call.1} parent=71 // pred_check_branch
          %3791 = sbr.rel (%p3789) target = $region80
        $region79: #{tpu_custom_call.1} parent=71 // pred_region
          %s3792 = sand.u32 %s28, 1
          %s3793 = scalar_lea.sflag [#allocation6], %s3792
          %s3794 = sand.u32 %s172, 1
          %s3795 = smul.addr %s3794, 256
          %s3796 = scalar_lea.vmem [#allocation5], %s3795
          %3797 = dma.done %s3793, 4096
        $region80: #{tpu_custom_call.1} parent=71 // pred_fallthru
          _
      $region72: #{tpu_custom_call.1} parent=5 // pred_fallthru
        _
    $region6: #{tpu_custom_call.1} parent=1 // loop_footer
      %s26 = sadd.s32 1, %s22
    $region7: #{tpu_custom_call.1} parent=1 // loop_footer_branch
      %21 = sbr.rel target = $region3
    $region8: #{tpu_custom_call.1} parent=1 // loop_exit
      _
    %3798 = vsyncpa [#allocation4], 1
    %s3799 = scalar_lea.sflag [#allocation4], 1
    %3800 = vsyncpa %s3799, 1
    %3801 = vsyncpa [#allocation6], 1
    %s3802 = scalar_lea.sflag [#allocation6], 1
    %3803 = vsyncpa %s3802, 1
    %3804 = vsyncpa [#allocation9], 1

</llo_original>
